<compile_context>
chip_gen: v7x
topology: tpu7x:2x2x1
jax: 0.10.0
libtpu: 0.0.40
codegen_flags: <defaults>
</compile_context>

<pallas_src>
import functools
import math

import jax
import jax.numpy as jnp
from jax.experimental import pallas as pl
from jax.experimental.pallas import tpu as pltpu


def _round_up(x, m):
    return ((x + m - 1) // m) * m


def _pick_tile(s_pad, target):
    """Largest multiple of 128 that divides s_pad and is <= target (>= 128)."""
    t = max(128, min(target, s_pad))
    t = (t // 128) * 128
    while s_pad % t != 0:
        t -= 128
    return t


# ---------------------------------------------------------------------------
# Pass 1: flash-style context + LSE
# ---------------------------------------------------------------------------
def _flash_kernel(q_ref, k_ref, v_ref, ctx_ref, lse_ref, m_sc, l_sc, acc_sc,
                  *, scale, seq_len, tk, precision):
    # q_ref: (1, TQ, Dk)  k_ref: (1, TK, Dk)  v_ref: (1, TK, Dv)
    ki = pl.program_id(2)

    @pl.when(ki == 0)
    def _init():
        m_sc[...] = jnp.full_like(m_sc, -jnp.inf)
        l_sc[...] = jnp.zeros_like(l_sc)
        acc_sc[...] = jnp.zeros_like(acc_sc)

    # Keep MXU operands in the input dtype; fold 1/sqrt(d_k) into Q (TQ*Dk muls).
    q = q_ref[0] * scale
    k = k_ref[0]
    # scores = q @ k^T, contracting the last (lane) dim of both operands
    # (no explicit K transpose); f32 accumulation on the MXU.
    s = jax.lax.dot_general(
        q, k,
        dimension_numbers=(((1,), (1,)), ((), ())),
        preferred_element_type=jnp.float32,
        precision=precision,
    )  # (TQ, TK) f32

    # Mask padded key columns (wrapper pads S up to a multiple of 128).
    col = ki * tk + jax.lax.broadcasted_iota(jnp.int32, s.shape, 1)
    s = jnp.where(col < seq_len, s, -jnp.inf)

    m_prev = m_sc[...]                                             # (TQ, 1)
    m_new = jnp.maximum(m_prev, jnp.max(s, axis=-1, keepdims=True))
    alpha = jnp.exp(m_prev - m_new)
    p = jnp.exp(s - m_new)                                         # (TQ, TK) f32

    l_sc[...] = alpha * l_sc[...] + jnp.sum(p, axis=-1, keepdims=True)
    acc_sc[...] = alpha * acc_sc[...] + jnp.dot(
        p.astype(v_ref.dtype), v_ref[0],
        preferred_element_type=jnp.float32, precision=precision)
    m_sc[...] = m_new

    @pl.when(ki == pl.num_programs(2) - 1)
    def _finalize():
        # TODO(synk): approx=True would use the otherwise-idle EUP slot; kept
        # exact to stay well inside the 1e-4 f32 reference tolerance.
        inv_l = pl.reciprocal(l_sc[...], approx=False)
        ctx_ref[0] = (acc_sc[...] * inv_l).astype(ctx_ref.dtype)
        lse_ref[0] = m_sc[...] + jnp.log(l_sc[...])


# ---------------------------------------------------------------------------
# Pass 2: normalized attention tiles from LSE (module returns the full matrix)
# ---------------------------------------------------------------------------
def _attn_kernel(q_ref, k_ref, lse_ref, attn_ref, *, scale, seq_len, tk, precision):
    ki = pl.program_id(2)
    q = q_ref[0] * scale
    k = k_ref[0]
    s = jax.lax.dot_general(
        q, k,
        dimension_numbers=(((1,), (1,)), ((), ())),
        preferred_element_type=jnp.float32,
        precision=precision,
    )                                                              # (TQ2, TK)
    lse = lse_ref[0]                                               # (TQ2, 1)
    col = ki * tk + jax.lax.broadcasted_iota(jnp.int32, s.shape, 1)
    # lse >= row max over VALID columns, so exp(s - lse) <= 1 there; padded
    # columns are forced to 0 (they are sliced off by the wrapper anyway).
    p = jnp.where(col < seq_len, jnp.exp(s - lse), 0.0)
    attn_ref[0] = p.astype(attn_ref.dtype)


def scaled_dot_product_attention(Q, K, V, *, tq1_target=512, tk_target=512,
                                 tq2_target=1024):
    """Q, K: (B,H,S,Dk), V: (B,H,S,Dv) -> (context (B,H,S,Dv), attn (B,H,S,S))."""
    B, H, S, Dk = Q.shape
    Dv = V.shape[-1]
    BH = B * H
    out_dtype = Q.dtype

    # Pad the sequence dim to a multiple of 128 so every tile is (8,128)-aligned
    # and bounded (no full-extent fallback); padded key columns are masked in-kernel.
    S_pad = _round_up(S, 128)

    # If there is only one (batch*head), split the Q axis so the parallel grid
    # has extent >= 2 and both v7x TensorCores get work.
    if BH == 1 and S_pad >= 256:
        tq1_target = min(tq1_target, S_pad // 2)
        tq2_target = min(tq2_target, S_pad // 2)

    TQ1 = _pick_tile(S_pad, tq1_target)
    TQ2 = _pick_tile(S_pad, tq2_target)
    TK = _pick_tile(S_pad, tk_target)
    nQ1, nQ2, nK = S_pad // TQ1, S_pad // TQ2, S_pad // TK

    scale = 1.0 / math.sqrt(Dk)
    # f32 inputs: explicit high-precision MXU passes so we match an f32 reference
    # at 1e-4. bf16 (or narrower) inputs run a single native MXU pass.
    precision = (jax.lax.Precision.HIGHEST if out_dtype == jnp.float32
                 else jax.lax.Precision.DEFAULT)

    q = Q.reshape(BH, S, Dk)
    k = K.reshape(BH, S, Dk)
    v = V.reshape(BH, S, Dv)
    pad = S_pad - S
    if pad:
        q = jnp.pad(q, ((0, 0), (0, pad), (0, 0)))
        k = jnp.pad(k, ((0, 0), (0, pad), (0, 0)))
        v = jnp.pad(v, ((0, 0), (0, pad), (0, 0)))

    vmem_limit = 32 * 1024 * 1024  # explicit: fits v5e/v6e/v7x; fails loudly if exceeded

    # ---- Pass 1: flash context + LSE --------------------------------------
    ctx, lse = pl.pallas_call(
        functools.partial(_flash_kernel, scale=scale, seq_len=S, tk=TK,
                          precision=precision),
        out_shape=(
            jax.ShapeDtypeStruct((BH, S_pad, Dv), out_dtype),
            jax.ShapeDtypeStruct((BH, S_pad, 1), jnp.float32),
        ),
        grid_spec=pltpu.PrefetchScalarGridSpec(
            num_scalar_prefetch=0,
            grid=(BH, nQ1, nK),
            in_specs=[
                pl.BlockSpec((1, TQ1, Dk), lambda b, qi, ki: (b, qi, 0)),
                pl.BlockSpec((1, TK, Dk), lambda b, qi, ki: (b, ki, 0)),
                pl.BlockSpec((1, TK, Dv), lambda b, qi, ki: (b, ki, 0)),
            ],
            out_specs=[
                pl.BlockSpec((1, TQ1, Dv), lambda b, qi, ki: (b, qi, 0)),
                pl.BlockSpec((1, TQ1, 1), lambda b, qi, ki: (b, qi, 0)),
            ],
            scratch_shapes=[
                pltpu.VMEM((TQ1, 1), jnp.float32),    # running max m
                pltpu.VMEM((TQ1, 1), jnp.float32),    # running denom l
                pltpu.VMEM((TQ1, Dv), jnp.float32),   # f32 context accumulator
            ],
        ),
        compiler_params=pltpu.CompilerParams(
            dimension_semantics=("parallel", "parallel", "arbitrary"),
            vmem_limit_bytes=vmem_limit,
        ),
    )(q, k, v)

    # ---- Pass 2: normalized attention matrix ------------------------------
    attn = pl.pallas_call(
        functools.partial(_attn_kernel, scale=scale, seq_len=S, tk=TK,
                          precision=precision),
        out_shape=jax.ShapeDtypeStruct((BH, S_pad, S_pad), out_dtype),
        grid_spec=pltpu.PrefetchScalarGridSpec(
            num_scalar_prefetch=0,
            grid=(BH, nQ2, nK),
            in_specs=[
                pl.BlockSpec((1, TQ2, Dk), lambda b, qi, ki: (b, qi, 0)),
                pl.BlockSpec((1, TK, Dk), lambda b, qi, ki: (b, ki, 0)),
                pl.BlockSpec((1, TQ2, 1), lambda b, qi, ki: (b, qi, 0)),
            ],
            out_specs=pl.BlockSpec((1, TQ2, TK), lambda b, qi, ki: (b, qi, ki)),
        ),
        compiler_params=pltpu.CompilerParams(
            dimension_semantics=("parallel", "parallel", "parallel"),
            vmem_limit_bytes=vmem_limit,
        ),
    )(q, k, lse)

    ctx = ctx[:, :S, :].reshape(B, H, S, Dv)
    attn = attn[:, :S, :S].reshape(B, H, S, S)
    return ctx, attn


def _reference(Q, K, V, d_k):
    scores = jnp.einsum("bhqd,bhkd->bhqk", Q, K,
                        precision=jax.lax.Precision.HIGHEST) / math.sqrt(d_k)
    attn = jax.nn.softmax(scores, axis=-1)
    ctx = jnp.einsum("bhqk,bhkd->bhqd", attn, V,
                     precision=jax.lax.Precision.HIGHEST)
    return ctx, attn


if __name__ == "__main__":
    keys = jax.random.split(jax.random.PRNGKey(0), 6)

    # Case 1: small module-scale shapes; exercises the pad-to-128 + mask path.
    B, H, S, Dk, Dv = 2, 2, 8, 32, 32
    Q = jax.random.normal(keys[0], (B, H, S, Dk), dtype=jnp.float32)
    K = jax.random.normal(keys[1], (B, H, S, Dk), dtype=jnp.float32)
    V = jax.random.normal(keys[2], (B, H, S, Dv), dtype=jnp.float32)
    ctx, attn = scaled_dot_product_attention(Q, K, V)
    jax.block_until_ready((ctx, attn))
    ctx_r, attn_r = _reference(Q, K, V, Dk)
    assert jnp.allclose(ctx, ctx_r, atol=1e-4, rtol=1e-4)
    assert jnp.allclose(attn, attn_r, atol=1e-4, rtol=1e-4)

    # Case 2: multi-tile (S=200 -> padded 256, 2 Q tiles x 2 KV tiles with 128
    # tiles) to validate the online-softmax accumulation and pass-2 tiling.
    B, H, S, Dk, Dv = 1, 2, 200, 32, 64
    Q = jax.random.normal(keys[3], (B, H, S, Dk), dtype=jnp.float32)
    K = jax.random.normal(keys[4], (B, H, S, Dk), dtype=jnp.float32)
    V = jax.random.normal(keys[5], (B, H, S, Dv), dtype=jnp.float32)
    ctx, attn = scaled_dot_product_attention(
        Q, K, V, tq1_target=128, tk_target=128, tq2_target=128)
    jax.block_until_ready((ctx, attn))
    ctx_r, attn_r = _reference(Q, K, V, Dk)
    assert jnp.allclose(ctx, ctx_r, atol=1e-4, rtol=1e-4)
    assert jnp.allclose(attn, attn_r, atol=1e-4, rtol=1e-4)

    print("KERNEL_OK")
</pallas_src>

<mosaic_0001>
module attributes {stable_mosaic.version = 11 : i64} {
  func.func @_flash_kernel(%arg0: i32, %arg1: i32, %arg2: i32, %arg3: memref<1x128x32xf32, #tpu.memory_space<vmem>>, %arg4: memref<1x128x32xf32, #tpu.memory_space<vmem>>, %arg5: memref<1x128x32xf32, #tpu.memory_space<vmem>>, %arg6: memref<1x128x32xf32, #tpu.memory_space<vmem>>, %arg7: memref<1x128x1xf32, #tpu.memory_space<vmem>>, %arg8: memref<128x1xf32, #tpu.memory_space<vmem>>, %arg9: memref<128x1xf32, #tpu.memory_space<vmem>>, %arg10: memref<128x32xf32, #tpu.memory_space<vmem>>) attributes {dimension_semantics = [#tpu.dimension_semantics<parallel>, #tpu.dimension_semantics<parallel>, #tpu.dimension_semantics<arbitrary>], iteration_bounds = array<i64: 4, 1, 1>, scalar_prefetch = 0 : i64, scratch_operands = 3 : i64, tpu.core_type = #tpu.core_type<tc>, window_params = [{transform_indices = @transform_0, window_bounds = array<i64: 1, 128, 32>}, {transform_indices = @transform_1, window_bounds = array<i64: 1, 128, 32>}, {transform_indices = @transform_2, window_bounds = array<i64: 1, 128, 32>}, {transform_indices = @transform_3, window_bounds = array<i64: 1, 128, 32>}, {transform_indices = @transform_4, window_bounds = array<i64: 1, 128, 1>}]} {
    %c0_i32 = arith.constant 0 : i32
    %0 = arith.cmpi eq, %arg2, %c0_i32 : i32
    %1 = arith.extui %0 : i1 to i32
    %c0_i32_0 = arith.constant 0 : i32
    %2 = arith.cmpi ne, %1, %c0_i32_0 : i32
    scf.if %2 {
      %cst_28 = arith.constant 0xFF800000 : f32
      %45 = vector.broadcast %cst_28 : f32 to vector<128x1xf32>
      %c0_29 = arith.constant 0 : index
      %c0_30 = arith.constant 0 : index
      %46 = vector.load %arg8[%c0_29, %c0_30] : memref<128x1xf32, #tpu.memory_space<vmem>>, vector<128x1xf32>
      tpu.vector_store %arg8[%c0_29, %c0_30], %45 {strides = array<i32>} : memref<128x1xf32, #tpu.memory_space<vmem>>, vector<128x1xf32>,
      %cst_31 = arith.constant 0.000000e+00 : f32
      %47 = vector.broadcast %cst_31 : f32 to vector<128x1xf32>
      %c0_32 = arith.constant 0 : index
      %c0_33 = arith.constant 0 : index
      %48 = vector.load %arg9[%c0_32, %c0_33] : memref<128x1xf32, #tpu.memory_space<vmem>>, vector<128x1xf32>
      tpu.vector_store %arg9[%c0_32, %c0_33], %47 {strides = array<i32>} : memref<128x1xf32, #tpu.memory_space<vmem>>, vector<128x1xf32>,
      %cst_34 = arith.constant 0.000000e+00 : f32
      %49 = vector.broadcast %cst_34 : f32 to vector<128x32xf32>
      %c0_35 = arith.constant 0 : index
      %c0_36 = arith.constant 0 : index
      %50 = vector.load %arg10[%c0_35, %c0_36] : memref<128x32xf32, #tpu.memory_space<vmem>>, vector<128x32xf32>
      tpu.vector_store %arg10[%c0_35, %c0_36], %49 {strides = array<i32>} : memref<128x32xf32, #tpu.memory_space<vmem>>, vector<128x32xf32>,
    } else {
    }
    %c0 = arith.constant 0 : index
    %c0_1 = arith.constant 0 : index
    %c0_2 = arith.constant 0 : index
    %3 = vector.load %arg3[%c0, %c0_1, %c0_2] : memref<1x128x32xf32, #tpu.memory_space<vmem>>, vector<1x128x32xf32>
    %4 = vector.shape_cast %3 : vector<1x128x32xf32> to vector<128x32xf32>
    %cst = arith.constant 0.176776692 : f32
    %5 = vector.broadcast %cst : f32 to vector<128x32xf32>
    %6 = arith.mulf %4, %5 : vector<128x32xf32>
    %c0_3 = arith.constant 0 : index
    %c0_4 = arith.constant 0 : index
    %c0_5 = arith.constant 0 : index
    %7 = vector.load %arg4[%c0_3, %c0_4, %c0_5] : memref<1x128x32xf32, #tpu.memory_space<vmem>>, vector<1x128x32xf32>
    %8 = vector.shape_cast %7 : vector<1x128x32xf32> to vector<128x32xf32>
    %cst_6 = arith.constant dense<0.000000e+00> : vector<128x128xf32>
    %9 = tpu.matmul %6, %8, %cst_6 {dimension_numbers = #tpu.dot_dimension_numbers<[1], [1], [0], [0], [0, 0, 1, 0], [], []>, precision = #tpu.contract_precision<fp32>} : vector<128x32xf32>, vector<128x32xf32>, vector<128x128xf32> -> vector<128x128xf32>
    %c128_i32 = arith.constant 128 : i32
    %10 = arith.muli %arg2, %c128_i32 : i32
    %11 = tpu.iota {dimensions = array<i32: 1>} : vector<128x128xi32>
    %12 = vector.broadcast %10 : i32 to vector<128x128xi32>
    %13 = arith.addi %12, %11 : vector<128x128xi32>
    %c8_i32 = arith.constant 8 : i32
    %14 = vector.broadcast %c8_i32 : i32 to vector<128x128xi32>
    %15 = arith.cmpi slt, %13, %14 : vector<128x128xi32>
    %cst_7 = arith.constant 0xFF800000 : f32
    %16 = vector.broadcast %cst_7 : f32 to vector<128x128xf32>
    %17 = arith.select %15, %9, %16 : vector<128x128xi1>, vector<128x128xf32>
    %c0_8 = arith.constant 0 : index
    %c0_9 = arith.constant 0 : index
    %18 = vector.load %arg8[%c0_8, %c0_9] : memref<128x1xf32, #tpu.memory_space<vmem>>, vector<128x1xf32>
    %cst_10 = arith.constant dense<0xFF800000> : vector<128xf32>
    %19 = vector.multi_reduction <maximumf>, %17, %cst_10 [1] : vector<128x128xf32> to vector<128xf32>
    %20 = vector.shape_cast %19 : vector<128xf32> to vector<128x1xf32>
    %21 = arith.maximumf %18, %20 : vector<128x1xf32>
    %22 = arith.subf %18, %21 : vector<128x1xf32>
    %23 = math.exp %22 : vector<128x1xf32>
    %24 = vector.broadcast %21 : vector<128x1xf32> to vector<128x128xf32>
    %25 = arith.subf %17, %24 : vector<128x128xf32>
    %26 = math.exp %25 : vector<128x128xf32>
    %c0_11 = arith.constant 0 : index
    %c0_12 = arith.constant 0 : index
    %27 = vector.load %arg9[%c0_11, %c0_12] : memref<128x1xf32, #tpu.memory_space<vmem>>, vector<128x1xf32>
    %28 = arith.mulf %23, %27 : vector<128x1xf32>
    %cst_13 = arith.constant dense<0.000000e+00> : vector<128xf32>
    %29 = vector.multi_reduction <add>, %26, %cst_13 [1] : vector<128x128xf32> to vector<128xf32>
    %30 = vector.shape_cast %29 : vector<128xf32> to vector<128x1xf32>
    %31 = arith.addf %28, %30 : vector<128x1xf32>
    %c0_14 = arith.constant 0 : index
    %c0_15 = arith.constant 0 : index
    %32 = vector.load %arg9[%c0_14, %c0_15] : memref<128x1xf32, #tpu.memory_space<vmem>>, vector<128x1xf32>
    tpu.vector_store %arg9[%c0_14, %c0_15], %31 {strides = array<i32>} : memref<128x1xf32, #tpu.memory_space<vmem>>, vector<128x1xf32>,
    %c0_16 = arith.constant 0 : index
    %c0_17 = arith.constant 0 : index
    %33 = vector.load %arg10[%c0_16, %c0_17] : memref<128x32xf32, #tpu.memory_space<vmem>>, vector<128x32xf32>
    %34 = vector.broadcast %23 : vector<128x1xf32> to vector<128x32xf32>
    %35 = arith.mulf %34, %33 : vector<128x32xf32>
    %c0_18 = arith.constant 0 : index
    %c0_19 = arith.constant 0 : index
    %c0_20 = arith.constant 0 : index
    %36 = vector.load %arg5[%c0_18, %c0_19, %c0_20] : memref<1x128x32xf32, #tpu.memory_space<vmem>>, vector<1x128x32xf32>
    %37 = vector.shape_cast %36 : vector<1x128x32xf32> to vector<128x32xf32>
    %cst_21 = arith.constant dense<0.000000e+00> : vector<128x32xf32>
    %38 = tpu.matmul %26, %37, %cst_21 {dimension_numbers = #tpu.dot_dimension_numbers<[1], [0], [0], [1], [0, 0, 1, 1], [], []>, precision = #tpu.contract_precision<fp32>} : vector<128x128xf32>, vector<128x32xf32>, vector<128x32xf32> -> vector<128x32xf32>
    %39 = arith.addf %35, %38 : vector<128x32xf32>
    %c0_22 = arith.constant 0 : index
    %c0_23 = arith.constant 0 : index
    %40 = vector.load %arg10[%c0_22, %c0_23] : memref<128x32xf32, #tpu.memory_space<vmem>>, vector<128x32xf32>
    tpu.vector_store %arg10[%c0_22, %c0_23], %39 {strides = array<i32>} : memref<128x32xf32, #tpu.memory_space<vmem>>, vector<128x32xf32>,
    %c0_24 = arith.constant 0 : index
    %c0_25 = arith.constant 0 : index
    %41 = vector.load %arg8[%c0_24, %c0_25] : memref<128x1xf32, #tpu.memory_space<vmem>>, vector<128x1xf32>
    tpu.vector_store %arg8[%c0_24, %c0_25], %21 {strides = array<i32>} : memref<128x1xf32, #tpu.memory_space<vmem>>, vector<128x1xf32>,
    %c0_i32_26 = arith.constant 0 : i32
    %42 = arith.cmpi eq, %arg2, %c0_i32_26 : i32
    %43 = arith.extui %42 : i1 to i32
    %c0_i32_27 = arith.constant 0 : i32
    %44 = arith.cmpi ne, %43, %c0_i32_27 : i32
    scf.if %44 {
      %c0_28 = arith.constant 0 : index
      %c0_29 = arith.constant 0 : index
      %45 = vector.load %arg9[%c0_28, %c0_29] : memref<128x1xf32, #tpu.memory_space<vmem>>, vector<128x1xf32>
      %46 = tpu.reciprocal %45 : vector<128x1xf32> -> vector<128x1xf32>
      %c0_30 = arith.constant 0 : index
      %c0_31 = arith.constant 0 : index
      %47 = vector.load %arg10[%c0_30, %c0_31] : memref<128x32xf32, #tpu.memory_space<vmem>>, vector<128x32xf32>
      %48 = vector.broadcast %46 : vector<128x1xf32> to vector<128x32xf32>
      %49 = arith.mulf %47, %48 : vector<128x32xf32>
      %c0_32 = arith.constant 0 : index
      %c0_33 = arith.constant 0 : index
      %c0_34 = arith.constant 0 : index
      %50 = vector.load %arg6[%c0_32, %c0_33, %c0_34] : memref<1x128x32xf32, #tpu.memory_space<vmem>>, vector<1x128x32xf32>
      %51 = vector.shape_cast %50 : vector<1x128x32xf32> to vector<128x32xf32>
      %52 = vector.shape_cast %49 : vector<128x32xf32> to vector<1x128x32xf32>
      tpu.vector_store %arg6[%c0_32, %c0_33, %c0_34], %52 {strides = array<i32>} : memref<1x128x32xf32, #tpu.memory_space<vmem>>, vector<1x128x32xf32>,
      %c0_35 = arith.constant 0 : index
      %c0_36 = arith.constant 0 : index
      %53 = vector.load %arg8[%c0_35, %c0_36] : memref<128x1xf32, #tpu.memory_space<vmem>>, vector<128x1xf32>
      %c0_37 = arith.constant 0 : index
      %c0_38 = arith.constant 0 : index
      %54 = vector.load %arg9[%c0_37, %c0_38] : memref<128x1xf32, #tpu.memory_space<vmem>>, vector<128x1xf32>
      %55 = math.log %54 : vector<128x1xf32>
      %56 = arith.addf %53, %55 : vector<128x1xf32>
      %c0_39 = arith.constant 0 : index
      %c0_40 = arith.constant 0 : index
      %c0_41 = arith.constant 0 : index
      %57 = vector.load %arg7[%c0_39, %c0_40, %c0_41] : memref<1x128x1xf32, #tpu.memory_space<vmem>>, vector<1x128x1xf32>
      %58 = vector.shape_cast %57 : vector<1x128x1xf32> to vector<128x1xf32>
      %59 = vector.shape_cast %56 : vector<128x1xf32> to vector<1x128x1xf32>
      tpu.vector_store %arg7[%c0_39, %c0_40, %c0_41], %59 {strides = array<i32>} : memref<1x128x1xf32, #tpu.memory_space<vmem>>, vector<1x128x1xf32>,
    } else {
    }
    return
  }
  func.func @transform_0(%arg0: i32, %arg1: i32, %arg2: i32) -> (i32, i32, i32) {
    %c0_i32 = arith.constant 0 : i32
    %c0_i32_0 = arith.constant 0 : i32
    return %arg0, %arg1, %c0_i32 : i32, i32, i32
  }
  func.func @transform_1(%arg0: i32, %arg1: i32, %arg2: i32) -> (i32, i32, i32) {
    %c0_i32 = arith.constant 0 : i32
    %c0_i32_0 = arith.constant 0 : i32
    return %arg0, %arg2, %c0_i32 : i32, i32, i32
  }
  func.func @transform_2(%arg0: i32, %arg1: i32, %arg2: i32) -> (i32, i32, i32) {
    %c0_i32 = arith.constant 0 : i32
    %c0_i32_0 = arith.constant 0 : i32
    return %arg0, %arg2, %c0_i32 : i32, i32, i32
  }
  func.func @transform_3(%arg0: i32, %arg1: i32, %arg2: i32) -> (i32, i32, i32) {
    %c0_i32 = arith.constant 0 : i32
    %c0_i32_0 = arith.constant 0 : i32
    return %arg0, %arg1, %c0_i32 : i32, i32, i32
  }
  func.func @transform_4(%arg0: i32, %arg1: i32, %arg2: i32) -> (i32, i32, i32) {
    %c0_i32 = arith.constant 0 : i32
    %c0_i32_0 = arith.constant 0 : i32
    return %arg0, %arg1, %c0_i32 : i32, i32, i32
  }
}

</mosaic_0001>

<llo_original>
// kernel: tpu_custom_call.1
$region0: #{tpu_custom_call.1}
  #allocation0 [shape = 'u32[]', space=smem, size = 0x4, offset = 0x4, fixed_abs, tag = 'smem constant byte address 0x4 - core index']
  #allocation1 [shape = 'u32[144,128]{1,0:T(1,128)}', space=vmem, size = 0x12000, scoped, tag = 'internal scratch']
  #allocation2 [shape = 'f32[128,1]{1,0:T(8,128)}', space=vmem, size = 0x10000, scoped, tag = 'scratch operand']
  #allocation3 [shape = 'f32[128,1]{1,0:T(8,128)}', space=vmem, size = 0x10000, scoped, tag = 'scratch operand']
  #allocation4 [shape = 'f32[128,32]{1,0:T(8,128)}', space=vmem, size = 0x10000, scoped, tag = 'scratch operand']
  %s0 = inlined_call_operand.vmem [shape: f32[4,128,32], index: 0, kind: input, shape index: {}]
  %s1 = inlined_call_operand.vmem [shape: f32[4,128,32], index: 1, kind: input, shape index: {}]
  %s2 = inlined_call_operand.vmem [shape: f32[4,128,32], index: 2, kind: input, shape index: {}]
  %s3 = inlined_call_operand.vmem [shape: f32[4,128,32], index: 3, kind: output, shape index: {0}]
  %s4 = inlined_call_operand.vmem [shape: f32[4,128,1], index: 4, kind: output, shape index: {1}]
  %5 = xla_tuple %s3, %s4
  %s6 = sld [smem:[#allocation0]]
  $region61: #{tpu_custom_call.1} parent=0
    _
  %s8 = ssub.s32 1, %s6
  %s9 = scalar_select 0, %s8, %s6
  loop: start=0, step=1, limit=6
  $region2: #{tpu_custom_call.1} parent=0 // loop_pre_header
    _
  $region3: #{tpu_custom_call.1} parent=0 // loop_header
    %s11 = sphi 0, %s15
    %p12 = scmp.ge.s32.totalorder %s11, 6
    %s18 = sphi 0, %s37
    %s19 = sphi 0, %s33
    %s20 = sphi 0, %s29
    %s21 = sphi 0, %s18
    %s22 = sphi 0, %s19
    %s23 = sphi 0, %s20
    %s24 = sphi 0, %s21
    %s25 = sphi 0, %s22
    %s26 = sphi 0, %s23
    %s42 = sphi 0, %s44
    %s45 = sphi 0, %s42
    %s46 = sphi 0, %s45
    %s62 = sphi 0, %s46
    %s70 = sphi 0, %s72
    %s73 = sphi 0, %s70
    %s74 = sphi 0, %s73
    %s90 = sphi 0, %s74
    %s98 = sphi 0, %s100
    %s101 = sphi 0, %s98
    %s102 = sphi 0, %s101
    %s118 = sphi 0, %s102
    %s126 = sphi 0, %s128
    %s129 = sphi 0, %s126
    %s130 = sphi 0, %s129
    %s146 = sphi 0, %s130
    %s154 = sphi 0, %s156
    %s157 = sphi 0, %s154
    %s158 = sphi 0, %s157
    %s174 = sphi 0, %s158
  $region4: #{tpu_custom_call.1} parent=0 // loop_header_branch
    %14 = sbr.rel (%p12) target = $region8
  $region5: #{tpu_custom_call.1} parent=0 // loop_body
    %s16 = ssub.s32 %s11, 1
    %s17 = ssub.s32 %s11, 2
    %s27 = sadd.s32 1, %s20
    %p28 = scmp.ge.s32.totalorder %s27, 1
    %s29 = scalar_select %p28, 0, %s27
    %s30 = sadd.s32 1, %s19
    %s31 = scalar_select %p28, %s30, %s19
    %p32 = scmp.ge.s32.totalorder %s31, 1
    %s33 = scalar_select %p32, 0, %s31
    %s34 = sadd.s32 1, %s18
    %s35 = scalar_select %p32, %s34, %s18
    %p36 = scmp.ge.s32.totalorder %s35, 4
    %s37 = scalar_select %p36, 0, %s35
    %s38 = ssub.s32 %s18, %s37
    %s39 = ssub.s32 %s19, %s33
    %s40 = sor.u32 %s38, %s39
    %p41 = scmp.eq.s32.totalorder %s40, 0
    %s43 = sadd.s32 %s42, 1
    %s44 = scalar_select %p41, %s42, %s43
    %p47 = pneg %p41
    %p48 = scmp.eq.s32.totalorder %s11, 3
    %p49 = por %p47, %p48
    %p50 = scmp.ne.s32.totalorder %s42, %s45
    %p51 = scmp.eq.s32.totalorder %s11, 0
    %p52 = por %p50, %p51
    %p53 = scmp.ne.s32.totalorder %s42, %s45
    %p54 = scmp.eq.s32.totalorder %s16, 3
    %p55 = por %p53, %p54
    %p56 = scmp.ne.s32.totalorder %s45, %s46
    %p57 = scmp.eq.s32.totalorder %s16, 0
    %p58 = por %p56, %p57
    %p59 = scmp.ne.s32.totalorder %s45, %s46
    %p60 = scmp.eq.s32.totalorder %s17, 3
    %p61 = por %p59, %p60
    %p63 = scmp.ne.s32.totalorder %s46, %s62
    %p64 = scmp.eq.s32.totalorder %s17, 0
    %p65 = por %p63, %p64
    %s66 = ssub.s32 %s18, %s37
    %s67 = ssub.s32 %s20, %s29
    %s68 = sor.u32 %s66, %s67
    %p69 = scmp.eq.s32.totalorder %s68, 0
    %s71 = sadd.s32 %s70, 1
    %s72 = scalar_select %p69, %s70, %s71
    %p75 = pneg %p69
    %p76 = scmp.eq.s32.totalorder %s11, 3
    %p77 = por %p75, %p76
    %p78 = scmp.ne.s32.totalorder %s70, %s73
    %p79 = scmp.eq.s32.totalorder %s11, 0
    %p80 = por %p78, %p79
    %p81 = scmp.ne.s32.totalorder %s70, %s73
    %p82 = scmp.eq.s32.totalorder %s16, 3
    %p83 = por %p81, %p82
    %p84 = scmp.ne.s32.totalorder %s73, %s74
    %p85 = scmp.eq.s32.totalorder %s16, 0
    %p86 = por %p84, %p85
    %p87 = scmp.ne.s32.totalorder %s73, %s74
    %p88 = scmp.eq.s32.totalorder %s17, 3
    %p89 = por %p87, %p88
    %p91 = scmp.ne.s32.totalorder %s74, %s90
    %p92 = scmp.eq.s32.totalorder %s17, 0
    %p93 = por %p91, %p92
    %s94 = ssub.s32 %s18, %s37
    %s95 = ssub.s32 %s20, %s29
    %s96 = sor.u32 %s94, %s95
    %p97 = scmp.eq.s32.totalorder %s96, 0
    %s99 = sadd.s32 %s98, 1
    %s100 = scalar_select %p97, %s98, %s99
    %p103 = pneg %p97
    %p104 = scmp.eq.s32.totalorder %s11, 3
    %p105 = por %p103, %p104
    %p106 = scmp.ne.s32.totalorder %s98, %s101
    %p107 = scmp.eq.s32.totalorder %s11, 0
    %p108 = por %p106, %p107
    %p109 = scmp.ne.s32.totalorder %s98, %s101
    %p110 = scmp.eq.s32.totalorder %s16, 3
    %p111 = por %p109, %p110
    %p112 = scmp.ne.s32.totalorder %s101, %s102
    %p113 = scmp.eq.s32.totalorder %s16, 0
    %p114 = por %p112, %p113
    %p115 = scmp.ne.s32.totalorder %s101, %s102
    %p116 = scmp.eq.s32.totalorder %s17, 3
    %p117 = por %p115, %p116
    %p119 = scmp.ne.s32.totalorder %s102, %s118
    %p120 = scmp.eq.s32.totalorder %s17, 0
    %p121 = por %p119, %p120
    %s122 = ssub.s32 %s18, %s37
    %s123 = ssub.s32 %s19, %s33
    %s124 = sor.u32 %s122, %s123
    %p125 = scmp.eq.s32.totalorder %s124, 0
    %s127 = sadd.s32 %s126, 1
    %s128 = scalar_select %p125, %s126, %s127
    %p131 = pneg %p125
    %p132 = scmp.eq.s32.totalorder %s11, 3
    %p133 = por %p131, %p132
    %p134 = scmp.ne.s32.totalorder %s126, %s129
    %p135 = scmp.eq.s32.totalorder %s11, 0
    %p136 = por %p134, %p135
    %p137 = scmp.ne.s32.totalorder %s126, %s129
    %p138 = scmp.eq.s32.totalorder %s16, 3
    %p139 = por %p137, %p138
    %p140 = scmp.ne.s32.totalorder %s129, %s130
    %p141 = scmp.eq.s32.totalorder %s16, 0
    %p142 = por %p140, %p141
    %p143 = scmp.ne.s32.totalorder %s129, %s130
    %p144 = scmp.eq.s32.totalorder %s17, 3
    %p145 = por %p143, %p144
    %p147 = scmp.ne.s32.totalorder %s130, %s146
    %p148 = scmp.eq.s32.totalorder %s17, 0
    %p149 = por %p147, %p148
    %s150 = ssub.s32 %s18, %s37
    %s151 = ssub.s32 %s19, %s33
    %s152 = sor.u32 %s150, %s151
    %p153 = scmp.eq.s32.totalorder %s152, 0
    %s155 = sadd.s32 %s154, 1
    %s156 = scalar_select %p153, %s154, %s155
    %p159 = pneg %p153
    %p160 = scmp.eq.s32.totalorder %s11, 3
    %p161 = por %p159, %p160
    %p162 = scmp.ne.s32.totalorder %s154, %s157
    %p163 = scmp.eq.s32.totalorder %s11, 0
    %p164 = por %p162, %p163
    %p165 = scmp.ne.s32.totalorder %s154, %s157
    %p166 = scmp.eq.s32.totalorder %s16, 3
    %p167 = por %p165, %p166
    %p168 = scmp.ne.s32.totalorder %s157, %s158
    %p169 = scmp.eq.s32.totalorder %s16, 0
    %p170 = por %p168, %p169
    %p171 = scmp.ne.s32.totalorder %s157, %s158
    %p172 = scmp.eq.s32.totalorder %s17, 3
    %p173 = por %p171, %p172
    %p175 = scmp.ne.s32.totalorder %s158, %s174
    %p176 = scmp.eq.s32.totalorder %s17, 0
    %p177 = por %p175, %p176
    %p178 = scmp.le.s32.totalorder 1, %s11
    %p179 = scmp.lt.s32.totalorder %s11, 5
    %p180 = pnand %p178, %p179
    %p181 = pneg %p180
    // Predicated region
    $region9: #{tpu_custom_call.1} parent=5 // pred_check
      _
    $region10: #{tpu_custom_call.1} parent=5 // pred_check_branch
      %183 = sbr.rel (%p180) target = $region12
    $region11: #{tpu_custom_call.1} parent=5 // pred_region
      %s184 = ssub.s32 %s11, 1
    $region12: #{tpu_custom_call.1} parent=5 // pred_fallthru
      _
    %p185 = scmp.lt.s32.totalorder %s11, 4
    // Predicated region
    $region13: #{tpu_custom_call.1} parent=5 // pred_check
      %p186 = pneg %p185
    $region14: #{tpu_custom_call.1} parent=5 // pred_check_branch
      %188 = sbr.rel (%p186) target = $region16
    $region15: #{tpu_custom_call.1} parent=5 // pred_region
      // Predicated region
      $region17: #{tpu_custom_call.1} parent=15 // pred_check
        %p189 = pneg %p52
      $region18: #{tpu_custom_call.1} parent=15 // pred_check_branch
        %191 = sbr.rel (%p189) target = $region20
      $region19: #{tpu_custom_call.1} parent=15 // pred_region
        %s192 = smul.u32 16, %s19
        %p193 = scmp.lt.s32.totalorder %s18, 3
        %s194 = scalar_select %p193, %s18, 3
        %p195 = scmp.lt.s32.totalorder %s192, 15
        %s196 = scalar_select %p195, %s192, 15
        %s197 = smul.addr %s194, 16
        %s198 = sadd.s32 %s196, %s197
        %s199 = smul.addr %s198, 8
        %s200 = scalar_lea.vmem %s0, %s199
        %s201 = smul.u32 16, %s19
      $region20: #{tpu_custom_call.1} parent=15 // pred_fallthru
        _
      // Predicated region
      $region21: #{tpu_custom_call.1} parent=15 // pred_check
        %p202 = pneg %p80
      $region22: #{tpu_custom_call.1} parent=15 // pred_check_branch
        %204 = sbr.rel (%p202) target = $region24
      $region23: #{tpu_custom_call.1} parent=15 // pred_region
        %s205 = smul.u32 16, %s20
        %p206 = scmp.lt.s32.totalorder %s18, 3
        %s207 = scalar_select %p206, %s18, 3
        %p208 = scmp.lt.s32.totalorder %s205, 15
        %s209 = scalar_select %p208, %s205, 15
        %s210 = smul.addr %s207, 16
        %s211 = sadd.s32 %s209, %s210
        %s212 = smul.addr %s211, 8
        %s213 = scalar_lea.vmem %s1, %s212
        %s214 = smul.u32 16, %s20
      $region24: #{tpu_custom_call.1} parent=15 // pred_fallthru
        _
      // Predicated region
      $region25: #{tpu_custom_call.1} parent=15 // pred_check
        %p215 = pneg %p108
      $region26: #{tpu_custom_call.1} parent=15 // pred_check_branch
        %217 = sbr.rel (%p215) target = $region28
      $region27: #{tpu_custom_call.1} parent=15 // pred_region
        %s218 = smul.u32 16, %s20
        %p219 = scmp.lt.s32.totalorder %s18, 3
        %s220 = scalar_select %p219, %s18, 3
        %p221 = scmp.lt.s32.totalorder %s218, 15
        %s222 = scalar_select %p221, %s218, 15
        %s223 = smul.addr %s220, 16
        %s224 = sadd.s32 %s222, %s223
        %s225 = smul.addr %s224, 8
        %s226 = scalar_lea.vmem %s2, %s225
        %s227 = smul.u32 16, %s20
      $region28: #{tpu_custom_call.1} parent=15 // pred_fallthru
        _
    $region16: #{tpu_custom_call.1} parent=5 // pred_fallthru
      _
    %p228 = scmp.le.s32.totalorder 1, %s11
    %p229 = scmp.lt.s32.totalorder %s11, 5
    %p230 = pnand %p228, %p229
    %p231 = pneg %p230
    // Predicated region
    $region29: #{tpu_custom_call.1} parent=5 // pred_check
      _
    $region30: #{tpu_custom_call.1} parent=5 // pred_check_branch
      %233 = sbr.rel (%p230) target = $region32
    $region31: #{tpu_custom_call.1} parent=5 // pred_region
      %s234 = ssub.s32 %s11, 1
      %s235 = smul.u32 16, %s22
      %p236 = scmp.lt.s32.totalorder %s21, 3
      %s237 = scalar_select %p236, %s21, 3
      %p238 = scmp.lt.s32.totalorder %s235, 15
      %s239 = scalar_select %p238, %s235, 15
      %s240 = smul.addr %s237, 16
      %s241 = sadd.s32 %s239, %s240
      %s242 = smul.addr %s241, 8
      %s243 = scalar_lea.vmem %s0, %s242
      %p244 = pneg %p58
      %p245 = pneg %p55
      %s246 = smul.u32 16, %s23
      %p247 = scmp.lt.s32.totalorder %s21, 3
      %s248 = scalar_select %p247, %s21, 3
      %p249 = scmp.lt.s32.totalorder %s246, 15
      %s250 = scalar_select %p249, %s246, 15
      %s251 = smul.addr %s248, 16
      %s252 = sadd.s32 %s250, %s251
      %s253 = smul.addr %s252, 8
      %s254 = scalar_lea.vmem %s1, %s253
      %p255 = pneg %p86
      %p256 = pneg %p83
      %s257 = smul.u32 16, %s23
      %p258 = scmp.lt.s32.totalorder %s21, 3
      %s259 = scalar_select %p258, %s21, 3
      %p260 = scmp.lt.s32.totalorder %s257, 15
      %s261 = scalar_select %p260, %s257, 15
      %s262 = smul.addr %s259, 16
      %s263 = sadd.s32 %s261, %s262
      %s264 = smul.addr %s263, 8
      %s265 = scalar_lea.vmem %s2, %s264
      %p266 = pneg %p114
      %p267 = pneg %p111
      %p268 = pneg %p142
      %p269 = pneg %p139
      %s270 = smul.u32 16, %s22
      %p271 = scmp.lt.s32.totalorder %s21, 3
      %s272 = scalar_select %p271, %s21, 3
      %p273 = scmp.lt.s32.totalorder %s270, 15
      %s274 = scalar_select %p273, %s270, 15
      %s275 = smul.addr %s272, 16
      %s276 = sadd.s32 %s274, %s275
      %s277 = smul.addr %s276, 8
      %s278 = scalar_lea.vmem %s3, %s277
      %p279 = pneg %p170
      %p280 = pneg %p167
      %s281 = smul.u32 16, %s22
      %p282 = scmp.lt.s32.totalorder %s21, 3
      %s283 = scalar_select %p282, %s21, 3
      %p284 = scmp.lt.s32.totalorder %s281, 15
      %s285 = scalar_select %p284, %s281, 15
      %s286 = smul.addr %s283, 16
      %s287 = sadd.s32 %s285, %s286
      %s288 = smul.addr %s287, 8
      %s289 = scalar_lea.vmem %s4, %s288
      %s290 = smul.u32 16, %s22
      %p291 = scmp.lt.s32.totalorder %s21, 3
      %s292 = scalar_select %p291, %s21, 3
      %p293 = scmp.lt.s32.totalorder %s290, 15
      %s294 = scalar_select %p293, %s290, 15
      %s295 = smul.addr %s292, 16
      %s296 = sadd.s32 %s294, %s295
      %s297 = smul.addr %s296, 8
      %s298 = scalar_lea.vmem %s0, %s297
      %s299 = smul.u32 16, %s22
      %s300 = smul.u32 16, %s23
      %p301 = scmp.lt.s32.totalorder %s21, 3
      %s302 = scalar_select %p301, %s21, 3
      %p303 = scmp.lt.s32.totalorder %s300, 15
      %s304 = scalar_select %p303, %s300, 15
      %s305 = smul.addr %s302, 16
      %s306 = sadd.s32 %s304, %s305
      %s307 = smul.addr %s306, 8
      %s308 = scalar_lea.vmem %s1, %s307
      %s309 = smul.u32 16, %s23
      %s310 = smul.u32 16, %s23
      %p311 = scmp.lt.s32.totalorder %s21, 3
      %s312 = scalar_select %p311, %s21, 3
      %p313 = scmp.lt.s32.totalorder %s310, 15
      %s314 = scalar_select %p313, %s310, 15
      %s315 = smul.addr %s312, 16
      %s316 = sadd.s32 %s314, %s315
      %s317 = smul.addr %s316, 8
      %s318 = scalar_lea.vmem %s2, %s317
      %s319 = smul.u32 16, %s23
      %s320 = smul.u32 16, %s22
      %p321 = scmp.lt.s32.totalorder %s21, 3
      %s322 = scalar_select %p321, %s21, 3
      %p323 = scmp.lt.s32.totalorder %s320, 15
      %s324 = scalar_select %p323, %s320, 15
      %s325 = smul.addr %s322, 16
      %s326 = sadd.s32 %s324, %s325
      %s327 = smul.addr %s326, 8
      %s328 = scalar_lea.vmem %s3, %s327
      %s329 = smul.u32 16, %s22
      %s330 = smul.u32 16, %s22
      %p331 = scmp.lt.s32.totalorder %s21, 3
      %s332 = scalar_select %p331, %s21, 3
      %p333 = scmp.lt.s32.totalorder %s330, 15
      %s334 = scalar_select %p333, %s330, 15
      %s335 = smul.addr %s332, 16
      %s336 = sadd.s32 %s334, %s335
      %s337 = smul.addr %s336, 8
      %s338 = scalar_lea.vmem %s4, %s337
      %s339 = smul.u32 16, %s22
      %p340 = scmp.eq.s32.totalorder %s23, 0
      // Predicated region
      $region33: #{tpu_custom_call.1} parent=31 // pred_check
        %p341 = pneg %p340
      $region34: #{tpu_custom_call.1} parent=31 // pred_check_branch
        %343 = sbr.rel (%p341) target = $region36
      $region35: #{tpu_custom_call.1} parent=31 // pred_region
        %vm344 = vcmask 7168
        %345 = vst.msk [vmem:[#allocation2] sm:$0xff] %vm344, -inf
        %346 = vst.msk [vmem:[#allocation2 + $0x8] sm:$0xff] %vm344, -inf
        %347 = vst.msk [vmem:[#allocation2 + $0x10] sm:$0xff] %vm344, -inf
        %348 = vst.msk [vmem:[#allocation2 + $0x18] sm:$0xff] %vm344, -inf
        %349 = vst.msk [vmem:[#allocation2 + $0x20] sm:$0xff] %vm344, -inf
        %350 = vst.msk [vmem:[#allocation2 + $0x28] sm:$0xff] %vm344, -inf
        %351 = vst.msk [vmem:[#allocation2 + $0x30] sm:$0xff] %vm344, -inf
        %352 = vst.msk [vmem:[#allocation2 + $0x38] sm:$0xff] %vm344, -inf
        %353 = vst.msk [vmem:[#allocation2 + $0x40] sm:$0xff] %vm344, -inf
        %354 = vst.msk [vmem:[#allocation2 + $0x48] sm:$0xff] %vm344, -inf
        %355 = vst.msk [vmem:[#allocation2 + $0x50] sm:$0xff] %vm344, -inf
        %356 = vst.msk [vmem:[#allocation2 + $0x58] sm:$0xff] %vm344, -inf
        %357 = vst.msk [vmem:[#allocation2 + $0x60] sm:$0xff] %vm344, -inf
        %358 = vst.msk [vmem:[#allocation2 + $0x68] sm:$0xff] %vm344, -inf
        %359 = vst.msk [vmem:[#allocation2 + $0x70] sm:$0xff] %vm344, -inf
        %360 = vst.msk [vmem:[#allocation2 + $0x78] sm:$0xff] %vm344, -inf
        %361 = vst.msk [vmem:[#allocation3] sm:$0xff] %vm344, 0.0
        %362 = vst.msk [vmem:[#allocation3 + $0x8] sm:$0xff] %vm344, 0.0
        %363 = vst.msk [vmem:[#allocation3 + $0x10] sm:$0xff] %vm344, 0.0
        %364 = vst.msk [vmem:[#allocation3 + $0x18] sm:$0xff] %vm344, 0.0
        %365 = vst.msk [vmem:[#allocation3 + $0x20] sm:$0xff] %vm344, 0.0
        %366 = vst.msk [vmem:[#allocation3 + $0x28] sm:$0xff] %vm344, 0.0
        %367 = vst.msk [vmem:[#allocation3 + $0x30] sm:$0xff] %vm344, 0.0
        %368 = vst.msk [vmem:[#allocation3 + $0x38] sm:$0xff] %vm344, 0.0
        %369 = vst.msk [vmem:[#allocation3 + $0x40] sm:$0xff] %vm344, 0.0
        %370 = vst.msk [vmem:[#allocation3 + $0x48] sm:$0xff] %vm344, 0.0
        %371 = vst.msk [vmem:[#allocation3 + $0x50] sm:$0xff] %vm344, 0.0
        %372 = vst.msk [vmem:[#allocation3 + $0x58] sm:$0xff] %vm344, 0.0
        %373 = vst.msk [vmem:[#allocation3 + $0x60] sm:$0xff] %vm344, 0.0
        %374 = vst.msk [vmem:[#allocation3 + $0x68] sm:$0xff] %vm344, 0.0
        %375 = vst.msk [vmem:[#allocation3 + $0x70] sm:$0xff] %vm344, 0.0
        %376 = vst.msk [vmem:[#allocation3 + $0x78] sm:$0xff] %vm344, 0.0
        %vm377 = vcmask 261120
        %378 = vst.msk [vmem:[#allocation4] sm:$0xff] %vm377, 0.0
        %379 = vst.msk [vmem:[#allocation4 + $0x8] sm:$0xff] %vm377, 0.0
        %380 = vst.msk [vmem:[#allocation4 + $0x10] sm:$0xff] %vm377, 0.0
        %381 = vst.msk [vmem:[#allocation4 + $0x18] sm:$0xff] %vm377, 0.0
        %382 = vst.msk [vmem:[#allocation4 + $0x20] sm:$0xff] %vm377, 0.0
        %383 = vst.msk [vmem:[#allocation4 + $0x28] sm:$0xff] %vm377, 0.0
        %384 = vst.msk [vmem:[#allocation4 + $0x30] sm:$0xff] %vm377, 0.0
        %385 = vst.msk [vmem:[#allocation4 + $0x38] sm:$0xff] %vm377, 0.0
        %386 = vst.msk [vmem:[#allocation4 + $0x40] sm:$0xff] %vm377, 0.0
        %387 = vst.msk [vmem:[#allocation4 + $0x48] sm:$0xff] %vm377, 0.0
        %388 = vst.msk [vmem:[#allocation4 + $0x50] sm:$0xff] %vm377, 0.0
        %389 = vst.msk [vmem:[#allocation4 + $0x58] sm:$0xff] %vm377, 0.0
        %390 = vst.msk [vmem:[#allocation4 + $0x60] sm:$0xff] %vm377, 0.0
        %391 = vst.msk [vmem:[#allocation4 + $0x68] sm:$0xff] %vm377, 0.0
        %392 = vst.msk [vmem:[#allocation4 + $0x70] sm:$0xff] %vm377, 0.0
        %393 = vst.msk [vmem:[#allocation4 + $0x78] sm:$0xff] %vm377, 0.0
      $region36: #{tpu_custom_call.1} parent=31 // pred_fallthru
        _
      %v394 = vld [vmem:[%s298] sm:$0xff]
      %v395 = vld [vmem:[%s298 + $0x8] sm:$0xff]
      %v396 = vld [vmem:[%s298 + $0x10] sm:$0xff]
      %v397 = vld [vmem:[%s298 + $0x18] sm:$0xff]
      %v398 = vld [vmem:[%s298 + $0x20] sm:$0xff]
      %v399 = vld [vmem:[%s298 + $0x28] sm:$0xff]
      %v400 = vld [vmem:[%s298 + $0x30] sm:$0xff]
      %v401 = vld [vmem:[%s298 + $0x38] sm:$0xff]
      %v402 = vld [vmem:[%s298 + $0x40] sm:$0xff]
      %v403 = vld [vmem:[%s298 + $0x48] sm:$0xff]
      %v404 = vld [vmem:[%s298 + $0x50] sm:$0xff]
      %v405 = vld [vmem:[%s298 + $0x58] sm:$0xff]
      %v406 = vld [vmem:[%s298 + $0x60] sm:$0xff]
      %v407 = vld [vmem:[%s298 + $0x68] sm:$0xff]
      %v408 = vld [vmem:[%s298 + $0x70] sm:$0xff]
      %v409 = vld [vmem:[%s298 + $0x78] sm:$0xff]
      %v410 = vmul.f32 %v394, 0.17677669
      %v411 = vmul.f32 %v395, 0.17677669
      %v412 = vmul.f32 %v396, 0.17677669
      %v413 = vmul.f32 %v397, 0.17677669
      %v414 = vmul.f32 %v398, 0.17677669
      %v415 = vmul.f32 %v399, 0.17677669
      %v416 = vmul.f32 %v400, 0.17677669
      %v417 = vmul.f32 %v401, 0.17677669
      %v418 = vmul.f32 %v402, 0.17677669
      %v419 = vmul.f32 %v403, 0.17677669
      %v420 = vmul.f32 %v404, 0.17677669
      %v421 = vmul.f32 %v405, 0.17677669
      %v422 = vmul.f32 %v406, 0.17677669
      %v423 = vmul.f32 %v407, 0.17677669
      %v424 = vmul.f32 %v408, 0.17677669
      %v425 = vmul.f32 %v409, 0.17677669
      %v426 = vld [vmem:[%s308] sm:$0xff]
      %v427 = vld [vmem:[%s308 + $0x8] sm:$0xff]
      %v428 = vld [vmem:[%s308 + $0x10] sm:$0xff]
      %v429 = vld [vmem:[%s308 + $0x18] sm:$0xff]
      %v430 = vld [vmem:[%s308 + $0x20] sm:$0xff]
      %v431 = vld [vmem:[%s308 + $0x28] sm:$0xff]
      %v432 = vld [vmem:[%s308 + $0x30] sm:$0xff]
      %v433 = vld [vmem:[%s308 + $0x38] sm:$0xff]
      %v434 = vld [vmem:[%s308 + $0x40] sm:$0xff]
      %v435 = vld [vmem:[%s308 + $0x48] sm:$0xff]
      %v436 = vld [vmem:[%s308 + $0x50] sm:$0xff]
      %v437 = vld [vmem:[%s308 + $0x58] sm:$0xff]
      %v438 = vld [vmem:[%s308 + $0x60] sm:$0xff]
      %v439 = vld [vmem:[%s308 + $0x68] sm:$0xff]
      %v440 = vld [vmem:[%s308 + $0x70] sm:$0xff]
      %v441 = vld [vmem:[%s308 + $0x78] sm:$0xff]
      %vm442 = vcmask 261120
      %v444 = vsel %vm442, %v410, 0
      %v447 = vsel %vm442, %v411, 0
      %v450 = vsel %vm442, %v412, 0
      %v453 = vsel %vm442, %v413, 0
      %v456 = vsel %vm442, %v414, 0
      %v459 = vsel %vm442, %v415, 0
      %v462 = vsel %vm442, %v416, 0
      %v465 = vsel %vm442, %v417, 0
      %v468 = vsel %vm442, %v418, 0
      %v471 = vsel %vm442, %v419, 0
      %v474 = vsel %vm442, %v420, 0
      %v477 = vsel %vm442, %v421, 0
      %v480 = vsel %vm442, %v422, 0
      %v483 = vsel %vm442, %v423, 0
      %v486 = vsel %vm442, %v424, 0
      %v489 = vsel %vm442, %v425, 0
      %v492 = vsel %vm442, %v426, 0
      %v495 = vsel %vm442, %v427, 0
      %v498 = vsel %vm442, %v428, 0
      %v501 = vsel %vm442, %v429, 0
      %v504 = vsel %vm442, %v430, 0
      %v507 = vsel %vm442, %v431, 0
      %v510 = vsel %vm442, %v432, 0
      %v513 = vsel %vm442, %v433, 0
      %v516 = vsel %vm442, %v434, 0
      %v519 = vsel %vm442, %v435, 0
      %v522 = vsel %vm442, %v436, 0
      %v525 = vsel %vm442, %v437, 0
      %v528 = vsel %vm442, %v438, 0
      %v531 = vsel %vm442, %v439, 0
      %v534 = vsel %vm442, %v440, 0
      %v537 = vsel %vm442, %v441, 0
      %539 = vmatprep.subr.mxu0 0.0
      %v540 = vand.u32 %v492, 4294901760
      %541 = vmatpush1.xpose.msra.mxu0 %v540
      %542 = vmatprep.subr.mxu0 0.0
      %v543 = vand.u32 %v495, 4294901760
      %544 = vmatpush1.xpose.msra.mxu0 %v543
      %545 = vmatprep.subr.mxu0 0.0
      %v546 = vand.u32 %v498, 4294901760
      %547 = vmatpush1.xpose.msra.mxu0 %v546
      %548 = vmatprep.subr.mxu0 0.0
      %v549 = vand.u32 %v501, 4294901760
      %550 = vmatpush1.xpose.msra.mxu0 %v549
      %551 = vmatprep.subr.mxu0 0.0
      %v552 = vand.u32 %v504, 4294901760
      %553 = vmatpush1.xpose.msra.mxu0 %v552
      %554 = vmatprep.subr.mxu0 0.0
      %v555 = vand.u32 %v507, 4294901760
      %556 = vmatpush1.xpose.msra.mxu0 %v555
      %557 = vmatprep.subr.mxu0 0.0
      %v558 = vand.u32 %v510, 4294901760
      %559 = vmatpush1.xpose.msra.mxu0 %v558
      %560 = vmatprep.subr.mxu0 0.0
      %v561 = vand.u32 %v513, 4294901760
      %562 = vmatpush1.xpose.msra.mxu0 %v561
      %563 = vmatprep.subr.mxu0 0.0
      %v564 = vand.u32 %v516, 4294901760
      %565 = vmatpush1.xpose.msra.mxu0 %v564
      %566 = vmatprep.subr.mxu0 0.0
      %v567 = vand.u32 %v519, 4294901760
      %568 = vmatpush1.xpose.msra.mxu0 %v567
      %569 = vmatprep.subr.mxu0 0.0
      %v570 = vand.u32 %v522, 4294901760
      %571 = vmatpush1.xpose.msra.mxu0 %v570
      %572 = vmatprep.subr.mxu0 0.0
      %v573 = vand.u32 %v525, 4294901760
      %574 = vmatpush1.xpose.msra.mxu0 %v573
      %575 = vmatprep.subr.mxu0 0.0
      %v576 = vand.u32 %v528, 4294901760
      %577 = vmatpush1.xpose.msra.mxu0 %v576
      %578 = vmatprep.subr.mxu0 0.0
      %v579 = vand.u32 %v531, 4294901760
      %580 = vmatpush1.xpose.msra.mxu0 %v579
      %581 = vmatprep.subr.mxu0 0.0
      %v582 = vand.u32 %v534, 4294901760
      %583 = vmatpush1.xpose.msra.mxu0 %v582
      %584 = vmatprep.subr.mxu0 0.0
      %v585 = vand.u32 %v537, 4294901760
      %586 = vmatpush1.xpose.msra.mxu0 %v585
      %587 = vmatprep.subr.mxu0 0.0
      %588 = vmatpush1.xpose.msra.mxu0 0.0
      %589 = vmatprep.subr.mxu0 0.0
      %590 = vmatpush1.xpose.msra.mxu0 0.0
      %591 = vmatprep.subr.mxu0 0.0
      %592 = vmatpush1.xpose.msra.mxu0 0.0
      %593 = vmatprep.subr.mxu0 0.0
      %594 = vmatpush1.xpose.msra.mxu0 0.0
      %595 = vmatprep.subr.mxu0 0.0
      %596 = vmatpush1.xpose.msra.mxu0 0.0
      %597 = vmatprep.subr.mxu0 0.0
      %598 = vmatpush1.xpose.msra.mxu0 0.0
      %599 = vmatprep.subr.mxu0 0.0
      %600 = vmatpush1.xpose.msra.mxu0 0.0
      %601 = vmatprep.subr.mxu0 0.0
      %602 = vmatpush1.xpose.msra.mxu0 0.0
      %603 = vmatprep.subr.mxu0 0.0
      %604 = vmatpush1.xpose.msra.mxu0 0.0
      %605 = vmatprep.subr.mxu0 0.0
      %606 = vmatpush1.xpose.msra.mxu0 0.0
      %607 = vmatprep.subr.mxu0 0.0
      %608 = vmatpush1.xpose.msra.mxu0 0.0
      %609 = vmatprep.subr.mxu0 0.0
      %610 = vmatpush1.xpose.msra.mxu0 0.0
      %611 = vmatprep.subr.mxu0 0.0
      %612 = vmatpush1.xpose.msra.mxu0 0.0
      %613 = vmatprep.subr.mxu0 0.0
      %614 = vmatpush1.xpose.msra.mxu0 0.0
      %615 = vmatprep.subr.mxu0 0.0
      %616 = vmatpush1.xpose.msra.mxu0 0.0
      %617 = vmatprep.subr.mxu0 0.0
      %618 = vmatpush1.xpose.msra.mxu0 0.0
      %619 = vmatprep.mubr.f32.mxu0 0.0
      %v620 = vand.u32 %v444, 4294901760
      %v621 = vsub.f32 %v444, %v620
      %v622 = vand.u32 %v621, 4294901760
      %v623 = vsub.f32 %v621, %v622
      %v624 = vand.u32 %v623, 4294901760
      %625 = vmatmul.mubr.f32.gmra.mrb[0].mxu0 %v624
      %v626 = vpop.f32.mrb[0].mxu0
      %v627 = vadd.f32 0.0, %v626
      %v628 = vpop.f32.mrb[0].mxu0
      %629 = vmatprep.mubr.f32.mxu0 0.0
      %v630 = vand.u32 %v447, 4294901760
      %v631 = vsub.f32 %v447, %v630
      %v632 = vand.u32 %v631, 4294901760
      %v633 = vsub.f32 %v631, %v632
      %v634 = vand.u32 %v633, 4294901760
      %635 = vmatmul.mubr.f32.gmra.mrb[0].mxu0 %v634
      %v636 = vpop.f32.mrb[0].mxu0
      %v637 = vadd.f32 0.0, %v636
      %v638 = vpop.f32.mrb[0].mxu0
      %639 = vmatprep.mubr.f32.mxu0 0.0
      %v640 = vand.u32 %v450, 4294901760
      %v641 = vsub.f32 %v450, %v640
      %v642 = vand.u32 %v641, 4294901760
      %v643 = vsub.f32 %v641, %v642
      %v644 = vand.u32 %v643, 4294901760
      %645 = vmatmul.mubr.f32.gmra.mrb[0].mxu0 %v644
      %v646 = vpop.f32.mrb[0].mxu0
      %v647 = vadd.f32 0.0, %v646
      %v648 = vpop.f32.mrb[0].mxu0
      %649 = vmatprep.mubr.f32.mxu0 0.0
      %v650 = vand.u32 %v453, 4294901760
      %v651 = vsub.f32 %v453, %v650
      %v652 = vand.u32 %v651, 4294901760
      %v653 = vsub.f32 %v651, %v652
      %v654 = vand.u32 %v653, 4294901760
      %655 = vmatmul.mubr.f32.gmra.mrb[0].mxu0 %v654
      %v656 = vpop.f32.mrb[0].mxu0
      %v657 = vadd.f32 0.0, %v656
      %v658 = vpop.f32.mrb[0].mxu0
      %659 = vmatprep.mubr.f32.mxu0 0.0
      %v660 = vand.u32 %v456, 4294901760
      %v661 = vsub.f32 %v456, %v660
      %v662 = vand.u32 %v661, 4294901760
      %v663 = vsub.f32 %v661, %v662
      %v664 = vand.u32 %v663, 4294901760
      %665 = vmatmul.mubr.f32.gmra.mrb[0].mxu0 %v664
      %v666 = vpop.f32.mrb[0].mxu0
      %v667 = vadd.f32 0.0, %v666
      %v668 = vpop.f32.mrb[0].mxu0
      %669 = vmatprep.mubr.f32.mxu0 0.0
      %v670 = vand.u32 %v459, 4294901760
      %v671 = vsub.f32 %v459, %v670
      %v672 = vand.u32 %v671, 4294901760
      %v673 = vsub.f32 %v671, %v672
      %v674 = vand.u32 %v673, 4294901760
      %675 = vmatmul.mubr.f32.gmra.mrb[0].mxu0 %v674
      %v676 = vpop.f32.mrb[0].mxu0
      %v677 = vadd.f32 0.0, %v676
      %v678 = vpop.f32.mrb[0].mxu0
      %679 = vmatprep.mubr.f32.mxu0 0.0
      %v680 = vand.u32 %v462, 4294901760
      %v681 = vsub.f32 %v462, %v680
      %v682 = vand.u32 %v681, 4294901760
      %v683 = vsub.f32 %v681, %v682
      %v684 = vand.u32 %v683, 4294901760
      %685 = vmatmul.mubr.f32.gmra.mrb[0].mxu0 %v684
      %v686 = vpop.f32.mrb[0].mxu0
      %v687 = vadd.f32 0.0, %v686
      %v688 = vpop.f32.mrb[0].mxu0
      %689 = vmatprep.mubr.f32.mxu0 0.0
      %v690 = vand.u32 %v465, 4294901760
      %v691 = vsub.f32 %v465, %v690
      %v692 = vand.u32 %v691, 4294901760
      %v693 = vsub.f32 %v691, %v692
      %v694 = vand.u32 %v693, 4294901760
      %695 = vmatmul.mubr.f32.gmra.mrb[0].mxu0 %v694
      %v696 = vpop.f32.mrb[0].mxu0
      %v697 = vadd.f32 0.0, %v696
      %v698 = vpop.f32.mrb[0].mxu0
      %699 = vmatprep.mubr.f32.mxu0 0.0
      %v700 = vand.u32 %v468, 4294901760
      %v701 = vsub.f32 %v468, %v700
      %v702 = vand.u32 %v701, 4294901760
      %v703 = vsub.f32 %v701, %v702
      %v704 = vand.u32 %v703, 4294901760
      %705 = vmatmul.mubr.f32.gmra.mrb[0].mxu0 %v704
      %v706 = vpop.f32.mrb[0].mxu0
      %v707 = vadd.f32 0.0, %v706
      %v708 = vpop.f32.mrb[0].mxu0
      %709 = vmatprep.mubr.f32.mxu0 0.0
      %v710 = vand.u32 %v471, 4294901760
      %v711 = vsub.f32 %v471, %v710
      %v712 = vand.u32 %v711, 4294901760
      %v713 = vsub.f32 %v711, %v712
      %v714 = vand.u32 %v713, 4294901760
      %715 = vmatmul.mubr.f32.gmra.mrb[0].mxu0 %v714
      %v716 = vpop.f32.mrb[0].mxu0
      %v717 = vadd.f32 0.0, %v716
      %v718 = vpop.f32.mrb[0].mxu0
      %719 = vmatprep.mubr.f32.mxu0 0.0
      %v720 = vand.u32 %v474, 4294901760
      %v721 = vsub.f32 %v474, %v720
      %v722 = vand.u32 %v721, 4294901760
      %v723 = vsub.f32 %v721, %v722
      %v724 = vand.u32 %v723, 4294901760
      %725 = vmatmul.mubr.f32.gmra.mrb[0].mxu0 %v724
      %v726 = vpop.f32.mrb[0].mxu0
      %v727 = vadd.f32 0.0, %v726
      %v728 = vpop.f32.mrb[0].mxu0
      %729 = vmatprep.mubr.f32.mxu0 0.0
      %v730 = vand.u32 %v477, 4294901760
      %v731 = vsub.f32 %v477, %v730
      %v732 = vand.u32 %v731, 4294901760
      %v733 = vsub.f32 %v731, %v732
      %v734 = vand.u32 %v733, 4294901760
      %735 = vmatmul.mubr.f32.gmra.mrb[0].mxu0 %v734
      %v736 = vpop.f32.mrb[0].mxu0
      %v737 = vadd.f32 0.0, %v736
      %v738 = vpop.f32.mrb[0].mxu0
      %739 = vmatprep.mubr.f32.mxu0 0.0
      %v740 = vand.u32 %v480, 4294901760
      %v741 = vsub.f32 %v480, %v740
      %v742 = vand.u32 %v741, 4294901760
      %v743 = vsub.f32 %v741, %v742
      %v744 = vand.u32 %v743, 4294901760
      %745 = vmatmul.mubr.f32.gmra.mrb[0].mxu0 %v744
      %v746 = vpop.f32.mrb[0].mxu0
      %v747 = vadd.f32 0.0, %v746
      %v748 = vpop.f32.mrb[0].mxu0
      %749 = vmatprep.mubr.f32.mxu0 0.0
      %v750 = vand.u32 %v483, 4294901760
      %v751 = vsub.f32 %v483, %v750
      %v752 = vand.u32 %v751, 4294901760
      %v753 = vsub.f32 %v751, %v752
      %v754 = vand.u32 %v753, 4294901760
      %755 = vmatmul.mubr.f32.gmra.mrb[0].mxu0 %v754
      %v756 = vpop.f32.mrb[0].mxu0
      %v757 = vadd.f32 0.0, %v756
      %v758 = vpop.f32.mrb[0].mxu0
      %759 = vmatprep.mubr.f32.mxu0 0.0
      %v760 = vand.u32 %v486, 4294901760
      %v761 = vsub.f32 %v486, %v760
      %v762 = vand.u32 %v761, 4294901760
      %v763 = vsub.f32 %v761, %v762
      %v764 = vand.u32 %v763, 4294901760
      %765 = vmatmul.mubr.f32.gmra.mrb[0].mxu0 %v764
      %v766 = vpop.f32.mrb[0].mxu0
      %v767 = vadd.f32 0.0, %v766
      %v768 = vpop.f32.mrb[0].mxu0
      %769 = vmatprep.mubr.f32.mxu0 0.0
      %v770 = vand.u32 %v489, 4294901760
      %v771 = vsub.f32 %v489, %v770
      %v772 = vand.u32 %v771, 4294901760
      %v773 = vsub.f32 %v771, %v772
      %v774 = vand.u32 %v773, 4294901760
      %775 = vmatmul.mubr.f32.gmra.mrb[0].mxu0 %v774
      %v776 = vpop.f32.mrb[0].mxu0
      %v777 = vadd.f32 0.0, %v776
      %v778 = vpop.f32.mrb[0].mxu0
      %779 = vdwg.mxu0
      %780 = vmatprep.subr.mxu0 0.0
      %v781 = vand.u32 %v492, 4294901760
      %v782 = vsub.f32 %v492, %v781
      %v783 = vand.u32 %v782, 4294901760
      %v784 = vsub.f32 %v782, %v783
      %v785 = vand.u32 %v784, 4294901760
      %786 = vmatpush1.xpose.msra.mxu0 %v785
      %787 = vmatprep.subr.mxu0 0.0
      %v788 = vand.u32 %v495, 4294901760
      %v789 = vsub.f32 %v495, %v788
      %v790 = vand.u32 %v789, 4294901760
      %v791 = vsub.f32 %v789, %v790
      %v792 = vand.u32 %v791, 4294901760
      %793 = vmatpush1.xpose.msra.mxu0 %v792
      %794 = vmatprep.subr.mxu0 0.0
      %v795 = vand.u32 %v498, 4294901760
      %v796 = vsub.f32 %v498, %v795
      %v797 = vand.u32 %v796, 4294901760
      %v798 = vsub.f32 %v796, %v797
      %v799 = vand.u32 %v798, 4294901760
      %800 = vmatpush1.xpose.msra.mxu0 %v799
      %801 = vmatprep.subr.mxu0 0.0
      %v802 = vand.u32 %v501, 4294901760
      %v803 = vsub.f32 %v501, %v802
      %v804 = vand.u32 %v803, 4294901760
      %v805 = vsub.f32 %v803, %v804
      %v806 = vand.u32 %v805, 4294901760
      %807 = vmatpush1.xpose.msra.mxu0 %v806
      %808 = vmatprep.subr.mxu0 0.0
      %v809 = vand.u32 %v504, 4294901760
      %v810 = vsub.f32 %v504, %v809
      %v811 = vand.u32 %v810, 4294901760
      %v812 = vsub.f32 %v810, %v811
      %v813 = vand.u32 %v812, 4294901760
      %814 = vmatpush1.xpose.msra.mxu0 %v813
      %815 = vmatprep.subr.mxu0 0.0
      %v816 = vand.u32 %v507, 4294901760
      %v817 = vsub.f32 %v507, %v816
      %v818 = vand.u32 %v817, 4294901760
      %v819 = vsub.f32 %v817, %v818
      %v820 = vand.u32 %v819, 4294901760
      %821 = vmatpush1.xpose.msra.mxu0 %v820
      %822 = vmatprep.subr.mxu0 0.0
      %v823 = vand.u32 %v510, 4294901760
      %v824 = vsub.f32 %v510, %v823
      %v825 = vand.u32 %v824, 4294901760
      %v826 = vsub.f32 %v824, %v825
      %v827 = vand.u32 %v826, 4294901760
      %828 = vmatpush1.xpose.msra.mxu0 %v827
      %829 = vmatprep.subr.mxu0 0.0
      %v830 = vand.u32 %v513, 4294901760
      %v831 = vsub.f32 %v513, %v830
      %v832 = vand.u32 %v831, 4294901760
      %v833 = vsub.f32 %v831, %v832
      %v834 = vand.u32 %v833, 4294901760
      %835 = vmatpush1.xpose.msra.mxu0 %v834
      %836 = vmatprep.subr.mxu0 0.0
      %v837 = vand.u32 %v516, 4294901760
      %v838 = vsub.f32 %v516, %v837
      %v839 = vand.u32 %v838, 4294901760
      %v840 = vsub.f32 %v838, %v839
      %v841 = vand.u32 %v840, 4294901760
      %842 = vmatpush1.xpose.msra.mxu0 %v841
      %843 = vmatprep.subr.mxu0 0.0
      %v844 = vand.u32 %v519, 4294901760
      %v845 = vsub.f32 %v519, %v844
      %v846 = vand.u32 %v845, 4294901760
      %v847 = vsub.f32 %v845, %v846
      %v848 = vand.u32 %v847, 4294901760
      %849 = vmatpush1.xpose.msra.mxu0 %v848
      %850 = vmatprep.subr.mxu0 0.0
      %v851 = vand.u32 %v522, 4294901760
      %v852 = vsub.f32 %v522, %v851
      %v853 = vand.u32 %v852, 4294901760
      %v854 = vsub.f32 %v852, %v853
      %v855 = vand.u32 %v854, 4294901760
      %856 = vmatpush1.xpose.msra.mxu0 %v855
      %857 = vmatprep.subr.mxu0 0.0
      %v858 = vand.u32 %v525, 4294901760
      %v859 = vsub.f32 %v525, %v858
      %v860 = vand.u32 %v859, 4294901760
      %v861 = vsub.f32 %v859, %v860
      %v862 = vand.u32 %v861, 4294901760
      %863 = vmatpush1.xpose.msra.mxu0 %v862
      %864 = vmatprep.subr.mxu0 0.0
      %v865 = vand.u32 %v528, 4294901760
      %v866 = vsub.f32 %v528, %v865
      %v867 = vand.u32 %v866, 4294901760
      %v868 = vsub.f32 %v866, %v867
      %v869 = vand.u32 %v868, 4294901760
      %870 = vmatpush1.xpose.msra.mxu0 %v869
      %871 = vmatprep.subr.mxu0 0.0
      %v872 = vand.u32 %v531, 4294901760
      %v873 = vsub.f32 %v531, %v872
      %v874 = vand.u32 %v873, 4294901760
      %v875 = vsub.f32 %v873, %v874
      %v876 = vand.u32 %v875, 4294901760
      %877 = vmatpush1.xpose.msra.mxu0 %v876
      %878 = vmatprep.subr.mxu0 0.0
      %v879 = vand.u32 %v534, 4294901760
      %v880 = vsub.f32 %v534, %v879
      %v881 = vand.u32 %v880, 4294901760
      %v882 = vsub.f32 %v880, %v881
      %v883 = vand.u32 %v882, 4294901760
      %884 = vmatpush1.xpose.msra.mxu0 %v883
      %885 = vmatprep.subr.mxu0 0.0
      %v886 = vand.u32 %v537, 4294901760
      %v887 = vsub.f32 %v537, %v886
      %v888 = vand.u32 %v887, 4294901760
      %v889 = vsub.f32 %v887, %v888
      %v890 = vand.u32 %v889, 4294901760
      %891 = vmatpush1.xpose.msra.mxu0 %v890
      %892 = vmatprep.subr.mxu0 0.0
      %893 = vmatpush1.xpose.msra.mxu0 0.0
      %894 = vmatprep.subr.mxu0 0.0
      %895 = vmatpush1.xpose.msra.mxu0 0.0
      %896 = vmatprep.subr.mxu0 0.0
      %897 = vmatpush1.xpose.msra.mxu0 0.0
      %898 = vmatprep.subr.mxu0 0.0
      %899 = vmatpush1.xpose.msra.mxu0 0.0
      %900 = vmatprep.subr.mxu0 0.0
      %901 = vmatpush1.xpose.msra.mxu0 0.0
      %902 = vmatprep.subr.mxu0 0.0
      %903 = vmatpush1.xpose.msra.mxu0 0.0
      %904 = vmatprep.subr.mxu0 0.0
      %905 = vmatpush1.xpose.msra.mxu0 0.0
      %906 = vmatprep.subr.mxu0 0.0
      %907 = vmatpush1.xpose.msra.mxu0 0.0
      %908 = vmatprep.subr.mxu0 0.0
      %909 = vmatpush1.xpose.msra.mxu0 0.0
      %910 = vmatprep.subr.mxu0 0.0
      %911 = vmatpush1.xpose.msra.mxu0 0.0
      %912 = vmatprep.subr.mxu0 0.0
      %913 = vmatpush1.xpose.msra.mxu0 0.0
      %914 = vmatprep.subr.mxu0 0.0
      %915 = vmatpush1.xpose.msra.mxu0 0.0
      %916 = vmatprep.subr.mxu0 0.0
      %917 = vmatpush1.xpose.msra.mxu0 0.0
      %918 = vmatprep.subr.mxu0 0.0
      %919 = vmatpush1.xpose.msra.mxu0 0.0
      %920 = vmatprep.subr.mxu0 0.0
      %921 = vmatpush1.xpose.msra.mxu0 0.0
      %922 = vmatprep.subr.mxu0 0.0
      %923 = vmatpush1.xpose.msra.mxu0 0.0
      %924 = vmatprep.mubr.f32.mxu0 0.0
      %v925 = vand.u32 %v444, 4294901760
      %926 = vmatmul.mubr.f32.gmra.mrb[0].mxu0 %v925
      %v927 = vpop.f32.mrb[0].mxu0
      %v928 = vadd.f32 %v627, %v927
      %v929 = vpop.f32.mrb[0].mxu0
      %930 = vmatprep.mubr.f32.mxu0 0.0
      %v931 = vand.u32 %v447, 4294901760
      %932 = vmatmul.mubr.f32.gmra.mrb[0].mxu0 %v931
      %v933 = vpop.f32.mrb[0].mxu0
      %v934 = vadd.f32 %v637, %v933
      %v935 = vpop.f32.mrb[0].mxu0
      %936 = vmatprep.mubr.f32.mxu0 0.0
      %v937 = vand.u32 %v450, 4294901760
      %938 = vmatmul.mubr.f32.gmra.mrb[0].mxu0 %v937
      %v939 = vpop.f32.mrb[0].mxu0
      %v940 = vadd.f32 %v647, %v939
      %v941 = vpop.f32.mrb[0].mxu0
      %942 = vmatprep.mubr.f32.mxu0 0.0
      %v943 = vand.u32 %v453, 4294901760
      %944 = vmatmul.mubr.f32.gmra.mrb[0].mxu0 %v943
      %v945 = vpop.f32.mrb[0].mxu0
      %v946 = vadd.f32 %v657, %v945
      %v947 = vpop.f32.mrb[0].mxu0
      %948 = vmatprep.mubr.f32.mxu0 0.0
      %v949 = vand.u32 %v456, 4294901760
      %950 = vmatmul.mubr.f32.gmra.mrb[0].mxu0 %v949
      %v951 = vpop.f32.mrb[0].mxu0
      %v952 = vadd.f32 %v667, %v951
      %v953 = vpop.f32.mrb[0].mxu0
      %954 = vmatprep.mubr.f32.mxu0 0.0
      %v955 = vand.u32 %v459, 4294901760
      %956 = vmatmul.mubr.f32.gmra.mrb[0].mxu0 %v955
      %v957 = vpop.f32.mrb[0].mxu0
      %v958 = vadd.f32 %v677, %v957
      %v959 = vpop.f32.mrb[0].mxu0
      %960 = vmatprep.mubr.f32.mxu0 0.0
      %v961 = vand.u32 %v462, 4294901760
      %962 = vmatmul.mubr.f32.gmra.mrb[0].mxu0 %v961
      %v963 = vpop.f32.mrb[0].mxu0
      %v964 = vadd.f32 %v687, %v963
      %v965 = vpop.f32.mrb[0].mxu0
      %966 = vmatprep.mubr.f32.mxu0 0.0
      %v967 = vand.u32 %v465, 4294901760
      %968 = vmatmul.mubr.f32.gmra.mrb[0].mxu0 %v967
      %v969 = vpop.f32.mrb[0].mxu0
      %v970 = vadd.f32 %v697, %v969
      %v971 = vpop.f32.mrb[0].mxu0
      %972 = vmatprep.mubr.f32.mxu0 0.0
      %v973 = vand.u32 %v468, 4294901760
      %974 = vmatmul.mubr.f32.gmra.mrb[0].mxu0 %v973
      %v975 = vpop.f32.mrb[0].mxu0
      %v976 = vadd.f32 %v707, %v975
      %v977 = vpop.f32.mrb[0].mxu0
      %978 = vmatprep.mubr.f32.mxu0 0.0
      %v979 = vand.u32 %v471, 4294901760
      %980 = vmatmul.mubr.f32.gmra.mrb[0].mxu0 %v979
      %v981 = vpop.f32.mrb[0].mxu0
      %v982 = vadd.f32 %v717, %v981
      %v983 = vpop.f32.mrb[0].mxu0
      %984 = vmatprep.mubr.f32.mxu0 0.0
      %v985 = vand.u32 %v474, 4294901760
      %986 = vmatmul.mubr.f32.gmra.mrb[0].mxu0 %v985
      %v987 = vpop.f32.mrb[0].mxu0
      %v988 = vadd.f32 %v727, %v987
      %v989 = vpop.f32.mrb[0].mxu0
      %990 = vmatprep.mubr.f32.mxu0 0.0
      %v991 = vand.u32 %v477, 4294901760
      %992 = vmatmul.mubr.f32.gmra.mrb[0].mxu0 %v991
      %v993 = vpop.f32.mrb[0].mxu0
      %v994 = vadd.f32 %v737, %v993
      %v995 = vpop.f32.mrb[0].mxu0
      %996 = vmatprep.mubr.f32.mxu0 0.0
      %v997 = vand.u32 %v480, 4294901760
      %998 = vmatmul.mubr.f32.gmra.mrb[0].mxu0 %v997
      %v999 = vpop.f32.mrb[0].mxu0
      %v1000 = vadd.f32 %v747, %v999
      %v1001 = vpop.f32.mrb[0].mxu0
      %1002 = vmatprep.mubr.f32.mxu0 0.0
      %v1003 = vand.u32 %v483, 4294901760
      %1004 = vmatmul.mubr.f32.gmra.mrb[0].mxu0 %v1003
      %v1005 = vpop.f32.mrb[0].mxu0
      %v1006 = vadd.f32 %v757, %v1005
      %v1007 = vpop.f32.mrb[0].mxu0
      %1008 = vmatprep.mubr.f32.mxu0 0.0
      %v1009 = vand.u32 %v486, 4294901760
      %1010 = vmatmul.mubr.f32.gmra.mrb[0].mxu0 %v1009
      %v1011 = vpop.f32.mrb[0].mxu0
      %v1012 = vadd.f32 %v767, %v1011
      %v1013 = vpop.f32.mrb[0].mxu0
      %1014 = vmatprep.mubr.f32.mxu0 0.0
      %v1015 = vand.u32 %v489, 4294901760
      %1016 = vmatmul.mubr.f32.gmra.mrb[0].mxu0 %v1015
      %v1017 = vpop.f32.mrb[0].mxu0
      %v1018 = vadd.f32 %v777, %v1017
      %v1019 = vpop.f32.mrb[0].mxu0
      %1020 = vdwg.mxu0
      %1021 = vmatprep.subr.mxu0 0.0
      %v1022 = vand.u32 %v492, 4294901760
      %v1023 = vsub.f32 %v492, %v1022
      %1024 = vmatpush1.xpose.msra.mxu0 %v1023
      %1025 = vmatprep.subr.mxu0 0.0
      %v1026 = vand.u32 %v495, 4294901760
      %v1027 = vsub.f32 %v495, %v1026
      %1028 = vmatpush1.xpose.msra.mxu0 %v1027
      %1029 = vmatprep.subr.mxu0 0.0
      %v1030 = vand.u32 %v498, 4294901760
      %v1031 = vsub.f32 %v498, %v1030
      %1032 = vmatpush1.xpose.msra.mxu0 %v1031
      %1033 = vmatprep.subr.mxu0 0.0
      %v1034 = vand.u32 %v501, 4294901760
      %v1035 = vsub.f32 %v501, %v1034
      %1036 = vmatpush1.xpose.msra.mxu0 %v1035
      %1037 = vmatprep.subr.mxu0 0.0
      %v1038 = vand.u32 %v504, 4294901760
      %v1039 = vsub.f32 %v504, %v1038
      %1040 = vmatpush1.xpose.msra.mxu0 %v1039
      %1041 = vmatprep.subr.mxu0 0.0
      %v1042 = vand.u32 %v507, 4294901760
      %v1043 = vsub.f32 %v507, %v1042
      %1044 = vmatpush1.xpose.msra.mxu0 %v1043
      %1045 = vmatprep.subr.mxu0 0.0
      %v1046 = vand.u32 %v510, 4294901760
      %v1047 = vsub.f32 %v510, %v1046
      %1048 = vmatpush1.xpose.msra.mxu0 %v1047
      %1049 = vmatprep.subr.mxu0 0.0
      %v1050 = vand.u32 %v513, 4294901760
      %v1051 = vsub.f32 %v513, %v1050
      %1052 = vmatpush1.xpose.msra.mxu0 %v1051
      %1053 = vmatprep.subr.mxu0 0.0
      %v1054 = vand.u32 %v516, 4294901760
      %v1055 = vsub.f32 %v516, %v1054
      %1056 = vmatpush1.xpose.msra.mxu0 %v1055
      %1057 = vmatprep.subr.mxu0 0.0
      %v1058 = vand.u32 %v519, 4294901760
      %v1059 = vsub.f32 %v519, %v1058
      %1060 = vmatpush1.xpose.msra.mxu0 %v1059
      %1061 = vmatprep.subr.mxu0 0.0
      %v1062 = vand.u32 %v522, 4294901760
      %v1063 = vsub.f32 %v522, %v1062
      %1064 = vmatpush1.xpose.msra.mxu0 %v1063
      %1065 = vmatprep.subr.mxu0 0.0
      %v1066 = vand.u32 %v525, 4294901760
      %v1067 = vsub.f32 %v525, %v1066
      %1068 = vmatpush1.xpose.msra.mxu0 %v1067
      %1069 = vmatprep.subr.mxu0 0.0
      %v1070 = vand.u32 %v528, 4294901760
      %v1071 = vsub.f32 %v528, %v1070
      %1072 = vmatpush1.xpose.msra.mxu0 %v1071
      %1073 = vmatprep.subr.mxu0 0.0
      %v1074 = vand.u32 %v531, 4294901760
      %v1075 = vsub.f32 %v531, %v1074
      %1076 = vmatpush1.xpose.msra.mxu0 %v1075
      %1077 = vmatprep.subr.mxu0 0.0
      %v1078 = vand.u32 %v534, 4294901760
      %v1079 = vsub.f32 %v534, %v1078
      %1080 = vmatpush1.xpose.msra.mxu0 %v1079
      %1081 = vmatprep.subr.mxu0 0.0
      %v1082 = vand.u32 %v537, 4294901760
      %v1083 = vsub.f32 %v537, %v1082
      %1084 = vmatpush1.xpose.msra.mxu0 %v1083
      %1085 = vmatprep.subr.mxu0 0.0
      %1086 = vmatpush1.xpose.msra.mxu0 0.0
      %1087 = vmatprep.subr.mxu0 0.0
      %1088 = vmatpush1.xpose.msra.mxu0 0.0
      %1089 = vmatprep.subr.mxu0 0.0
      %1090 = vmatpush1.xpose.msra.mxu0 0.0
      %1091 = vmatprep.subr.mxu0 0.0
      %1092 = vmatpush1.xpose.msra.mxu0 0.0
      %1093 = vmatprep.subr.mxu0 0.0
      %1094 = vmatpush1.xpose.msra.mxu0 0.0
      %1095 = vmatprep.subr.mxu0 0.0
      %1096 = vmatpush1.xpose.msra.mxu0 0.0
      %1097 = vmatprep.subr.mxu0 0.0
      %1098 = vmatpush1.xpose.msra.mxu0 0.0
      %1099 = vmatprep.subr.mxu0 0.0
      %1100 = vmatpush1.xpose.msra.mxu0 0.0
      %1101 = vmatprep.subr.mxu0 0.0
      %1102 = vmatpush1.xpose.msra.mxu0 0.0
      %1103 = vmatprep.subr.mxu0 0.0
      %1104 = vmatpush1.xpose.msra.mxu0 0.0
      %1105 = vmatprep.subr.mxu0 0.0
      %1106 = vmatpush1.xpose.msra.mxu0 0.0
      %1107 = vmatprep.subr.mxu0 0.0
      %1108 = vmatpush1.xpose.msra.mxu0 0.0
      %1109 = vmatprep.subr.mxu0 0.0
      %1110 = vmatpush1.xpose.msra.mxu0 0.0
      %1111 = vmatprep.subr.mxu0 0.0
      %1112 = vmatpush1.xpose.msra.mxu0 0.0
      %1113 = vmatprep.subr.mxu0 0.0
      %1114 = vmatpush1.xpose.msra.mxu0 0.0
      %1115 = vmatprep.subr.mxu0 0.0
      %1116 = vmatpush1.xpose.msra.mxu0 0.0
      %1117 = vmatprep.mubr.f32.mxu0 0.0
      %v1118 = vand.u32 %v444, 4294901760
      %v1119 = vsub.f32 %v444, %v1118
      %1120 = vmatmul.mubr.f32.gmra.mrb[0].mxu0 %v1119
      %v1121 = vpop.f32.mrb[0].mxu0
      %v1122 = vadd.f32 %v928, %v1121
      %v1123 = vpop.f32.mrb[0].mxu0
      %1124 = vmatprep.mubr.f32.mxu0 0.0
      %v1125 = vand.u32 %v447, 4294901760
      %v1126 = vsub.f32 %v447, %v1125
      %1127 = vmatmul.mubr.f32.gmra.mrb[0].mxu0 %v1126
      %v1128 = vpop.f32.mrb[0].mxu0
      %v1129 = vadd.f32 %v934, %v1128
      %v1130 = vpop.f32.mrb[0].mxu0
      %1131 = vmatprep.mubr.f32.mxu0 0.0
      %v1132 = vand.u32 %v450, 4294901760
      %v1133 = vsub.f32 %v450, %v1132
      %1134 = vmatmul.mubr.f32.gmra.mrb[0].mxu0 %v1133
      %v1135 = vpop.f32.mrb[0].mxu0
      %v1136 = vadd.f32 %v940, %v1135
      %v1137 = vpop.f32.mrb[0].mxu0
      %1138 = vmatprep.mubr.f32.mxu0 0.0
      %v1139 = vand.u32 %v453, 4294901760
      %v1140 = vsub.f32 %v453, %v1139
      %1141 = vmatmul.mubr.f32.gmra.mrb[0].mxu0 %v1140
      %v1142 = vpop.f32.mrb[0].mxu0
      %v1143 = vadd.f32 %v946, %v1142
      %v1144 = vpop.f32.mrb[0].mxu0
      %1145 = vmatprep.mubr.f32.mxu0 0.0
      %v1146 = vand.u32 %v456, 4294901760
      %v1147 = vsub.f32 %v456, %v1146
      %1148 = vmatmul.mubr.f32.gmra.mrb[0].mxu0 %v1147
      %v1149 = vpop.f32.mrb[0].mxu0
      %v1150 = vadd.f32 %v952, %v1149
      %v1151 = vpop.f32.mrb[0].mxu0
      %1152 = vmatprep.mubr.f32.mxu0 0.0
      %v1153 = vand.u32 %v459, 4294901760
      %v1154 = vsub.f32 %v459, %v1153
      %1155 = vmatmul.mubr.f32.gmra.mrb[0].mxu0 %v1154
      %v1156 = vpop.f32.mrb[0].mxu0
      %v1157 = vadd.f32 %v958, %v1156
      %v1158 = vpop.f32.mrb[0].mxu0
      %1159 = vmatprep.mubr.f32.mxu0 0.0
      %v1160 = vand.u32 %v462, 4294901760
      %v1161 = vsub.f32 %v462, %v1160
      %1162 = vmatmul.mubr.f32.gmra.mrb[0].mxu0 %v1161
      %v1163 = vpop.f32.mrb[0].mxu0
      %v1164 = vadd.f32 %v964, %v1163
      %v1165 = vpop.f32.mrb[0].mxu0
      %1166 = vmatprep.mubr.f32.mxu0 0.0
      %v1167 = vand.u32 %v465, 4294901760
      %v1168 = vsub.f32 %v465, %v1167
      %1169 = vmatmul.mubr.f32.gmra.mrb[0].mxu0 %v1168
      %v1170 = vpop.f32.mrb[0].mxu0
      %v1171 = vadd.f32 %v970, %v1170
      %v1172 = vpop.f32.mrb[0].mxu0
      %1173 = vmatprep.mubr.f32.mxu0 0.0
      %v1174 = vand.u32 %v468, 4294901760
      %v1175 = vsub.f32 %v468, %v1174
      %1176 = vmatmul.mubr.f32.gmra.mrb[0].mxu0 %v1175
      %v1177 = vpop.f32.mrb[0].mxu0
      %v1178 = vadd.f32 %v976, %v1177
      %v1179 = vpop.f32.mrb[0].mxu0
      %1180 = vmatprep.mubr.f32.mxu0 0.0
      %v1181 = vand.u32 %v471, 4294901760
      %v1182 = vsub.f32 %v471, %v1181
      %1183 = vmatmul.mubr.f32.gmra.mrb[0].mxu0 %v1182
      %v1184 = vpop.f32.mrb[0].mxu0
      %v1185 = vadd.f32 %v982, %v1184
      %v1186 = vpop.f32.mrb[0].mxu0
      %1187 = vmatprep.mubr.f32.mxu0 0.0
      %v1188 = vand.u32 %v474, 4294901760
      %v1189 = vsub.f32 %v474, %v1188
      %1190 = vmatmul.mubr.f32.gmra.mrb[0].mxu0 %v1189
      %v1191 = vpop.f32.mrb[0].mxu0
      %v1192 = vadd.f32 %v988, %v1191
      %v1193 = vpop.f32.mrb[0].mxu0
      %1194 = vmatprep.mubr.f32.mxu0 0.0
      %v1195 = vand.u32 %v477, 4294901760
      %v1196 = vsub.f32 %v477, %v1195
      %1197 = vmatmul.mubr.f32.gmra.mrb[0].mxu0 %v1196
      %v1198 = vpop.f32.mrb[0].mxu0
      %v1199 = vadd.f32 %v994, %v1198
      %v1200 = vpop.f32.mrb[0].mxu0
      %1201 = vmatprep.mubr.f32.mxu0 0.0
      %v1202 = vand.u32 %v480, 4294901760
      %v1203 = vsub.f32 %v480, %v1202
      %1204 = vmatmul.mubr.f32.gmra.mrb[0].mxu0 %v1203
      %v1205 = vpop.f32.mrb[0].mxu0
      %v1206 = vadd.f32 %v1000, %v1205
      %v1207 = vpop.f32.mrb[0].mxu0
      %1208 = vmatprep.mubr.f32.mxu0 0.0
      %v1209 = vand.u32 %v483, 4294901760
      %v1210 = vsub.f32 %v483, %v1209
      %1211 = vmatmul.mubr.f32.gmra.mrb[0].mxu0 %v1210
      %v1212 = vpop.f32.mrb[0].mxu0
      %v1213 = vadd.f32 %v1006, %v1212
      %v1214 = vpop.f32.mrb[0].mxu0
      %1215 = vmatprep.mubr.f32.mxu0 0.0
      %v1216 = vand.u32 %v486, 4294901760
      %v1217 = vsub.f32 %v486, %v1216
      %1218 = vmatmul.mubr.f32.gmra.mrb[0].mxu0 %v1217
      %v1219 = vpop.f32.mrb[0].mxu0
      %v1220 = vadd.f32 %v1012, %v1219
      %v1221 = vpop.f32.mrb[0].mxu0
      %1222 = vmatprep.mubr.f32.mxu0 0.0
      %v1223 = vand.u32 %v489, 4294901760
      %v1224 = vsub.f32 %v489, %v1223
      %1225 = vmatmul.mubr.f32.gmra.mrb[0].mxu0 %v1224
      %v1226 = vpop.f32.mrb[0].mxu0
      %v1227 = vadd.f32 %v1018, %v1226
      %v1228 = vpop.f32.mrb[0].mxu0
      %1229 = vdwg.mxu0
      %1230 = vmatprep.subr.mxu0 0.0
      %v1231 = vand.u32 %v492, 4294901760
      %1232 = vmatpush1.xpose.msra.mxu0 %v1231
      %1233 = vmatprep.subr.mxu0 0.0
      %v1234 = vand.u32 %v495, 4294901760
      %1235 = vmatpush1.xpose.msra.mxu0 %v1234
      %1236 = vmatprep.subr.mxu0 0.0
      %v1237 = vand.u32 %v498, 4294901760
      %1238 = vmatpush1.xpose.msra.mxu0 %v1237
      %1239 = vmatprep.subr.mxu0 0.0
      %v1240 = vand.u32 %v501, 4294901760
      %1241 = vmatpush1.xpose.msra.mxu0 %v1240
      %1242 = vmatprep.subr.mxu0 0.0
      %v1243 = vand.u32 %v504, 4294901760
      %1244 = vmatpush1.xpose.msra.mxu0 %v1243
      %1245 = vmatprep.subr.mxu0 0.0
      %v1246 = vand.u32 %v507, 4294901760
      %1247 = vmatpush1.xpose.msra.mxu0 %v1246
      %1248 = vmatprep.subr.mxu0 0.0
      %v1249 = vand.u32 %v510, 4294901760
      %1250 = vmatpush1.xpose.msra.mxu0 %v1249
      %1251 = vmatprep.subr.mxu0 0.0
      %v1252 = vand.u32 %v513, 4294901760
      %1253 = vmatpush1.xpose.msra.mxu0 %v1252
      %1254 = vmatprep.subr.mxu0 0.0
      %v1255 = vand.u32 %v516, 4294901760
      %1256 = vmatpush1.xpose.msra.mxu0 %v1255
      %1257 = vmatprep.subr.mxu0 0.0
      %v1258 = vand.u32 %v519, 4294901760
      %1259 = vmatpush1.xpose.msra.mxu0 %v1258
      %1260 = vmatprep.subr.mxu0 0.0
      %v1261 = vand.u32 %v522, 4294901760
      %1262 = vmatpush1.xpose.msra.mxu0 %v1261
      %1263 = vmatprep.subr.mxu0 0.0
      %v1264 = vand.u32 %v525, 4294901760
      %1265 = vmatpush1.xpose.msra.mxu0 %v1264
      %1266 = vmatprep.subr.mxu0 0.0
      %v1267 = vand.u32 %v528, 4294901760
      %1268 = vmatpush1.xpose.msra.mxu0 %v1267
      %1269 = vmatprep.subr.mxu0 0.0
      %v1270 = vand.u32 %v531, 4294901760
      %1271 = vmatpush1.xpose.msra.mxu0 %v1270
      %1272 = vmatprep.subr.mxu0 0.0
      %v1273 = vand.u32 %v534, 4294901760
      %1274 = vmatpush1.xpose.msra.mxu0 %v1273
      %1275 = vmatprep.subr.mxu0 0.0
      %v1276 = vand.u32 %v537, 4294901760
      %1277 = vmatpush1.xpose.msra.mxu0 %v1276
      %1278 = vmatprep.subr.mxu0 0.0
      %1279 = vmatpush1.xpose.msra.mxu0 0.0
      %1280 = vmatprep.subr.mxu0 0.0
      %1281 = vmatpush1.xpose.msra.mxu0 0.0
      %1282 = vmatprep.subr.mxu0 0.0
      %1283 = vmatpush1.xpose.msra.mxu0 0.0
      %1284 = vmatprep.subr.mxu0 0.0
      %1285 = vmatpush1.xpose.msra.mxu0 0.0
      %1286 = vmatprep.subr.mxu0 0.0
      %1287 = vmatpush1.xpose.msra.mxu0 0.0
      %1288 = vmatprep.subr.mxu0 0.0
      %1289 = vmatpush1.xpose.msra.mxu0 0.0
      %1290 = vmatprep.subr.mxu0 0.0
      %1291 = vmatpush1.xpose.msra.mxu0 0.0
      %1292 = vmatprep.subr.mxu0 0.0
      %1293 = vmatpush1.xpose.msra.mxu0 0.0
      %1294 = vmatprep.subr.mxu0 0.0
      %1295 = vmatpush1.xpose.msra.mxu0 0.0
      %1296 = vmatprep.subr.mxu0 0.0
      %1297 = vmatpush1.xpose.msra.mxu0 0.0
      %1298 = vmatprep.subr.mxu0 0.0
      %1299 = vmatpush1.xpose.msra.mxu0 0.0
      %1300 = vmatprep.subr.mxu0 0.0
      %1301 = vmatpush1.xpose.msra.mxu0 0.0
      %1302 = vmatprep.subr.mxu0 0.0
      %1303 = vmatpush1.xpose.msra.mxu0 0.0
      %1304 = vmatprep.subr.mxu0 0.0
      %1305 = vmatpush1.xpose.msra.mxu0 0.0
      %1306 = vmatprep.subr.mxu0 0.0
      %1307 = vmatpush1.xpose.msra.mxu0 0.0
      %1308 = vmatprep.subr.mxu0 0.0
      %1309 = vmatpush1.xpose.msra.mxu0 0.0
      %1310 = vmatprep.mubr.f32.mxu0 0.0
      %v1311 = vand.u32 %v444, 4294901760
      %v1312 = vsub.f32 %v444, %v1311
      %v1313 = vand.u32 %v1312, 4294901760
      %1314 = vmatmul.mubr.f32.gmra.mrb[0].mxu0 %v1313
      %v1315 = vpop.f32.mrb[0].mxu0
      %v1316 = vadd.f32 %v1122, %v1315
      %v1317 = vpop.f32.mrb[0].mxu0
      %1318 = vmatprep.mubr.f32.mxu0 0.0
      %v1319 = vand.u32 %v447, 4294901760
      %v1320 = vsub.f32 %v447, %v1319
      %v1321 = vand.u32 %v1320, 4294901760
      %1322 = vmatmul.mubr.f32.gmra.mrb[0].mxu0 %v1321
      %v1323 = vpop.f32.mrb[0].mxu0
      %v1324 = vadd.f32 %v1129, %v1323
      %v1325 = vpop.f32.mrb[0].mxu0
      %1326 = vmatprep.mubr.f32.mxu0 0.0
      %v1327 = vand.u32 %v450, 4294901760
      %v1328 = vsub.f32 %v450, %v1327
      %v1329 = vand.u32 %v1328, 4294901760
      %1330 = vmatmul.mubr.f32.gmra.mrb[0].mxu0 %v1329
      %v1331 = vpop.f32.mrb[0].mxu0
      %v1332 = vadd.f32 %v1136, %v1331
      %v1333 = vpop.f32.mrb[0].mxu0
      %1334 = vmatprep.mubr.f32.mxu0 0.0
      %v1335 = vand.u32 %v453, 4294901760
      %v1336 = vsub.f32 %v453, %v1335
      %v1337 = vand.u32 %v1336, 4294901760
      %1338 = vmatmul.mubr.f32.gmra.mrb[0].mxu0 %v1337
      %v1339 = vpop.f32.mrb[0].mxu0
      %v1340 = vadd.f32 %v1143, %v1339
      %v1341 = vpop.f32.mrb[0].mxu0
      %1342 = vmatprep.mubr.f32.mxu0 0.0
      %v1343 = vand.u32 %v456, 4294901760
      %v1344 = vsub.f32 %v456, %v1343
      %v1345 = vand.u32 %v1344, 4294901760
      %1346 = vmatmul.mubr.f32.gmra.mrb[0].mxu0 %v1345
      %v1347 = vpop.f32.mrb[0].mxu0
      %v1348 = vadd.f32 %v1150, %v1347
      %v1349 = vpop.f32.mrb[0].mxu0
      %1350 = vmatprep.mubr.f32.mxu0 0.0
      %v1351 = vand.u32 %v459, 4294901760
      %v1352 = vsub.f32 %v459, %v1351
      %v1353 = vand.u32 %v1352, 4294901760
      %1354 = vmatmul.mubr.f32.gmra.mrb[0].mxu0 %v1353
      %v1355 = vpop.f32.mrb[0].mxu0
      %v1356 = vadd.f32 %v1157, %v1355
      %v1357 = vpop.f32.mrb[0].mxu0
      %1358 = vmatprep.mubr.f32.mxu0 0.0
      %v1359 = vand.u32 %v462, 4294901760
      %v1360 = vsub.f32 %v462, %v1359
      %v1361 = vand.u32 %v1360, 4294901760
      %1362 = vmatmul.mubr.f32.gmra.mrb[0].mxu0 %v1361
      %v1363 = vpop.f32.mrb[0].mxu0
      %v1364 = vadd.f32 %v1164, %v1363
      %v1365 = vpop.f32.mrb[0].mxu0
      %1366 = vmatprep.mubr.f32.mxu0 0.0
      %v1367 = vand.u32 %v465, 4294901760
      %v1368 = vsub.f32 %v465, %v1367
      %v1369 = vand.u32 %v1368, 4294901760
      %1370 = vmatmul.mubr.f32.gmra.mrb[0].mxu0 %v1369
      %v1371 = vpop.f32.mrb[0].mxu0
      %v1372 = vadd.f32 %v1171, %v1371
      %v1373 = vpop.f32.mrb[0].mxu0
      %1374 = vmatprep.mubr.f32.mxu0 0.0
      %v1375 = vand.u32 %v468, 4294901760
      %v1376 = vsub.f32 %v468, %v1375
      %v1377 = vand.u32 %v1376, 4294901760
      %1378 = vmatmul.mubr.f32.gmra.mrb[0].mxu0 %v1377
      %v1379 = vpop.f32.mrb[0].mxu0
      %v1380 = vadd.f32 %v1178, %v1379
      %v1381 = vpop.f32.mrb[0].mxu0
      %1382 = vmatprep.mubr.f32.mxu0 0.0
      %v1383 = vand.u32 %v471, 4294901760
      %v1384 = vsub.f32 %v471, %v1383
      %v1385 = vand.u32 %v1384, 4294901760
      %1386 = vmatmul.mubr.f32.gmra.mrb[0].mxu0 %v1385
      %v1387 = vpop.f32.mrb[0].mxu0
      %v1388 = vadd.f32 %v1185, %v1387
      %v1389 = vpop.f32.mrb[0].mxu0
      %1390 = vmatprep.mubr.f32.mxu0 0.0
      %v1391 = vand.u32 %v474, 4294901760
      %v1392 = vsub.f32 %v474, %v1391
      %v1393 = vand.u32 %v1392, 4294901760
      %1394 = vmatmul.mubr.f32.gmra.mrb[0].mxu0 %v1393
      %v1395 = vpop.f32.mrb[0].mxu0
      %v1396 = vadd.f32 %v1192, %v1395
      %v1397 = vpop.f32.mrb[0].mxu0
      %1398 = vmatprep.mubr.f32.mxu0 0.0
      %v1399 = vand.u32 %v477, 4294901760
      %v1400 = vsub.f32 %v477, %v1399
      %v1401 = vand.u32 %v1400, 4294901760
      %1402 = vmatmul.mubr.f32.gmra.mrb[0].mxu0 %v1401
      %v1403 = vpop.f32.mrb[0].mxu0
      %v1404 = vadd.f32 %v1199, %v1403
      %v1405 = vpop.f32.mrb[0].mxu0
      %1406 = vmatprep.mubr.f32.mxu0 0.0
      %v1407 = vand.u32 %v480, 4294901760
      %v1408 = vsub.f32 %v480, %v1407
      %v1409 = vand.u32 %v1408, 4294901760
      %1410 = vmatmul.mubr.f32.gmra.mrb[0].mxu0 %v1409
      %v1411 = vpop.f32.mrb[0].mxu0
      %v1412 = vadd.f32 %v1206, %v1411
      %v1413 = vpop.f32.mrb[0].mxu0
      %1414 = vmatprep.mubr.f32.mxu0 0.0
      %v1415 = vand.u32 %v483, 4294901760
      %v1416 = vsub.f32 %v483, %v1415
      %v1417 = vand.u32 %v1416, 4294901760
      %1418 = vmatmul.mubr.f32.gmra.mrb[0].mxu0 %v1417
      %v1419 = vpop.f32.mrb[0].mxu0
      %v1420 = vadd.f32 %v1213, %v1419
      %v1421 = vpop.f32.mrb[0].mxu0
      %1422 = vmatprep.mubr.f32.mxu0 0.0
      %v1423 = vand.u32 %v486, 4294901760
      %v1424 = vsub.f32 %v486, %v1423
      %v1425 = vand.u32 %v1424, 4294901760
      %1426 = vmatmul.mubr.f32.gmra.mrb[0].mxu0 %v1425
      %v1427 = vpop.f32.mrb[0].mxu0
      %v1428 = vadd.f32 %v1220, %v1427
      %v1429 = vpop.f32.mrb[0].mxu0
      %1430 = vmatprep.mubr.f32.mxu0 0.0
      %v1431 = vand.u32 %v489, 4294901760
      %v1432 = vsub.f32 %v489, %v1431
      %v1433 = vand.u32 %v1432, 4294901760
      %1434 = vmatmul.mubr.f32.gmra.mrb[0].mxu0 %v1433
      %v1435 = vpop.f32.mrb[0].mxu0
      %v1436 = vadd.f32 %v1227, %v1435
      %v1437 = vpop.f32.mrb[0].mxu0
      %1438 = vdwg.mxu0
      %1439 = vmatprep.subr.mxu0 0.0
      %v1440 = vand.u32 %v492, 4294901760
      %v1441 = vsub.f32 %v492, %v1440
      %v1442 = vand.u32 %v1441, 4294901760
      %1443 = vmatpush1.xpose.msra.mxu0 %v1442
      %1444 = vmatprep.subr.mxu0 0.0
      %v1445 = vand.u32 %v495, 4294901760
      %v1446 = vsub.f32 %v495, %v1445
      %v1447 = vand.u32 %v1446, 4294901760
      %1448 = vmatpush1.xpose.msra.mxu0 %v1447
      %1449 = vmatprep.subr.mxu0 0.0
      %v1450 = vand.u32 %v498, 4294901760
      %v1451 = vsub.f32 %v498, %v1450
      %v1452 = vand.u32 %v1451, 4294901760
      %1453 = vmatpush1.xpose.msra.mxu0 %v1452
      %1454 = vmatprep.subr.mxu0 0.0
      %v1455 = vand.u32 %v501, 4294901760
      %v1456 = vsub.f32 %v501, %v1455
      %v1457 = vand.u32 %v1456, 4294901760
      %1458 = vmatpush1.xpose.msra.mxu0 %v1457
      %1459 = vmatprep.subr.mxu0 0.0
      %v1460 = vand.u32 %v504, 4294901760
      %v1461 = vsub.f32 %v504, %v1460
      %v1462 = vand.u32 %v1461, 4294901760
      %1463 = vmatpush1.xpose.msra.mxu0 %v1462
      %1464 = vmatprep.subr.mxu0 0.0
      %v1465 = vand.u32 %v507, 4294901760
      %v1466 = vsub.f32 %v507, %v1465
      %v1467 = vand.u32 %v1466, 4294901760
      %1468 = vmatpush1.xpose.msra.mxu0 %v1467
      %1469 = vmatprep.subr.mxu0 0.0
      %v1470 = vand.u32 %v510, 4294901760
      %v1471 = vsub.f32 %v510, %v1470
      %v1472 = vand.u32 %v1471, 4294901760
      %1473 = vmatpush1.xpose.msra.mxu0 %v1472
      %1474 = vmatprep.subr.mxu0 0.0
      %v1475 = vand.u32 %v513, 4294901760
      %v1476 = vsub.f32 %v513, %v1475
      %v1477 = vand.u32 %v1476, 4294901760
      %1478 = vmatpush1.xpose.msra.mxu0 %v1477
      %1479 = vmatprep.subr.mxu0 0.0
      %v1480 = vand.u32 %v516, 4294901760
      %v1481 = vsub.f32 %v516, %v1480
      %v1482 = vand.u32 %v1481, 4294901760
      %1483 = vmatpush1.xpose.msra.mxu0 %v1482
      %1484 = vmatprep.subr.mxu0 0.0
      %v1485 = vand.u32 %v519, 4294901760
      %v1486 = vsub.f32 %v519, %v1485
      %v1487 = vand.u32 %v1486, 4294901760
      %1488 = vmatpush1.xpose.msra.mxu0 %v1487
      %1489 = vmatprep.subr.mxu0 0.0
      %v1490 = vand.u32 %v522, 4294901760
      %v1491 = vsub.f32 %v522, %v1490
      %v1492 = vand.u32 %v1491, 4294901760
      %1493 = vmatpush1.xpose.msra.mxu0 %v1492
      %1494 = vmatprep.subr.mxu0 0.0
      %v1495 = vand.u32 %v525, 4294901760
      %v1496 = vsub.f32 %v525, %v1495
      %v1497 = vand.u32 %v1496, 4294901760
      %1498 = vmatpush1.xpose.msra.mxu0 %v1497
      %1499 = vmatprep.subr.mxu0 0.0
      %v1500 = vand.u32 %v528, 4294901760
      %v1501 = vsub.f32 %v528, %v1500
      %v1502 = vand.u32 %v1501, 4294901760
      %1503 = vmatpush1.xpose.msra.mxu0 %v1502
      %1504 = vmatprep.subr.mxu0 0.0
      %v1505 = vand.u32 %v531, 4294901760
      %v1506 = vsub.f32 %v531, %v1505
      %v1507 = vand.u32 %v1506, 4294901760
      %1508 = vmatpush1.xpose.msra.mxu0 %v1507
      %1509 = vmatprep.subr.mxu0 0.0
      %v1510 = vand.u32 %v534, 4294901760
      %v1511 = vsub.f32 %v534, %v1510
      %v1512 = vand.u32 %v1511, 4294901760
      %1513 = vmatpush1.xpose.msra.mxu0 %v1512
      %1514 = vmatprep.subr.mxu0 0.0
      %v1515 = vand.u32 %v537, 4294901760
      %v1516 = vsub.f32 %v537, %v1515
      %v1517 = vand.u32 %v1516, 4294901760
      %1518 = vmatpush1.xpose.msra.mxu0 %v1517
      %1519 = vmatprep.subr.mxu0 0.0
      %1520 = vmatpush1.xpose.msra.mxu0 0.0
      %1521 = vmatprep.subr.mxu0 0.0
      %1522 = vmatpush1.xpose.msra.mxu0 0.0
      %1523 = vmatprep.subr.mxu0 0.0
      %1524 = vmatpush1.xpose.msra.mxu0 0.0
      %1525 = vmatprep.subr.mxu0 0.0
      %1526 = vmatpush1.xpose.msra.mxu0 0.0
      %1527 = vmatprep.subr.mxu0 0.0
      %1528 = vmatpush1.xpose.msra.mxu0 0.0
      %1529 = vmatprep.subr.mxu0 0.0
      %1530 = vmatpush1.xpose.msra.mxu0 0.0
      %1531 = vmatprep.subr.mxu0 0.0
      %1532 = vmatpush1.xpose.msra.mxu0 0.0
      %1533 = vmatprep.subr.mxu0 0.0
      %1534 = vmatpush1.xpose.msra.mxu0 0.0
      %1535 = vmatprep.subr.mxu0 0.0
      %1536 = vmatpush1.xpose.msra.mxu0 0.0
      %1537 = vmatprep.subr.mxu0 0.0
      %1538 = vmatpush1.xpose.msra.mxu0 0.0
      %1539 = vmatprep.subr.mxu0 0.0
      %1540 = vmatpush1.xpose.msra.mxu0 0.0
      %1541 = vmatprep.subr.mxu0 0.0
      %1542 = vmatpush1.xpose.msra.mxu0 0.0
      %1543 = vmatprep.subr.mxu0 0.0
      %1544 = vmatpush1.xpose.msra.mxu0 0.0
      %1545 = vmatprep.subr.mxu0 0.0
      %1546 = vmatpush1.xpose.msra.mxu0 0.0
      %1547 = vmatprep.subr.mxu0 0.0
      %1548 = vmatpush1.xpose.msra.mxu0 0.0
      %1549 = vmatprep.subr.mxu0 0.0
      %1550 = vmatpush1.xpose.msra.mxu0 0.0
      %1551 = vmatprep.mubr.f32.mxu0 0.0
      %v1552 = vand.u32 %v444, 4294901760
      %1553 = vmatmul.mubr.f32.gmra.mrb[0].mxu0 %v1552
      %v1554 = vpop.f32.mrb[0].mxu0
      %v1555 = vadd.f32 %v1316, %v1554
      %v1556 = vpop.f32.mrb[0].mxu0
      %1557 = vmatprep.mubr.f32.mxu0 0.0
      %v1558 = vand.u32 %v447, 4294901760
      %1559 = vmatmul.mubr.f32.gmra.mrb[0].mxu0 %v1558
      %v1560 = vpop.f32.mrb[0].mxu0
      %v1561 = vadd.f32 %v1324, %v1560
      %v1562 = vpop.f32.mrb[0].mxu0
      %1563 = vmatprep.mubr.f32.mxu0 0.0
      %v1564 = vand.u32 %v450, 4294901760
      %1565 = vmatmul.mubr.f32.gmra.mrb[0].mxu0 %v1564
      %v1566 = vpop.f32.mrb[0].mxu0
      %v1567 = vadd.f32 %v1332, %v1566
      %v1568 = vpop.f32.mrb[0].mxu0
      %1569 = vmatprep.mubr.f32.mxu0 0.0
      %v1570 = vand.u32 %v453, 4294901760
      %1571 = vmatmul.mubr.f32.gmra.mrb[0].mxu0 %v1570
      %v1572 = vpop.f32.mrb[0].mxu0
      %v1573 = vadd.f32 %v1340, %v1572
      %v1574 = vpop.f32.mrb[0].mxu0
      %1575 = vmatprep.mubr.f32.mxu0 0.0
      %v1576 = vand.u32 %v456, 4294901760
      %1577 = vmatmul.mubr.f32.gmra.mrb[0].mxu0 %v1576
      %v1578 = vpop.f32.mrb[0].mxu0
      %v1579 = vadd.f32 %v1348, %v1578
      %v1580 = vpop.f32.mrb[0].mxu0
      %1581 = vmatprep.mubr.f32.mxu0 0.0
      %v1582 = vand.u32 %v459, 4294901760
      %1583 = vmatmul.mubr.f32.gmra.mrb[0].mxu0 %v1582
      %v1584 = vpop.f32.mrb[0].mxu0
      %v1585 = vadd.f32 %v1356, %v1584
      %v1586 = vpop.f32.mrb[0].mxu0
      %1587 = vmatprep.mubr.f32.mxu0 0.0
      %v1588 = vand.u32 %v462, 4294901760
      %1589 = vmatmul.mubr.f32.gmra.mrb[0].mxu0 %v1588
      %v1590 = vpop.f32.mrb[0].mxu0
      %v1591 = vadd.f32 %v1364, %v1590
      %v1592 = vpop.f32.mrb[0].mxu0
      %1593 = vmatprep.mubr.f32.mxu0 0.0
      %v1594 = vand.u32 %v465, 4294901760
      %1595 = vmatmul.mubr.f32.gmra.mrb[0].mxu0 %v1594
      %v1596 = vpop.f32.mrb[0].mxu0
      %v1597 = vadd.f32 %v1372, %v1596
      %v1598 = vpop.f32.mrb[0].mxu0
      %1599 = vmatprep.mubr.f32.mxu0 0.0
      %v1600 = vand.u32 %v468, 4294901760
      %1601 = vmatmul.mubr.f32.gmra.mrb[0].mxu0 %v1600
      %v1602 = vpop.f32.mrb[0].mxu0
      %v1603 = vadd.f32 %v1380, %v1602
      %v1604 = vpop.f32.mrb[0].mxu0
      %1605 = vmatprep.mubr.f32.mxu0 0.0
      %v1606 = vand.u32 %v471, 4294901760
      %1607 = vmatmul.mubr.f32.gmra.mrb[0].mxu0 %v1606
      %v1608 = vpop.f32.mrb[0].mxu0
      %v1609 = vadd.f32 %v1388, %v1608
      %v1610 = vpop.f32.mrb[0].mxu0
      %1611 = vmatprep.mubr.f32.mxu0 0.0
      %v1612 = vand.u32 %v474, 4294901760
      %1613 = vmatmul.mubr.f32.gmra.mrb[0].mxu0 %v1612
      %v1614 = vpop.f32.mrb[0].mxu0
      %v1615 = vadd.f32 %v1396, %v1614
      %v1616 = vpop.f32.mrb[0].mxu0
      %1617 = vmatprep.mubr.f32.mxu0 0.0
      %v1618 = vand.u32 %v477, 4294901760
      %1619 = vmatmul.mubr.f32.gmra.mrb[0].mxu0 %v1618
      %v1620 = vpop.f32.mrb[0].mxu0
      %v1621 = vadd.f32 %v1404, %v1620
      %v1622 = vpop.f32.mrb[0].mxu0
      %1623 = vmatprep.mubr.f32.mxu0 0.0
      %v1624 = vand.u32 %v480, 4294901760
      %1625 = vmatmul.mubr.f32.gmra.mrb[0].mxu0 %v1624
      %v1626 = vpop.f32.mrb[0].mxu0
      %v1627 = vadd.f32 %v1412, %v1626
      %v1628 = vpop.f32.mrb[0].mxu0
      %1629 = vmatprep.mubr.f32.mxu0 0.0
      %v1630 = vand.u32 %v483, 4294901760
      %1631 = vmatmul.mubr.f32.gmra.mrb[0].mxu0 %v1630
      %v1632 = vpop.f32.mrb[0].mxu0
      %v1633 = vadd.f32 %v1420, %v1632
      %v1634 = vpop.f32.mrb[0].mxu0
      %1635 = vmatprep.mubr.f32.mxu0 0.0
      %v1636 = vand.u32 %v486, 4294901760
      %1637 = vmatmul.mubr.f32.gmra.mrb[0].mxu0 %v1636
      %v1638 = vpop.f32.mrb[0].mxu0
      %v1639 = vadd.f32 %v1428, %v1638
      %v1640 = vpop.f32.mrb[0].mxu0
      %1641 = vmatprep.mubr.f32.mxu0 0.0
      %v1642 = vand.u32 %v489, 4294901760
      %1643 = vmatmul.mubr.f32.gmra.mrb[0].mxu0 %v1642
      %v1644 = vpop.f32.mrb[0].mxu0
      %v1645 = vadd.f32 %v1436, %v1644
      %v1646 = vpop.f32.mrb[0].mxu0
      %1647 = vdwg.mxu0
      %1648 = vmatprep.subr.mxu0 0.0
      %v1649 = vand.u32 %v492, 4294901760
      %1650 = vmatpush1.xpose.msra.mxu0 %v1649
      %1651 = vmatprep.subr.mxu0 0.0
      %v1652 = vand.u32 %v495, 4294901760
      %1653 = vmatpush1.xpose.msra.mxu0 %v1652
      %1654 = vmatprep.subr.mxu0 0.0
      %v1655 = vand.u32 %v498, 4294901760
      %1656 = vmatpush1.xpose.msra.mxu0 %v1655
      %1657 = vmatprep.subr.mxu0 0.0
      %v1658 = vand.u32 %v501, 4294901760
      %1659 = vmatpush1.xpose.msra.mxu0 %v1658
      %1660 = vmatprep.subr.mxu0 0.0
      %v1661 = vand.u32 %v504, 4294901760
      %1662 = vmatpush1.xpose.msra.mxu0 %v1661
      %1663 = vmatprep.subr.mxu0 0.0
      %v1664 = vand.u32 %v507, 4294901760
      %1665 = vmatpush1.xpose.msra.mxu0 %v1664
      %1666 = vmatprep.subr.mxu0 0.0
      %v1667 = vand.u32 %v510, 4294901760
      %1668 = vmatpush1.xpose.msra.mxu0 %v1667
      %1669 = vmatprep.subr.mxu0 0.0
      %v1670 = vand.u32 %v513, 4294901760
      %1671 = vmatpush1.xpose.msra.mxu0 %v1670
      %1672 = vmatprep.subr.mxu0 0.0
      %v1673 = vand.u32 %v516, 4294901760
      %1674 = vmatpush1.xpose.msra.mxu0 %v1673
      %1675 = vmatprep.subr.mxu0 0.0
      %v1676 = vand.u32 %v519, 4294901760
      %1677 = vmatpush1.xpose.msra.mxu0 %v1676
      %1678 = vmatprep.subr.mxu0 0.0
      %v1679 = vand.u32 %v522, 4294901760
      %1680 = vmatpush1.xpose.msra.mxu0 %v1679
      %1681 = vmatprep.subr.mxu0 0.0
      %v1682 = vand.u32 %v525, 4294901760
      %1683 = vmatpush1.xpose.msra.mxu0 %v1682
      %1684 = vmatprep.subr.mxu0 0.0
      %v1685 = vand.u32 %v528, 4294901760
      %1686 = vmatpush1.xpose.msra.mxu0 %v1685
      %1687 = vmatprep.subr.mxu0 0.0
      %v1688 = vand.u32 %v531, 4294901760
      %1689 = vmatpush1.xpose.msra.mxu0 %v1688
      %1690 = vmatprep.subr.mxu0 0.0
      %v1691 = vand.u32 %v534, 4294901760
      %1692 = vmatpush1.xpose.msra.mxu0 %v1691
      %1693 = vmatprep.subr.mxu0 0.0
      %v1694 = vand.u32 %v537, 4294901760
      %1695 = vmatpush1.xpose.msra.mxu0 %v1694
      %1696 = vmatprep.subr.mxu0 0.0
      %1697 = vmatpush1.xpose.msra.mxu0 0.0
      %1698 = vmatprep.subr.mxu0 0.0
      %1699 = vmatpush1.xpose.msra.mxu0 0.0
      %1700 = vmatprep.subr.mxu0 0.0
      %1701 = vmatpush1.xpose.msra.mxu0 0.0
      %1702 = vmatprep.subr.mxu0 0.0
      %1703 = vmatpush1.xpose.msra.mxu0 0.0
      %1704 = vmatprep.subr.mxu0 0.0
      %1705 = vmatpush1.xpose.msra.mxu0 0.0
      %1706 = vmatprep.subr.mxu0 0.0
      %1707 = vmatpush1.xpose.msra.mxu0 0.0
      %1708 = vmatprep.subr.mxu0 0.0
      %1709 = vmatpush1.xpose.msra.mxu0 0.0
      %1710 = vmatprep.subr.mxu0 0.0
      %1711 = vmatpush1.xpose.msra.mxu0 0.0
      %1712 = vmatprep.subr.mxu0 0.0
      %1713 = vmatpush1.xpose.msra.mxu0 0.0
      %1714 = vmatprep.subr.mxu0 0.0
      %1715 = vmatpush1.xpose.msra.mxu0 0.0
      %1716 = vmatprep.subr.mxu0 0.0
      %1717 = vmatpush1.xpose.msra.mxu0 0.0
      %1718 = vmatprep.subr.mxu0 0.0
      %1719 = vmatpush1.xpose.msra.mxu0 0.0
      %1720 = vmatprep.subr.mxu0 0.0
      %1721 = vmatpush1.xpose.msra.mxu0 0.0
      %1722 = vmatprep.subr.mxu0 0.0
      %1723 = vmatpush1.xpose.msra.mxu0 0.0
      %1724 = vmatprep.subr.mxu0 0.0
      %1725 = vmatpush1.xpose.msra.mxu0 0.0
      %1726 = vmatprep.subr.mxu0 0.0
      %1727 = vmatpush1.xpose.msra.mxu0 0.0
      %1728 = vmatprep.mubr.f32.mxu0 0.0
      %v1729 = vand.u32 %v444, 4294901760
      %1730 = vmatmul.mubr.f32.gmra.mrb[0].mxu0 %v1729
      %v1731 = vpop.f32.mrb[0].mxu0
      %v1732 = vadd.f32 %v1555, %v1731
      %v1733 = vpop.f32.mrb[0].mxu0
      %1734 = vmatprep.mubr.f32.mxu0 0.0
      %v1735 = vand.u32 %v447, 4294901760
      %1736 = vmatmul.mubr.f32.gmra.mrb[0].mxu0 %v1735
      %v1737 = vpop.f32.mrb[0].mxu0
      %v1738 = vadd.f32 %v1561, %v1737
      %v1739 = vpop.f32.mrb[0].mxu0
      %1740 = vmatprep.mubr.f32.mxu0 0.0
      %v1741 = vand.u32 %v450, 4294901760
      %1742 = vmatmul.mubr.f32.gmra.mrb[0].mxu0 %v1741
      %v1743 = vpop.f32.mrb[0].mxu0
      %v1744 = vadd.f32 %v1567, %v1743
      %v1745 = vpop.f32.mrb[0].mxu0
      %1746 = vmatprep.mubr.f32.mxu0 0.0
      %v1747 = vand.u32 %v453, 4294901760
      %1748 = vmatmul.mubr.f32.gmra.mrb[0].mxu0 %v1747
      %v1749 = vpop.f32.mrb[0].mxu0
      %v1750 = vadd.f32 %v1573, %v1749
      %v1751 = vpop.f32.mrb[0].mxu0
      %1752 = vmatprep.mubr.f32.mxu0 0.0
      %v1753 = vand.u32 %v456, 4294901760
      %1754 = vmatmul.mubr.f32.gmra.mrb[0].mxu0 %v1753
      %v1755 = vpop.f32.mrb[0].mxu0
      %v1756 = vadd.f32 %v1579, %v1755
      %v1757 = vpop.f32.mrb[0].mxu0
      %1758 = vmatprep.mubr.f32.mxu0 0.0
      %v1759 = vand.u32 %v459, 4294901760
      %1760 = vmatmul.mubr.f32.gmra.mrb[0].mxu0 %v1759
      %v1761 = vpop.f32.mrb[0].mxu0
      %v1762 = vadd.f32 %v1585, %v1761
      %v1763 = vpop.f32.mrb[0].mxu0
      %1764 = vmatprep.mubr.f32.mxu0 0.0
      %v1765 = vand.u32 %v462, 4294901760
      %1766 = vmatmul.mubr.f32.gmra.mrb[0].mxu0 %v1765
      %v1767 = vpop.f32.mrb[0].mxu0
      %v1768 = vadd.f32 %v1591, %v1767
      %v1769 = vpop.f32.mrb[0].mxu0
      %1770 = vmatprep.mubr.f32.mxu0 0.0
      %v1771 = vand.u32 %v465, 4294901760
      %1772 = vmatmul.mubr.f32.gmra.mrb[0].mxu0 %v1771
      %v1773 = vpop.f32.mrb[0].mxu0
      %v1774 = vadd.f32 %v1597, %v1773
      %v1775 = vpop.f32.mrb[0].mxu0
      %1776 = vmatprep.mubr.f32.mxu0 0.0
      %v1777 = vand.u32 %v468, 4294901760
      %1778 = vmatmul.mubr.f32.gmra.mrb[0].mxu0 %v1777
      %v1779 = vpop.f32.mrb[0].mxu0
      %v1780 = vadd.f32 %v1603, %v1779
      %v1781 = vpop.f32.mrb[0].mxu0
      %1782 = vmatprep.mubr.f32.mxu0 0.0
      %v1783 = vand.u32 %v471, 4294901760
      %1784 = vmatmul.mubr.f32.gmra.mrb[0].mxu0 %v1783
      %v1785 = vpop.f32.mrb[0].mxu0
      %v1786 = vadd.f32 %v1609, %v1785
      %v1787 = vpop.f32.mrb[0].mxu0
      %1788 = vmatprep.mubr.f32.mxu0 0.0
      %v1789 = vand.u32 %v474, 4294901760
      %1790 = vmatmul.mubr.f32.gmra.mrb[0].mxu0 %v1789
      %v1791 = vpop.f32.mrb[0].mxu0
      %v1792 = vadd.f32 %v1615, %v1791
      %v1793 = vpop.f32.mrb[0].mxu0
      %1794 = vmatprep.mubr.f32.mxu0 0.0
      %v1795 = vand.u32 %v477, 4294901760
      %1796 = vmatmul.mubr.f32.gmra.mrb[0].mxu0 %v1795
      %v1797 = vpop.f32.mrb[0].mxu0
      %v1798 = vadd.f32 %v1621, %v1797
      %v1799 = vpop.f32.mrb[0].mxu0
      %1800 = vmatprep.mubr.f32.mxu0 0.0
      %v1801 = vand.u32 %v480, 4294901760
      %1802 = vmatmul.mubr.f32.gmra.mrb[0].mxu0 %v1801
      %v1803 = vpop.f32.mrb[0].mxu0
      %v1804 = vadd.f32 %v1627, %v1803
      %v1805 = vpop.f32.mrb[0].mxu0
      %1806 = vmatprep.mubr.f32.mxu0 0.0
      %v1807 = vand.u32 %v483, 4294901760
      %1808 = vmatmul.mubr.f32.gmra.mrb[0].mxu0 %v1807
      %v1809 = vpop.f32.mrb[0].mxu0
      %v1810 = vadd.f32 %v1633, %v1809
      %v1811 = vpop.f32.mrb[0].mxu0
      %1812 = vmatprep.mubr.f32.mxu0 0.0
      %v1813 = vand.u32 %v486, 4294901760
      %1814 = vmatmul.mubr.f32.gmra.mrb[0].mxu0 %v1813
      %v1815 = vpop.f32.mrb[0].mxu0
      %v1816 = vadd.f32 %v1639, %v1815
      %v1817 = vpop.f32.mrb[0].mxu0
      %1818 = vmatprep.mubr.f32.mxu0 0.0
      %v1819 = vand.u32 %v489, 4294901760
      %1820 = vmatmul.mubr.f32.gmra.mrb[0].mxu0 %v1819
      %v1821 = vpop.f32.mrb[0].mxu0
      %v1822 = vadd.f32 %v1645, %v1821
      %v1823 = vpop.f32.mrb[0].mxu0
      %1824 = vdwg.mxu0
      %s1825 = smul.u32 %s23, 128
      %v1826 = vlaneseq
      %v1827 = vand.u32 %v1826, 127
      %v1828 = vstv %s1825
      %v1829 = vadd.s32 %v1828, %v1827
      %vm1830 = vcmp.lt.s32.totalorder %v1829, 8
      %v1831 = vsel %vm1830, %v1732, -inf
      %v1832 = vsel %vm1830, %v1738, -inf
      %v1833 = vsel %vm1830, %v1744, -inf
      %v1834 = vsel %vm1830, %v1750, -inf
      %v1835 = vsel %vm1830, %v1756, -inf
      %v1836 = vsel %vm1830, %v1762, -inf
      %v1837 = vsel %vm1830, %v1768, -inf
      %v1838 = vsel %vm1830, %v1774, -inf
      %v1839 = vsel %vm1830, %v1780, -inf
      %v1840 = vsel %vm1830, %v1786, -inf
      %v1841 = vsel %vm1830, %v1792, -inf
      %v1842 = vsel %vm1830, %v1798, -inf
      %v1843 = vsel %vm1830, %v1804, -inf
      %v1844 = vsel %vm1830, %v1810, -inf
      %v1845 = vsel %vm1830, %v1816, -inf
      %v1846 = vsel %vm1830, %v1822, -inf
      %v1847 = vld [vmem:[#allocation2] sm:$0xff]
      %v1848 = vld [vmem:[#allocation2 + $0x8] sm:$0xff]
      %v1849 = vld [vmem:[#allocation2 + $0x10] sm:$0xff]
      %v1850 = vld [vmem:[#allocation2 + $0x18] sm:$0xff]
      %v1851 = vld [vmem:[#allocation2 + $0x20] sm:$0xff]
      %v1852 = vld [vmem:[#allocation2 + $0x28] sm:$0xff]
      %v1853 = vld [vmem:[#allocation2 + $0x30] sm:$0xff]
      %v1854 = vld [vmem:[#allocation2 + $0x38] sm:$0xff]
      %v1855 = vld [vmem:[#allocation2 + $0x40] sm:$0xff]
      %v1856 = vld [vmem:[#allocation2 + $0x48] sm:$0xff]
      %v1857 = vld [vmem:[#allocation2 + $0x50] sm:$0xff]
      %v1858 = vld [vmem:[#allocation2 + $0x58] sm:$0xff]
      %v1859 = vld [vmem:[#allocation2 + $0x60] sm:$0xff]
      %v1860 = vld [vmem:[#allocation2 + $0x68] sm:$0xff]
      %v1861 = vld [vmem:[#allocation2 + $0x70] sm:$0xff]
      %v1862 = vld [vmem:[#allocation2 + $0x78] sm:$0xff]
      %1863 = vmax.xlane.f32.xlu0 %v1831
      %v1864 = vpop.xlane.xlu0 %1863
      %1865 = vmax.xlane.f32.xlu0 %v1832
      %v1866 = vpop.xlane.xlu0 %1865
      %1867 = vmax.xlane.f32.xlu0 %v1833
      %v1868 = vpop.xlane.xlu0 %1867
      %1869 = vmax.xlane.f32.xlu0 %v1834
      %v1870 = vpop.xlane.xlu0 %1869
      %1871 = vmax.xlane.f32.xlu0 %v1835
      %v1872 = vpop.xlane.xlu0 %1871
      %1873 = vmax.xlane.f32.xlu0 %v1836
      %v1874 = vpop.xlane.xlu0 %1873
      %1875 = vmax.xlane.f32.xlu0 %v1837
      %v1876 = vpop.xlane.xlu0 %1875
      %1877 = vmax.xlane.f32.xlu0 %v1838
      %v1878 = vpop.xlane.xlu0 %1877
      %1879 = vmax.xlane.f32.xlu0 %v1839
      %v1880 = vpop.xlane.xlu0 %1879
      %1881 = vmax.xlane.f32.xlu0 %v1840
      %v1882 = vpop.xlane.xlu0 %1881
      %1883 = vmax.xlane.f32.xlu0 %v1841
      %v1884 = vpop.xlane.xlu0 %1883
      %1885 = vmax.xlane.f32.xlu0 %v1842
      %v1886 = vpop.xlane.xlu0 %1885
      %1887 = vmax.xlane.f32.xlu0 %v1843
      %v1888 = vpop.xlane.xlu0 %1887
      %1889 = vmax.xlane.f32.xlu0 %v1844
      %v1890 = vpop.xlane.xlu0 %1889
      %1891 = vmax.xlane.f32.xlu0 %v1845
      %v1892 = vpop.xlane.xlu0 %1891
      %1893 = vmax.xlane.f32.xlu0 %v1846
      %v1894 = vpop.xlane.xlu0 %1893
      %v1895 = vmax.f32 %v1847, %v1864
      %v1896 = vmax.f32 %v1848, %v1866
      %v1897 = vmax.f32 %v1849, %v1868
      %v1898 = vmax.f32 %v1850, %v1870
      %v1899 = vmax.f32 %v1851, %v1872
      %v1900 = vmax.f32 %v1852, %v1874
      %v1901 = vmax.f32 %v1853, %v1876
      %v1902 = vmax.f32 %v1854, %v1878
      %v1903 = vmax.f32 %v1855, %v1880
      %v1904 = vmax.f32 %v1856, %v1882
      %v1905 = vmax.f32 %v1857, %v1884
      %v1906 = vmax.f32 %v1858, %v1886
      %v1907 = vmax.f32 %v1859, %v1888
      %v1908 = vmax.f32 %v1860, %v1890
      %v1909 = vmax.f32 %v1861, %v1892
      %v1910 = vmax.f32 %v1862, %v1894
      %v1911 = vsub.f32 %v1847, %v1895
      %v1912 = vsub.f32 %v1848, %v1896
      %v1913 = vsub.f32 %v1849, %v1897
      %v1914 = vsub.f32 %v1850, %v1898
      %v1915 = vsub.f32 %v1851, %v1899
      %v1916 = vsub.f32 %v1852, %v1900
      %v1917 = vsub.f32 %v1853, %v1901
      %v1918 = vsub.f32 %v1854, %v1902
      %v1919 = vsub.f32 %v1855, %v1903
      %v1920 = vsub.f32 %v1856, %v1904
      %v1921 = vsub.f32 %v1857, %v1905
      %v1922 = vsub.f32 %v1858, %v1906
      %v1923 = vsub.f32 %v1859, %v1907
      %v1924 = vsub.f32 %v1860, %v1908
      %v1925 = vsub.f32 %v1861, %v1909
      %v1926 = vsub.f32 %v1862, %v1910
      %v1927 = vmul.f32 %v1911, 1.442695
      %v1928 = vpow.pop %v1927
      %v1929 = vmul.f32 %v1912, 1.442695
      %v1930 = vpow.pop %v1929
      %v1931 = vmul.f32 %v1913, 1.442695
      %v1932 = vpow.pop %v1931
      %v1933 = vmul.f32 %v1914, 1.442695
      %v1934 = vpow.pop %v1933
      %v1935 = vmul.f32 %v1915, 1.442695
      %v1936 = vpow.pop %v1935
      %v1937 = vmul.f32 %v1916, 1.442695
      %v1938 = vpow.pop %v1937
      %v1939 = vmul.f32 %v1917, 1.442695
      %v1940 = vpow.pop %v1939
      %v1941 = vmul.f32 %v1918, 1.442695
      %v1942 = vpow.pop %v1941
      %v1943 = vmul.f32 %v1919, 1.442695
      %v1944 = vpow.pop %v1943
      %v1945 = vmul.f32 %v1920, 1.442695
      %v1946 = vpow.pop %v1945
      %v1947 = vmul.f32 %v1921, 1.442695
      %v1948 = vpow.pop %v1947
      %v1949 = vmul.f32 %v1922, 1.442695
      %v1950 = vpow.pop %v1949
      %v1951 = vmul.f32 %v1923, 1.442695
      %v1952 = vpow.pop %v1951
      %v1953 = vmul.f32 %v1924, 1.442695
      %v1954 = vpow.pop %v1953
      %v1955 = vmul.f32 %v1925, 1.442695
      %v1956 = vpow.pop %v1955
      %v1957 = vmul.f32 %v1926, 1.442695
      %v1958 = vpow.pop %v1957
      %1960 = vset.pattern.permute.xlu0 0
      %1961 = vperm.xlu0 %1960, %v1895
      %v1962 = vpop.permute.xlu0 %1961
      %1965 = vset.pattern.permute.xlu0 0
      %1966 = vperm.xlu0 %1965, %v1896
      %v1967 = vpop.permute.xlu0 %1966
      %1970 = vset.pattern.permute.xlu0 0
      %1971 = vperm.xlu0 %1970, %v1897
      %v1972 = vpop.permute.xlu0 %1971
      %1975 = vset.pattern.permute.xlu0 0
      %1976 = vperm.xlu0 %1975, %v1898
      %v1977 = vpop.permute.xlu0 %1976
      %1980 = vset.pattern.permute.xlu0 0
      %1981 = vperm.xlu0 %1980, %v1899
      %v1982 = vpop.permute.xlu0 %1981
      %1985 = vset.pattern.permute.xlu0 0
      %1986 = vperm.xlu0 %1985, %v1900
      %v1987 = vpop.permute.xlu0 %1986
      %1990 = vset.pattern.permute.xlu0 0
      %1991 = vperm.xlu0 %1990, %v1901
      %v1992 = vpop.permute.xlu0 %1991
      %1995 = vset.pattern.permute.xlu0 0
      %1996 = vperm.xlu0 %1995, %v1902
      %v1997 = vpop.permute.xlu0 %1996
      %2000 = vset.pattern.permute.xlu0 0
      %2001 = vperm.xlu0 %2000, %v1903
      %v2002 = vpop.permute.xlu0 %2001
      %2005 = vset.pattern.permute.xlu0 0
      %2006 = vperm.xlu0 %2005, %v1904
      %v2007 = vpop.permute.xlu0 %2006
      %2010 = vset.pattern.permute.xlu0 0
      %2011 = vperm.xlu0 %2010, %v1905
      %v2012 = vpop.permute.xlu0 %2011
      %2015 = vset.pattern.permute.xlu0 0
      %2016 = vperm.xlu0 %2015, %v1906
      %v2017 = vpop.permute.xlu0 %2016
      %2020 = vset.pattern.permute.xlu0 0
      %2021 = vperm.xlu0 %2020, %v1907
      %v2022 = vpop.permute.xlu0 %2021
      %2025 = vset.pattern.permute.xlu0 0
      %2026 = vperm.xlu0 %2025, %v1908
      %v2027 = vpop.permute.xlu0 %2026
      %2030 = vset.pattern.permute.xlu0 0
      %2031 = vperm.xlu0 %2030, %v1909
      %v2032 = vpop.permute.xlu0 %2031
      %2035 = vset.pattern.permute.xlu0 0
      %2036 = vperm.xlu0 %2035, %v1910
      %v2037 = vpop.permute.xlu0 %2036
      %v2039 = vsub.f32 %v1831, %v1962
      %v2040 = vsub.f32 %v1832, %v1967
      %v2041 = vsub.f32 %v1833, %v1972
      %v2042 = vsub.f32 %v1834, %v1977
      %v2043 = vsub.f32 %v1835, %v1982
      %v2044 = vsub.f32 %v1836, %v1987
      %v2045 = vsub.f32 %v1837, %v1992
      %v2046 = vsub.f32 %v1838, %v1997
      %v2047 = vsub.f32 %v1839, %v2002
      %v2048 = vsub.f32 %v1840, %v2007
      %v2049 = vsub.f32 %v1841, %v2012
      %v2050 = vsub.f32 %v1842, %v2017
      %v2051 = vsub.f32 %v1843, %v2022
      %v2052 = vsub.f32 %v1844, %v2027
      %v2053 = vsub.f32 %v1845, %v2032
      %v2054 = vsub.f32 %v1846, %v2037
      %v2055 = vmul.f32 %v2039, 1.442695
      %v2056 = vpow.pop %v2055
      %v2057 = vmul.f32 %v2040, 1.442695
      %v2058 = vpow.pop %v2057
      %v2059 = vmul.f32 %v2041, 1.442695
      %v2060 = vpow.pop %v2059
      %v2061 = vmul.f32 %v2042, 1.442695
      %v2062 = vpow.pop %v2061
      %v2063 = vmul.f32 %v2043, 1.442695
      %v2064 = vpow.pop %v2063
      %v2065 = vmul.f32 %v2044, 1.442695
      %v2066 = vpow.pop %v2065
      %v2067 = vmul.f32 %v2045, 1.442695
      %v2068 = vpow.pop %v2067
      %v2069 = vmul.f32 %v2046, 1.442695
      %v2070 = vpow.pop %v2069
      %v2071 = vmul.f32 %v2047, 1.442695
      %v2072 = vpow.pop %v2071
      %v2073 = vmul.f32 %v2048, 1.442695
      %v2074 = vpow.pop %v2073
      %v2075 = vmul.f32 %v2049, 1.442695
      %v2076 = vpow.pop %v2075
      %v2077 = vmul.f32 %v2050, 1.442695
      %v2078 = vpow.pop %v2077
      %v2079 = vmul.f32 %v2051, 1.442695
      %v2080 = vpow.pop %v2079
      %v2081 = vmul.f32 %v2052, 1.442695
      %v2082 = vpow.pop %v2081
      %v2083 = vmul.f32 %v2053, 1.442695
      %v2084 = vpow.pop %v2083
      %v2085 = vmul.f32 %v2054, 1.442695
      %v2086 = vpow.pop %v2085
      %v2087 = vld [vmem:[#allocation3] sm:$0xff]
      %v2088 = vld [vmem:[#allocation3 + $0x8] sm:$0xff]
      %v2089 = vld [vmem:[#allocation3 + $0x10] sm:$0xff]
      %v2090 = vld [vmem:[#allocation3 + $0x18] sm:$0xff]
      %v2091 = vld [vmem:[#allocation3 + $0x20] sm:$0xff]
      %v2092 = vld [vmem:[#allocation3 + $0x28] sm:$0xff]
      %v2093 = vld [vmem:[#allocation3 + $0x30] sm:$0xff]
      %v2094 = vld [vmem:[#allocation3 + $0x38] sm:$0xff]
      %v2095 = vld [vmem:[#allocation3 + $0x40] sm:$0xff]
      %v2096 = vld [vmem:[#allocation3 + $0x48] sm:$0xff]
      %v2097 = vld [vmem:[#allocation3 + $0x50] sm:$0xff]
      %v2098 = vld [vmem:[#allocation3 + $0x58] sm:$0xff]
      %v2099 = vld [vmem:[#allocation3 + $0x60] sm:$0xff]
      %v2100 = vld [vmem:[#allocation3 + $0x68] sm:$0xff]
      %v2101 = vld [vmem:[#allocation3 + $0x70] sm:$0xff]
      %v2102 = vld [vmem:[#allocation3 + $0x78] sm:$0xff]
      %v2103 = vmul.f32 %v1928, %v2087
      %v2104 = vmul.f32 %v1930, %v2088
      %v2105 = vmul.f32 %v1932, %v2089
      %v2106 = vmul.f32 %v1934, %v2090
      %v2107 = vmul.f32 %v1936, %v2091
      %v2108 = vmul.f32 %v1938, %v2092
      %v2109 = vmul.f32 %v1940, %v2093
      %v2110 = vmul.f32 %v1942, %v2094
      %v2111 = vmul.f32 %v1944, %v2095
      %v2112 = vmul.f32 %v1946, %v2096
      %v2113 = vmul.f32 %v1948, %v2097
      %v2114 = vmul.f32 %v1950, %v2098
      %v2115 = vmul.f32 %v1952, %v2099
      %v2116 = vmul.f32 %v1954, %v2100
      %v2117 = vmul.f32 %v1956, %v2101
      %v2118 = vmul.f32 %v1958, %v2102
      %2119 = vadd.xlane.f32.xlu0 %v2056
      %v2120 = vpop.xlane.xlu0 %2119
      %2121 = vadd.xlane.f32.xlu0 %v2058
      %v2122 = vpop.xlane.xlu0 %2121
      %2123 = vadd.xlane.f32.xlu0 %v2060
      %v2124 = vpop.xlane.xlu0 %2123
      %2125 = vadd.xlane.f32.xlu0 %v2062
      %v2126 = vpop.xlane.xlu0 %2125
      %2127 = vadd.xlane.f32.xlu0 %v2064
      %v2128 = vpop.xlane.xlu0 %2127
      %2129 = vadd.xlane.f32.xlu0 %v2066
      %v2130 = vpop.xlane.xlu0 %2129
      %2131 = vadd.xlane.f32.xlu0 %v2068
      %v2132 = vpop.xlane.xlu0 %2131
      %2133 = vadd.xlane.f32.xlu0 %v2070
      %v2134 = vpop.xlane.xlu0 %2133
      %2135 = vadd.xlane.f32.xlu0 %v2072
      %v2136 = vpop.xlane.xlu0 %2135
      %2137 = vadd.xlane.f32.xlu0 %v2074
      %v2138 = vpop.xlane.xlu0 %2137
      %2139 = vadd.xlane.f32.xlu0 %v2076
      %v2140 = vpop.xlane.xlu0 %2139
      %2141 = vadd.xlane.f32.xlu0 %v2078
      %v2142 = vpop.xlane.xlu0 %2141
      %2143 = vadd.xlane.f32.xlu0 %v2080
      %v2144 = vpop.xlane.xlu0 %2143
      %2145 = vadd.xlane.f32.xlu0 %v2082
      %v2146 = vpop.xlane.xlu0 %2145
      %2147 = vadd.xlane.f32.xlu0 %v2084
      %v2148 = vpop.xlane.xlu0 %2147
      %2149 = vadd.xlane.f32.xlu0 %v2086
      %v2150 = vpop.xlane.xlu0 %2149
      %v2151 = vadd.f32 %v2103, %v2120
      %v2152 = vadd.f32 %v2104, %v2122
      %v2153 = vadd.f32 %v2105, %v2124
      %v2154 = vadd.f32 %v2106, %v2126
      %v2155 = vadd.f32 %v2107, %v2128
      %v2156 = vadd.f32 %v2108, %v2130
      %v2157 = vadd.f32 %v2109, %v2132
      %v2158 = vadd.f32 %v2110, %v2134
      %v2159 = vadd.f32 %v2111, %v2136
      %v2160 = vadd.f32 %v2112, %v2138
      %v2161 = vadd.f32 %v2113, %v2140
      %v2162 = vadd.f32 %v2114, %v2142
      %v2163 = vadd.f32 %v2115, %v2144
      %v2164 = vadd.f32 %v2116, %v2146
      %v2165 = vadd.f32 %v2117, %v2148
      %v2166 = vadd.f32 %v2118, %v2150
      %vm2167 = vcmask 7168
      %2168 = vst.msk [vmem:[#allocation3] sm:$0xff] %vm2167, %v2151
      %2169 = vst.msk [vmem:[#allocation3 + $0x8] sm:$0xff] %vm2167, %v2152
      %2170 = vst.msk [vmem:[#allocation3 + $0x10] sm:$0xff] %vm2167, %v2153
      %2171 = vst.msk [vmem:[#allocation3 + $0x18] sm:$0xff] %vm2167, %v2154
      %2172 = vst.msk [vmem:[#allocation3 + $0x20] sm:$0xff] %vm2167, %v2155
      %2173 = vst.msk [vmem:[#allocation3 + $0x28] sm:$0xff] %vm2167, %v2156
      %2174 = vst.msk [vmem:[#allocation3 + $0x30] sm:$0xff] %vm2167, %v2157
      %2175 = vst.msk [vmem:[#allocation3 + $0x38] sm:$0xff] %vm2167, %v2158
      %2176 = vst.msk [vmem:[#allocation3 + $0x40] sm:$0xff] %vm2167, %v2159
      %2177 = vst.msk [vmem:[#allocation3 + $0x48] sm:$0xff] %vm2167, %v2160
      %2178 = vst.msk [vmem:[#allocation3 + $0x50] sm:$0xff] %vm2167, %v2161
      %2179 = vst.msk [vmem:[#allocation3 + $0x58] sm:$0xff] %vm2167, %v2162
      %2180 = vst.msk [vmem:[#allocation3 + $0x60] sm:$0xff] %vm2167, %v2163
      %2181 = vst.msk [vmem:[#allocation3 + $0x68] sm:$0xff] %vm2167, %v2164
      %2182 = vst.msk [vmem:[#allocation3 + $0x70] sm:$0xff] %vm2167, %v2165
      %2183 = vst.msk [vmem:[#allocation3 + $0x78] sm:$0xff] %vm2167, %v2166
      %v2184 = vld [vmem:[#allocation4] sm:$0xff]
      %v2185 = vld [vmem:[#allocation4 + $0x8] sm:$0xff]
      %v2186 = vld [vmem:[#allocation4 + $0x10] sm:$0xff]
      %v2187 = vld [vmem:[#allocation4 + $0x18] sm:$0xff]
      %v2188 = vld [vmem:[#allocation4 + $0x20] sm:$0xff]
      %v2189 = vld [vmem:[#allocation4 + $0x28] sm:$0xff]
      %v2190 = vld [vmem:[#allocation4 + $0x30] sm:$0xff]
      %v2191 = vld [vmem:[#allocation4 + $0x38] sm:$0xff]
      %v2192 = vld [vmem:[#allocation4 + $0x40] sm:$0xff]
      %v2193 = vld [vmem:[#allocation4 + $0x48] sm:$0xff]
      %v2194 = vld [vmem:[#allocation4 + $0x50] sm:$0xff]
      %v2195 = vld [vmem:[#allocation4 + $0x58] sm:$0xff]
      %v2196 = vld [vmem:[#allocation4 + $0x60] sm:$0xff]
      %v2197 = vld [vmem:[#allocation4 + $0x68] sm:$0xff]
      %v2198 = vld [vmem:[#allocation4 + $0x70] sm:$0xff]
      %v2199 = vld [vmem:[#allocation4 + $0x78] sm:$0xff]
      %2201 = vset.pattern.permute.xlu0 0
      %2202 = vperm.xlu0 %2201, %v1928
      %v2203 = vpop.permute.xlu0 %2202
      %2206 = vset.pattern.permute.xlu0 0
      %2207 = vperm.xlu0 %2206, %v1930
      %v2208 = vpop.permute.xlu0 %2207
      %2211 = vset.pattern.permute.xlu0 0
      %2212 = vperm.xlu0 %2211, %v1932
      %v2213 = vpop.permute.xlu0 %2212
      %2216 = vset.pattern.permute.xlu0 0
      %2217 = vperm.xlu0 %2216, %v1934
      %v2218 = vpop.permute.xlu0 %2217
      %2221 = vset.pattern.permute.xlu0 0
      %2222 = vperm.xlu0 %2221, %v1936
      %v2223 = vpop.permute.xlu0 %2222
      %2226 = vset.pattern.permute.xlu0 0
      %2227 = vperm.xlu0 %2226, %v1938
      %v2228 = vpop.permute.xlu0 %2227
      %2231 = vset.pattern.permute.xlu0 0
      %2232 = vperm.xlu0 %2231, %v1940
      %v2233 = vpop.permute.xlu0 %2232
      %2236 = vset.pattern.permute.xlu0 0
      %2237 = vperm.xlu0 %2236, %v1942
      %v2238 = vpop.permute.xlu0 %2237
      %2241 = vset.pattern.permute.xlu0 0
      %2242 = vperm.xlu0 %2241, %v1944
      %v2243 = vpop.permute.xlu0 %2242
      %2246 = vset.pattern.permute.xlu0 0
      %2247 = vperm.xlu0 %2246, %v1946
      %v2248 = vpop.permute.xlu0 %2247
      %2251 = vset.pattern.permute.xlu0 0
      %2252 = vperm.xlu0 %2251, %v1948
      %v2253 = vpop.permute.xlu0 %2252
      %2256 = vset.pattern.permute.xlu0 0
      %2257 = vperm.xlu0 %2256, %v1950
      %v2258 = vpop.permute.xlu0 %2257
      %2261 = vset.pattern.permute.xlu0 0
      %2262 = vperm.xlu0 %2261, %v1952
      %v2263 = vpop.permute.xlu0 %2262
      %2266 = vset.pattern.permute.xlu0 0
      %2267 = vperm.xlu0 %2266, %v1954
      %v2268 = vpop.permute.xlu0 %2267
      %2271 = vset.pattern.permute.xlu0 0
      %2272 = vperm.xlu0 %2271, %v1956
      %v2273 = vpop.permute.xlu0 %2272
      %2276 = vset.pattern.permute.xlu0 0
      %2277 = vperm.xlu0 %2276, %v1958
      %v2278 = vpop.permute.xlu0 %2277
      %v2280 = vmul.f32 %v2203, %v2184
      %v2281 = vmul.f32 %v2208, %v2185
      %v2282 = vmul.f32 %v2213, %v2186
      %v2283 = vmul.f32 %v2218, %v2187
      %v2284 = vmul.f32 %v2223, %v2188
      %v2285 = vmul.f32 %v2228, %v2189
      %v2286 = vmul.f32 %v2233, %v2190
      %v2287 = vmul.f32 %v2238, %v2191
      %v2288 = vmul.f32 %v2243, %v2192
      %v2289 = vmul.f32 %v2248, %v2193
      %v2290 = vmul.f32 %v2253, %v2194
      %v2291 = vmul.f32 %v2258, %v2195
      %v2292 = vmul.f32 %v2263, %v2196
      %v2293 = vmul.f32 %v2268, %v2197
      %v2294 = vmul.f32 %v2273, %v2198
      %v2295 = vmul.f32 %v2278, %v2199
      %v2296 = vld [vmem:[%s318] sm:$0xff]
      %v2297 = vld [vmem:[%s318 + $0x8] sm:$0xff]
      %v2298 = vld [vmem:[%s318 + $0x10] sm:$0xff]
      %v2299 = vld [vmem:[%s318 + $0x18] sm:$0xff]
      %v2300 = vld [vmem:[%s318 + $0x20] sm:$0xff]
      %v2301 = vld [vmem:[%s318 + $0x28] sm:$0xff]
      %v2302 = vld [vmem:[%s318 + $0x30] sm:$0xff]
      %v2303 = vld [vmem:[%s318 + $0x38] sm:$0xff]
      %v2304 = vld [vmem:[%s318 + $0x40] sm:$0xff]
      %v2305 = vld [vmem:[%s318 + $0x48] sm:$0xff]
      %v2306 = vld [vmem:[%s318 + $0x50] sm:$0xff]
      %v2307 = vld [vmem:[%s318 + $0x58] sm:$0xff]
      %v2308 = vld [vmem:[%s318 + $0x60] sm:$0xff]
      %v2309 = vld [vmem:[%s318 + $0x68] sm:$0xff]
      %v2310 = vld [vmem:[%s318 + $0x70] sm:$0xff]
      %v2311 = vld [vmem:[%s318 + $0x78] sm:$0xff]
      %2312 = vmatprep.subr.mxu0 0.0
      %v2313 = vand.u32 %v2296, 4294901760
      %2314 = vmatpush1.msra.mxu0 %v2313
      %2315 = vmatprep.subr.mxu0 0.0
      %v2316 = vand.u32 %v2297, 4294901760
      %2317 = vmatpush1.msra.mxu0 %v2316
      %2318 = vmatprep.subr.mxu0 0.0
      %v2319 = vand.u32 %v2298, 4294901760
      %2320 = vmatpush1.msra.mxu0 %v2319
      %2321 = vmatprep.subr.mxu0 0.0
      %v2322 = vand.u32 %v2299, 4294901760
      %2323 = vmatpush1.msra.mxu0 %v2322
      %2324 = vmatprep.subr.mxu0 0.0
      %v2325 = vand.u32 %v2300, 4294901760
      %2326 = vmatpush1.msra.mxu0 %v2325
      %2327 = vmatprep.subr.mxu0 0.0
      %v2328 = vand.u32 %v2301, 4294901760
      %2329 = vmatpush1.msra.mxu0 %v2328
      %2330 = vmatprep.subr.mxu0 0.0
      %v2331 = vand.u32 %v2302, 4294901760
      %2332 = vmatpush1.msra.mxu0 %v2331
      %2333 = vmatprep.subr.mxu0 0.0
      %v2334 = vand.u32 %v2303, 4294901760
      %2335 = vmatpush1.msra.mxu0 %v2334
      %2336 = vmatprep.subr.mxu0 0.0
      %v2337 = vand.u32 %v2304, 4294901760
      %2338 = vmatpush1.msra.mxu0 %v2337
      %2339 = vmatprep.subr.mxu0 0.0
      %v2340 = vand.u32 %v2305, 4294901760
      %2341 = vmatpush1.msra.mxu0 %v2340
      %2342 = vmatprep.subr.mxu0 0.0
      %v2343 = vand.u32 %v2306, 4294901760
      %2344 = vmatpush1.msra.mxu0 %v2343
      %2345 = vmatprep.subr.mxu0 0.0
      %v2346 = vand.u32 %v2307, 4294901760
      %2347 = vmatpush1.msra.mxu0 %v2346
      %2348 = vmatprep.subr.mxu0 0.0
      %v2349 = vand.u32 %v2308, 4294901760
      %2350 = vmatpush1.msra.mxu0 %v2349
      %2351 = vmatprep.subr.mxu0 0.0
      %v2352 = vand.u32 %v2309, 4294901760
      %2353 = vmatpush1.msra.mxu0 %v2352
      %2354 = vmatprep.subr.mxu0 0.0
      %v2355 = vand.u32 %v2310, 4294901760
      %2356 = vmatpush1.msra.mxu0 %v2355
      %2357 = vmatprep.subr.mxu0 0.0
      %v2358 = vand.u32 %v2311, 4294901760
      %2359 = vmatpush1.msra.mxu0 %v2358
      %2360 = vmatprep.subr.mxu0 0.0
      %2361 = vmatpush1.msra.mxu0 0.0
      %2362 = vmatprep.subr.mxu0 0.0
      %2363 = vmatpush1.msra.mxu0 0.0
      %2364 = vmatprep.subr.mxu0 0.0
      %2365 = vmatpush1.msra.mxu0 0.0
      %2366 = vmatprep.subr.mxu0 0.0
      %2367 = vmatpush1.msra.mxu0 0.0
      %2368 = vmatprep.subr.mxu0 0.0
      %2369 = vmatpush1.msra.mxu0 0.0
      %2370 = vmatprep.subr.mxu0 0.0
      %2371 = vmatpush1.msra.mxu0 0.0
      %2372 = vmatprep.subr.mxu0 0.0
      %2373 = vmatpush1.msra.mxu0 0.0
      %2374 = vmatprep.subr.mxu0 0.0
      %2375 = vmatpush1.msra.mxu0 0.0
      %2376 = vmatprep.subr.mxu0 0.0
      %2377 = vmatpush1.msra.mxu0 0.0
      %2378 = vmatprep.subr.mxu0 0.0
      %2379 = vmatpush1.msra.mxu0 0.0
      %2380 = vmatprep.subr.mxu0 0.0
      %2381 = vmatpush1.msra.mxu0 0.0
      %2382 = vmatprep.subr.mxu0 0.0
      %2383 = vmatpush1.msra.mxu0 0.0
      %2384 = vmatprep.subr.mxu0 0.0
      %2385 = vmatpush1.msra.mxu0 0.0
      %2386 = vmatprep.subr.mxu0 0.0
      %2387 = vmatpush1.msra.mxu0 0.0
      %2388 = vmatprep.subr.mxu0 0.0
      %2389 = vmatpush1.msra.mxu0 0.0
      %2390 = vmatprep.subr.mxu0 0.0
      %2391 = vmatpush1.msra.mxu0 0.0
      %2392 = vmatprep.mubr.f32.mxu0 0.0
      %v2393 = vand.u32 %v2056, 4294901760
      %v2394 = vsub.f32 %v2056, %v2393
      %v2395 = vand.u32 %v2394, 4294901760
      %v2396 = vsub.f32 %v2394, %v2395
      %v2397 = vand.u32 %v2396, 4294901760
      %2398 = vmatmul.mubr.f32.gmra.mrb[0].mxu0 %v2397
      %v2399 = vpop.f32.mrb[0].mxu0
      %v2400 = vadd.f32 0.0, %v2399
      %v2401 = vpop.f32.mrb[0].mxu0
      %2402 = vmatprep.mubr.f32.mxu0 0.0
      %v2403 = vand.u32 %v2058, 4294901760
      %v2404 = vsub.f32 %v2058, %v2403
      %v2405 = vand.u32 %v2404, 4294901760
      %v2406 = vsub.f32 %v2404, %v2405
      %v2407 = vand.u32 %v2406, 4294901760
      %2408 = vmatmul.mubr.f32.gmra.mrb[0].mxu0 %v2407
      %v2409 = vpop.f32.mrb[0].mxu0
      %v2410 = vadd.f32 0.0, %v2409
      %v2411 = vpop.f32.mrb[0].mxu0
      %2412 = vmatprep.mubr.f32.mxu0 0.0
      %v2413 = vand.u32 %v2060, 4294901760
      %v2414 = vsub.f32 %v2060, %v2413
      %v2415 = vand.u32 %v2414, 4294901760
      %v2416 = vsub.f32 %v2414, %v2415
      %v2417 = vand.u32 %v2416, 4294901760
      %2418 = vmatmul.mubr.f32.gmra.mrb[0].mxu0 %v2417
      %v2419 = vpop.f32.mrb[0].mxu0
      %v2420 = vadd.f32 0.0, %v2419
      %v2421 = vpop.f32.mrb[0].mxu0
      %2422 = vmatprep.mubr.f32.mxu0 0.0
      %v2423 = vand.u32 %v2062, 4294901760
      %v2424 = vsub.f32 %v2062, %v2423
      %v2425 = vand.u32 %v2424, 4294901760
      %v2426 = vsub.f32 %v2424, %v2425
      %v2427 = vand.u32 %v2426, 4294901760
      %2428 = vmatmul.mubr.f32.gmra.mrb[0].mxu0 %v2427
      %v2429 = vpop.f32.mrb[0].mxu0
      %v2430 = vadd.f32 0.0, %v2429
      %v2431 = vpop.f32.mrb[0].mxu0
      %2432 = vmatprep.mubr.f32.mxu0 0.0
      %v2433 = vand.u32 %v2064, 4294901760
      %v2434 = vsub.f32 %v2064, %v2433
      %v2435 = vand.u32 %v2434, 4294901760
      %v2436 = vsub.f32 %v2434, %v2435
      %v2437 = vand.u32 %v2436, 4294901760
      %2438 = vmatmul.mubr.f32.gmra.mrb[0].mxu0 %v2437
      %v2439 = vpop.f32.mrb[0].mxu0
      %v2440 = vadd.f32 0.0, %v2439
      %v2441 = vpop.f32.mrb[0].mxu0
      %2442 = vmatprep.mubr.f32.mxu0 0.0
      %v2443 = vand.u32 %v2066, 4294901760
      %v2444 = vsub.f32 %v2066, %v2443
      %v2445 = vand.u32 %v2444, 4294901760
      %v2446 = vsub.f32 %v2444, %v2445
      %v2447 = vand.u32 %v2446, 4294901760
      %2448 = vmatmul.mubr.f32.gmra.mrb[0].mxu0 %v2447
      %v2449 = vpop.f32.mrb[0].mxu0
      %v2450 = vadd.f32 0.0, %v2449
      %v2451 = vpop.f32.mrb[0].mxu0
      %2452 = vmatprep.mubr.f32.mxu0 0.0
      %v2453 = vand.u32 %v2068, 4294901760
      %v2454 = vsub.f32 %v2068, %v2453
      %v2455 = vand.u32 %v2454, 4294901760
      %v2456 = vsub.f32 %v2454, %v2455
      %v2457 = vand.u32 %v2456, 4294901760
      %2458 = vmatmul.mubr.f32.gmra.mrb[0].mxu0 %v2457
      %v2459 = vpop.f32.mrb[0].mxu0
      %v2460 = vadd.f32 0.0, %v2459
      %v2461 = vpop.f32.mrb[0].mxu0
      %2462 = vmatprep.mubr.f32.mxu0 0.0
      %v2463 = vand.u32 %v2070, 4294901760
      %v2464 = vsub.f32 %v2070, %v2463
      %v2465 = vand.u32 %v2464, 4294901760
      %v2466 = vsub.f32 %v2464, %v2465
      %v2467 = vand.u32 %v2466, 4294901760
      %2468 = vmatmul.mubr.f32.gmra.mrb[0].mxu0 %v2467
      %v2469 = vpop.f32.mrb[0].mxu0
      %v2470 = vadd.f32 0.0, %v2469
      %v2471 = vpop.f32.mrb[0].mxu0
      %2472 = vmatprep.mubr.f32.mxu0 0.0
      %v2473 = vand.u32 %v2072, 4294901760
      %v2474 = vsub.f32 %v2072, %v2473
      %v2475 = vand.u32 %v2474, 4294901760
      %v2476 = vsub.f32 %v2474, %v2475
      %v2477 = vand.u32 %v2476, 4294901760
      %2478 = vmatmul.mubr.f32.gmra.mrb[0].mxu0 %v2477
      %v2479 = vpop.f32.mrb[0].mxu0
      %v2480 = vadd.f32 0.0, %v2479
      %v2481 = vpop.f32.mrb[0].mxu0
      %2482 = vmatprep.mubr.f32.mxu0 0.0
      %v2483 = vand.u32 %v2074, 4294901760
      %v2484 = vsub.f32 %v2074, %v2483
      %v2485 = vand.u32 %v2484, 4294901760
      %v2486 = vsub.f32 %v2484, %v2485
      %v2487 = vand.u32 %v2486, 4294901760
      %2488 = vmatmul.mubr.f32.gmra.mrb[0].mxu0 %v2487
      %v2489 = vpop.f32.mrb[0].mxu0
      %v2490 = vadd.f32 0.0, %v2489
      %v2491 = vpop.f32.mrb[0].mxu0
      %2492 = vmatprep.mubr.f32.mxu0 0.0
      %v2493 = vand.u32 %v2076, 4294901760
      %v2494 = vsub.f32 %v2076, %v2493
      %v2495 = vand.u32 %v2494, 4294901760
      %v2496 = vsub.f32 %v2494, %v2495
      %v2497 = vand.u32 %v2496, 4294901760
      %2498 = vmatmul.mubr.f32.gmra.mrb[0].mxu0 %v2497
      %v2499 = vpop.f32.mrb[0].mxu0
      %v2500 = vadd.f32 0.0, %v2499
      %v2501 = vpop.f32.mrb[0].mxu0
      %2502 = vmatprep.mubr.f32.mxu0 0.0
      %v2503 = vand.u32 %v2078, 4294901760
      %v2504 = vsub.f32 %v2078, %v2503
      %v2505 = vand.u32 %v2504, 4294901760
      %v2506 = vsub.f32 %v2504, %v2505
      %v2507 = vand.u32 %v2506, 4294901760
      %2508 = vmatmul.mubr.f32.gmra.mrb[0].mxu0 %v2507
      %v2509 = vpop.f32.mrb[0].mxu0
      %v2510 = vadd.f32 0.0, %v2509
      %v2511 = vpop.f32.mrb[0].mxu0
      %2512 = vmatprep.mubr.f32.mxu0 0.0
      %v2513 = vand.u32 %v2080, 4294901760
      %v2514 = vsub.f32 %v2080, %v2513
      %v2515 = vand.u32 %v2514, 4294901760
      %v2516 = vsub.f32 %v2514, %v2515
      %v2517 = vand.u32 %v2516, 4294901760
      %2518 = vmatmul.mubr.f32.gmra.mrb[0].mxu0 %v2517
      %v2519 = vpop.f32.mrb[0].mxu0
      %v2520 = vadd.f32 0.0, %v2519
      %v2521 = vpop.f32.mrb[0].mxu0
      %2522 = vmatprep.mubr.f32.mxu0 0.0
      %v2523 = vand.u32 %v2082, 4294901760
      %v2524 = vsub.f32 %v2082, %v2523
      %v2525 = vand.u32 %v2524, 4294901760
      %v2526 = vsub.f32 %v2524, %v2525
      %v2527 = vand.u32 %v2526, 4294901760
      %2528 = vmatmul.mubr.f32.gmra.mrb[0].mxu0 %v2527
      %v2529 = vpop.f32.mrb[0].mxu0
      %v2530 = vadd.f32 0.0, %v2529
      %v2531 = vpop.f32.mrb[0].mxu0
      %2532 = vmatprep.mubr.f32.mxu0 0.0
      %v2533 = vand.u32 %v2084, 4294901760
      %v2534 = vsub.f32 %v2084, %v2533
      %v2535 = vand.u32 %v2534, 4294901760
      %v2536 = vsub.f32 %v2534, %v2535
      %v2537 = vand.u32 %v2536, 4294901760
      %2538 = vmatmul.mubr.f32.gmra.mrb[0].mxu0 %v2537
      %v2539 = vpop.f32.mrb[0].mxu0
      %v2540 = vadd.f32 0.0, %v2539
      %v2541 = vpop.f32.mrb[0].mxu0
      %2542 = vmatprep.mubr.f32.mxu0 0.0
      %v2543 = vand.u32 %v2086, 4294901760
      %v2544 = vsub.f32 %v2086, %v2543
      %v2545 = vand.u32 %v2544, 4294901760
      %v2546 = vsub.f32 %v2544, %v2545
      %v2547 = vand.u32 %v2546, 4294901760
      %2548 = vmatmul.mubr.f32.gmra.mrb[0].mxu0 %v2547
      %v2549 = vpop.f32.mrb[0].mxu0
      %v2550 = vadd.f32 0.0, %v2549
      %v2551 = vpop.f32.mrb[0].mxu0
      %2552 = vdwg.mxu0
      %2553 = vmatprep.subr.mxu0 0.0
      %v2554 = vand.u32 %v2296, 4294901760
      %v2555 = vsub.f32 %v2296, %v2554
      %v2556 = vand.u32 %v2555, 4294901760
      %v2557 = vsub.f32 %v2555, %v2556
      %v2558 = vand.u32 %v2557, 4294901760
      %2559 = vmatpush1.msra.mxu0 %v2558
      %2560 = vmatprep.subr.mxu0 0.0
      %v2561 = vand.u32 %v2297, 4294901760
      %v2562 = vsub.f32 %v2297, %v2561
      %v2563 = vand.u32 %v2562, 4294901760
      %v2564 = vsub.f32 %v2562, %v2563
      %v2565 = vand.u32 %v2564, 4294901760
      %2566 = vmatpush1.msra.mxu0 %v2565
      %2567 = vmatprep.subr.mxu0 0.0
      %v2568 = vand.u32 %v2298, 4294901760
      %v2569 = vsub.f32 %v2298, %v2568
      %v2570 = vand.u32 %v2569, 4294901760
      %v2571 = vsub.f32 %v2569, %v2570
      %v2572 = vand.u32 %v2571, 4294901760
      %2573 = vmatpush1.msra.mxu0 %v2572
      %2574 = vmatprep.subr.mxu0 0.0
      %v2575 = vand.u32 %v2299, 4294901760
      %v2576 = vsub.f32 %v2299, %v2575
      %v2577 = vand.u32 %v2576, 4294901760
      %v2578 = vsub.f32 %v2576, %v2577
      %v2579 = vand.u32 %v2578, 4294901760
      %2580 = vmatpush1.msra.mxu0 %v2579
      %2581 = vmatprep.subr.mxu0 0.0
      %v2582 = vand.u32 %v2300, 4294901760
      %v2583 = vsub.f32 %v2300, %v2582
      %v2584 = vand.u32 %v2583, 4294901760
      %v2585 = vsub.f32 %v2583, %v2584
      %v2586 = vand.u32 %v2585, 4294901760
      %2587 = vmatpush1.msra.mxu0 %v2586
      %2588 = vmatprep.subr.mxu0 0.0
      %v2589 = vand.u32 %v2301, 4294901760
      %v2590 = vsub.f32 %v2301, %v2589
      %v2591 = vand.u32 %v2590, 4294901760
      %v2592 = vsub.f32 %v2590, %v2591
      %v2593 = vand.u32 %v2592, 4294901760
      %2594 = vmatpush1.msra.mxu0 %v2593
      %2595 = vmatprep.subr.mxu0 0.0
      %v2596 = vand.u32 %v2302, 4294901760
      %v2597 = vsub.f32 %v2302, %v2596
      %v2598 = vand.u32 %v2597, 4294901760
      %v2599 = vsub.f32 %v2597, %v2598
      %v2600 = vand.u32 %v2599, 4294901760
      %2601 = vmatpush1.msra.mxu0 %v2600
      %2602 = vmatprep.subr.mxu0 0.0
      %v2603 = vand.u32 %v2303, 4294901760
      %v2604 = vsub.f32 %v2303, %v2603
      %v2605 = vand.u32 %v2604, 4294901760
      %v2606 = vsub.f32 %v2604, %v2605
      %v2607 = vand.u32 %v2606, 4294901760
      %2608 = vmatpush1.msra.mxu0 %v2607
      %2609 = vmatprep.subr.mxu0 0.0
      %v2610 = vand.u32 %v2304, 4294901760
      %v2611 = vsub.f32 %v2304, %v2610
      %v2612 = vand.u32 %v2611, 4294901760
      %v2613 = vsub.f32 %v2611, %v2612
      %v2614 = vand.u32 %v2613, 4294901760
      %2615 = vmatpush1.msra.mxu0 %v2614
      %2616 = vmatprep.subr.mxu0 0.0
      %v2617 = vand.u32 %v2305, 4294901760
      %v2618 = vsub.f32 %v2305, %v2617
      %v2619 = vand.u32 %v2618, 4294901760
      %v2620 = vsub.f32 %v2618, %v2619
      %v2621 = vand.u32 %v2620, 4294901760
      %2622 = vmatpush1.msra.mxu0 %v2621
      %2623 = vmatprep.subr.mxu0 0.0
      %v2624 = vand.u32 %v2306, 4294901760
      %v2625 = vsub.f32 %v2306, %v2624
      %v2626 = vand.u32 %v2625, 4294901760
      %v2627 = vsub.f32 %v2625, %v2626
      %v2628 = vand.u32 %v2627, 4294901760
      %2629 = vmatpush1.msra.mxu0 %v2628
      %2630 = vmatprep.subr.mxu0 0.0
      %v2631 = vand.u32 %v2307, 4294901760
      %v2632 = vsub.f32 %v2307, %v2631
      %v2633 = vand.u32 %v2632, 4294901760
      %v2634 = vsub.f32 %v2632, %v2633
      %v2635 = vand.u32 %v2634, 4294901760
      %2636 = vmatpush1.msra.mxu0 %v2635
      %2637 = vmatprep.subr.mxu0 0.0
      %v2638 = vand.u32 %v2308, 4294901760
      %v2639 = vsub.f32 %v2308, %v2638
      %v2640 = vand.u32 %v2639, 4294901760
      %v2641 = vsub.f32 %v2639, %v2640
      %v2642 = vand.u32 %v2641, 4294901760
      %2643 = vmatpush1.msra.mxu0 %v2642
      %2644 = vmatprep.subr.mxu0 0.0
      %v2645 = vand.u32 %v2309, 4294901760
      %v2646 = vsub.f32 %v2309, %v2645
      %v2647 = vand.u32 %v2646, 4294901760
      %v2648 = vsub.f32 %v2646, %v2647
      %v2649 = vand.u32 %v2648, 4294901760
      %2650 = vmatpush1.msra.mxu0 %v2649
      %2651 = vmatprep.subr.mxu0 0.0
      %v2652 = vand.u32 %v2310, 4294901760
      %v2653 = vsub.f32 %v2310, %v2652
      %v2654 = vand.u32 %v2653, 4294901760
      %v2655 = vsub.f32 %v2653, %v2654
      %v2656 = vand.u32 %v2655, 4294901760
      %2657 = vmatpush1.msra.mxu0 %v2656
      %2658 = vmatprep.subr.mxu0 0.0
      %v2659 = vand.u32 %v2311, 4294901760
      %v2660 = vsub.f32 %v2311, %v2659
      %v2661 = vand.u32 %v2660, 4294901760
      %v2662 = vsub.f32 %v2660, %v2661
      %v2663 = vand.u32 %v2662, 4294901760
      %2664 = vmatpush1.msra.mxu0 %v2663
      %2665 = vmatprep.subr.mxu0 0.0
      %2666 = vmatpush1.msra.mxu0 0.0
      %2667 = vmatprep.subr.mxu0 0.0
      %2668 = vmatpush1.msra.mxu0 0.0
      %2669 = vmatprep.subr.mxu0 0.0
      %2670 = vmatpush1.msra.mxu0 0.0
      %2671 = vmatprep.subr.mxu0 0.0
      %2672 = vmatpush1.msra.mxu0 0.0
      %2673 = vmatprep.subr.mxu0 0.0
      %2674 = vmatpush1.msra.mxu0 0.0
      %2675 = vmatprep.subr.mxu0 0.0
      %2676 = vmatpush1.msra.mxu0 0.0
      %2677 = vmatprep.subr.mxu0 0.0
      %2678 = vmatpush1.msra.mxu0 0.0
      %2679 = vmatprep.subr.mxu0 0.0
      %2680 = vmatpush1.msra.mxu0 0.0
      %2681 = vmatprep.subr.mxu0 0.0
      %2682 = vmatpush1.msra.mxu0 0.0
      %2683 = vmatprep.subr.mxu0 0.0
      %2684 = vmatpush1.msra.mxu0 0.0
      %2685 = vmatprep.subr.mxu0 0.0
      %2686 = vmatpush1.msra.mxu0 0.0
      %2687 = vmatprep.subr.mxu0 0.0
      %2688 = vmatpush1.msra.mxu0 0.0
      %2689 = vmatprep.subr.mxu0 0.0
      %2690 = vmatpush1.msra.mxu0 0.0
      %2691 = vmatprep.subr.mxu0 0.0
      %2692 = vmatpush1.msra.mxu0 0.0
      %2693 = vmatprep.subr.mxu0 0.0
      %2694 = vmatpush1.msra.mxu0 0.0
      %2695 = vmatprep.subr.mxu0 0.0
      %2696 = vmatpush1.msra.mxu0 0.0
      %2697 = vmatprep.mubr.f32.mxu0 0.0
      %v2698 = vand.u32 %v2056, 4294901760
      %2699 = vmatmul.mubr.f32.gmra.mrb[0].mxu0 %v2698
      %v2700 = vpop.f32.mrb[0].mxu0
      %v2701 = vadd.f32 %v2400, %v2700
      %v2702 = vpop.f32.mrb[0].mxu0
      %2703 = vmatprep.mubr.f32.mxu0 0.0
      %v2704 = vand.u32 %v2058, 4294901760
      %2705 = vmatmul.mubr.f32.gmra.mrb[0].mxu0 %v2704
      %v2706 = vpop.f32.mrb[0].mxu0
      %v2707 = vadd.f32 %v2410, %v2706
      %v2708 = vpop.f32.mrb[0].mxu0
      %2709 = vmatprep.mubr.f32.mxu0 0.0
      %v2710 = vand.u32 %v2060, 4294901760
      %2711 = vmatmul.mubr.f32.gmra.mrb[0].mxu0 %v2710
      %v2712 = vpop.f32.mrb[0].mxu0
      %v2713 = vadd.f32 %v2420, %v2712
      %v2714 = vpop.f32.mrb[0].mxu0
      %2715 = vmatprep.mubr.f32.mxu0 0.0
      %v2716 = vand.u32 %v2062, 4294901760
      %2717 = vmatmul.mubr.f32.gmra.mrb[0].mxu0 %v2716
      %v2718 = vpop.f32.mrb[0].mxu0
      %v2719 = vadd.f32 %v2430, %v2718
      %v2720 = vpop.f32.mrb[0].mxu0
      %2721 = vmatprep.mubr.f32.mxu0 0.0
      %v2722 = vand.u32 %v2064, 4294901760
      %2723 = vmatmul.mubr.f32.gmra.mrb[0].mxu0 %v2722
      %v2724 = vpop.f32.mrb[0].mxu0
      %v2725 = vadd.f32 %v2440, %v2724
      %v2726 = vpop.f32.mrb[0].mxu0
      %2727 = vmatprep.mubr.f32.mxu0 0.0
      %v2728 = vand.u32 %v2066, 4294901760
      %2729 = vmatmul.mubr.f32.gmra.mrb[0].mxu0 %v2728
      %v2730 = vpop.f32.mrb[0].mxu0
      %v2731 = vadd.f32 %v2450, %v2730
      %v2732 = vpop.f32.mrb[0].mxu0
      %2733 = vmatprep.mubr.f32.mxu0 0.0
      %v2734 = vand.u32 %v2068, 4294901760
      %2735 = vmatmul.mubr.f32.gmra.mrb[0].mxu0 %v2734
      %v2736 = vpop.f32.mrb[0].mxu0
      %v2737 = vadd.f32 %v2460, %v2736
      %v2738 = vpop.f32.mrb[0].mxu0
      %2739 = vmatprep.mubr.f32.mxu0 0.0
      %v2740 = vand.u32 %v2070, 4294901760
      %2741 = vmatmul.mubr.f32.gmra.mrb[0].mxu0 %v2740
      %v2742 = vpop.f32.mrb[0].mxu0
      %v2743 = vadd.f32 %v2470, %v2742
      %v2744 = vpop.f32.mrb[0].mxu0
      %2745 = vmatprep.mubr.f32.mxu0 0.0
      %v2746 = vand.u32 %v2072, 4294901760
      %2747 = vmatmul.mubr.f32.gmra.mrb[0].mxu0 %v2746
      %v2748 = vpop.f32.mrb[0].mxu0
      %v2749 = vadd.f32 %v2480, %v2748
      %v2750 = vpop.f32.mrb[0].mxu0
      %2751 = vmatprep.mubr.f32.mxu0 0.0
      %v2752 = vand.u32 %v2074, 4294901760
      %2753 = vmatmul.mubr.f32.gmra.mrb[0].mxu0 %v2752
      %v2754 = vpop.f32.mrb[0].mxu0
      %v2755 = vadd.f32 %v2490, %v2754
      %v2756 = vpop.f32.mrb[0].mxu0
      %2757 = vmatprep.mubr.f32.mxu0 0.0
      %v2758 = vand.u32 %v2076, 4294901760
      %2759 = vmatmul.mubr.f32.gmra.mrb[0].mxu0 %v2758
      %v2760 = vpop.f32.mrb[0].mxu0
      %v2761 = vadd.f32 %v2500, %v2760
      %v2762 = vpop.f32.mrb[0].mxu0
      %2763 = vmatprep.mubr.f32.mxu0 0.0
      %v2764 = vand.u32 %v2078, 4294901760
      %2765 = vmatmul.mubr.f32.gmra.mrb[0].mxu0 %v2764
      %v2766 = vpop.f32.mrb[0].mxu0
      %v2767 = vadd.f32 %v2510, %v2766
      %v2768 = vpop.f32.mrb[0].mxu0
      %2769 = vmatprep.mubr.f32.mxu0 0.0
      %v2770 = vand.u32 %v2080, 4294901760
      %2771 = vmatmul.mubr.f32.gmra.mrb[0].mxu0 %v2770
      %v2772 = vpop.f32.mrb[0].mxu0
      %v2773 = vadd.f32 %v2520, %v2772
      %v2774 = vpop.f32.mrb[0].mxu0
      %2775 = vmatprep.mubr.f32.mxu0 0.0
      %v2776 = vand.u32 %v2082, 4294901760
      %2777 = vmatmul.mubr.f32.gmra.mrb[0].mxu0 %v2776
      %v2778 = vpop.f32.mrb[0].mxu0
      %v2779 = vadd.f32 %v2530, %v2778
      %v2780 = vpop.f32.mrb[0].mxu0
      %2781 = vmatprep.mubr.f32.mxu0 0.0
      %v2782 = vand.u32 %v2084, 4294901760
      %2783 = vmatmul.mubr.f32.gmra.mrb[0].mxu0 %v2782
      %v2784 = vpop.f32.mrb[0].mxu0
      %v2785 = vadd.f32 %v2540, %v2784
      %v2786 = vpop.f32.mrb[0].mxu0
      %2787 = vmatprep.mubr.f32.mxu0 0.0
      %v2788 = vand.u32 %v2086, 4294901760
      %2789 = vmatmul.mubr.f32.gmra.mrb[0].mxu0 %v2788
      %v2790 = vpop.f32.mrb[0].mxu0
      %v2791 = vadd.f32 %v2550, %v2790
      %v2792 = vpop.f32.mrb[0].mxu0
      %2793 = vdwg.mxu0
      %2794 = vmatprep.subr.mxu0 0.0
      %v2795 = vand.u32 %v2296, 4294901760
      %v2796 = vsub.f32 %v2296, %v2795
      %2797 = vmatpush1.msra.mxu0 %v2796
      %2798 = vmatprep.subr.mxu0 0.0
      %v2799 = vand.u32 %v2297, 4294901760
      %v2800 = vsub.f32 %v2297, %v2799
      %2801 = vmatpush1.msra.mxu0 %v2800
      %2802 = vmatprep.subr.mxu0 0.0
      %v2803 = vand.u32 %v2298, 4294901760
      %v2804 = vsub.f32 %v2298, %v2803
      %2805 = vmatpush1.msra.mxu0 %v2804
      %2806 = vmatprep.subr.mxu0 0.0
      %v2807 = vand.u32 %v2299, 4294901760
      %v2808 = vsub.f32 %v2299, %v2807
      %2809 = vmatpush1.msra.mxu0 %v2808
      %2810 = vmatprep.subr.mxu0 0.0
      %v2811 = vand.u32 %v2300, 4294901760
      %v2812 = vsub.f32 %v2300, %v2811
      %2813 = vmatpush1.msra.mxu0 %v2812
      %2814 = vmatprep.subr.mxu0 0.0
      %v2815 = vand.u32 %v2301, 4294901760
      %v2816 = vsub.f32 %v2301, %v2815
      %2817 = vmatpush1.msra.mxu0 %v2816
      %2818 = vmatprep.subr.mxu0 0.0
      %v2819 = vand.u32 %v2302, 4294901760
      %v2820 = vsub.f32 %v2302, %v2819
      %2821 = vmatpush1.msra.mxu0 %v2820
      %2822 = vmatprep.subr.mxu0 0.0
      %v2823 = vand.u32 %v2303, 4294901760
      %v2824 = vsub.f32 %v2303, %v2823
      %2825 = vmatpush1.msra.mxu0 %v2824
      %2826 = vmatprep.subr.mxu0 0.0
      %v2827 = vand.u32 %v2304, 4294901760
      %v2828 = vsub.f32 %v2304, %v2827
      %2829 = vmatpush1.msra.mxu0 %v2828
      %2830 = vmatprep.subr.mxu0 0.0
      %v2831 = vand.u32 %v2305, 4294901760
      %v2832 = vsub.f32 %v2305, %v2831
      %2833 = vmatpush1.msra.mxu0 %v2832
      %2834 = vmatprep.subr.mxu0 0.0
      %v2835 = vand.u32 %v2306, 4294901760
      %v2836 = vsub.f32 %v2306, %v2835
      %2837 = vmatpush1.msra.mxu0 %v2836
      %2838 = vmatprep.subr.mxu0 0.0
      %v2839 = vand.u32 %v2307, 4294901760
      %v2840 = vsub.f32 %v2307, %v2839
      %2841 = vmatpush1.msra.mxu0 %v2840
      %2842 = vmatprep.subr.mxu0 0.0
      %v2843 = vand.u32 %v2308, 4294901760
      %v2844 = vsub.f32 %v2308, %v2843
      %2845 = vmatpush1.msra.mxu0 %v2844
      %2846 = vmatprep.subr.mxu0 0.0
      %v2847 = vand.u32 %v2309, 4294901760
      %v2848 = vsub.f32 %v2309, %v2847
      %2849 = vmatpush1.msra.mxu0 %v2848
      %2850 = vmatprep.subr.mxu0 0.0
      %v2851 = vand.u32 %v2310, 4294901760
      %v2852 = vsub.f32 %v2310, %v2851
      %2853 = vmatpush1.msra.mxu0 %v2852
      %2854 = vmatprep.subr.mxu0 0.0
      %v2855 = vand.u32 %v2311, 4294901760
      %v2856 = vsub.f32 %v2311, %v2855
      %2857 = vmatpush1.msra.mxu0 %v2856
      %2858 = vmatprep.subr.mxu0 0.0
      %2859 = vmatpush1.msra.mxu0 0.0
      %2860 = vmatprep.subr.mxu0 0.0
      %2861 = vmatpush1.msra.mxu0 0.0
      %2862 = vmatprep.subr.mxu0 0.0
      %2863 = vmatpush1.msra.mxu0 0.0
      %2864 = vmatprep.subr.mxu0 0.0
      %2865 = vmatpush1.msra.mxu0 0.0
      %2866 = vmatprep.subr.mxu0 0.0
      %2867 = vmatpush1.msra.mxu0 0.0
      %2868 = vmatprep.subr.mxu0 0.0
      %2869 = vmatpush1.msra.mxu0 0.0
      %2870 = vmatprep.subr.mxu0 0.0
      %2871 = vmatpush1.msra.mxu0 0.0
      %2872 = vmatprep.subr.mxu0 0.0
      %2873 = vmatpush1.msra.mxu0 0.0
      %2874 = vmatprep.subr.mxu0 0.0
      %2875 = vmatpush1.msra.mxu0 0.0
      %2876 = vmatprep.subr.mxu0 0.0
      %2877 = vmatpush1.msra.mxu0 0.0
      %2878 = vmatprep.subr.mxu0 0.0
      %2879 = vmatpush1.msra.mxu0 0.0
      %2880 = vmatprep.subr.mxu0 0.0
      %2881 = vmatpush1.msra.mxu0 0.0
      %2882 = vmatprep.subr.mxu0 0.0
      %2883 = vmatpush1.msra.mxu0 0.0
      %2884 = vmatprep.subr.mxu0 0.0
      %2885 = vmatpush1.msra.mxu0 0.0
      %2886 = vmatprep.subr.mxu0 0.0
      %2887 = vmatpush1.msra.mxu0 0.0
      %2888 = vmatprep.subr.mxu0 0.0
      %2889 = vmatpush1.msra.mxu0 0.0
      %2890 = vmatprep.mubr.f32.mxu0 0.0
      %v2891 = vand.u32 %v2056, 4294901760
      %v2892 = vsub.f32 %v2056, %v2891
      %2893 = vmatmul.mubr.f32.gmra.mrb[0].mxu0 %v2892
      %v2894 = vpop.f32.mrb[0].mxu0
      %v2895 = vadd.f32 %v2701, %v2894
      %v2896 = vpop.f32.mrb[0].mxu0
      %2897 = vmatprep.mubr.f32.mxu0 0.0
      %v2898 = vand.u32 %v2058, 4294901760
      %v2899 = vsub.f32 %v2058, %v2898
      %2900 = vmatmul.mubr.f32.gmra.mrb[0].mxu0 %v2899
      %v2901 = vpop.f32.mrb[0].mxu0
      %v2902 = vadd.f32 %v2707, %v2901
      %v2903 = vpop.f32.mrb[0].mxu0
      %2904 = vmatprep.mubr.f32.mxu0 0.0
      %v2905 = vand.u32 %v2060, 4294901760
      %v2906 = vsub.f32 %v2060, %v2905
      %2907 = vmatmul.mubr.f32.gmra.mrb[0].mxu0 %v2906
      %v2908 = vpop.f32.mrb[0].mxu0
      %v2909 = vadd.f32 %v2713, %v2908
      %v2910 = vpop.f32.mrb[0].mxu0
      %2911 = vmatprep.mubr.f32.mxu0 0.0
      %v2912 = vand.u32 %v2062, 4294901760
      %v2913 = vsub.f32 %v2062, %v2912
      %2914 = vmatmul.mubr.f32.gmra.mrb[0].mxu0 %v2913
      %v2915 = vpop.f32.mrb[0].mxu0
      %v2916 = vadd.f32 %v2719, %v2915
      %v2917 = vpop.f32.mrb[0].mxu0
      %2918 = vmatprep.mubr.f32.mxu0 0.0
      %v2919 = vand.u32 %v2064, 4294901760
      %v2920 = vsub.f32 %v2064, %v2919
      %2921 = vmatmul.mubr.f32.gmra.mrb[0].mxu0 %v2920
      %v2922 = vpop.f32.mrb[0].mxu0
      %v2923 = vadd.f32 %v2725, %v2922
      %v2924 = vpop.f32.mrb[0].mxu0
      %2925 = vmatprep.mubr.f32.mxu0 0.0
      %v2926 = vand.u32 %v2066, 4294901760
      %v2927 = vsub.f32 %v2066, %v2926
      %2928 = vmatmul.mubr.f32.gmra.mrb[0].mxu0 %v2927
      %v2929 = vpop.f32.mrb[0].mxu0
      %v2930 = vadd.f32 %v2731, %v2929
      %v2931 = vpop.f32.mrb[0].mxu0
      %2932 = vmatprep.mubr.f32.mxu0 0.0
      %v2933 = vand.u32 %v2068, 4294901760
      %v2934 = vsub.f32 %v2068, %v2933
      %2935 = vmatmul.mubr.f32.gmra.mrb[0].mxu0 %v2934
      %v2936 = vpop.f32.mrb[0].mxu0
      %v2937 = vadd.f32 %v2737, %v2936
      %v2938 = vpop.f32.mrb[0].mxu0
      %2939 = vmatprep.mubr.f32.mxu0 0.0
      %v2940 = vand.u32 %v2070, 4294901760
      %v2941 = vsub.f32 %v2070, %v2940
      %2942 = vmatmul.mubr.f32.gmra.mrb[0].mxu0 %v2941
      %v2943 = vpop.f32.mrb[0].mxu0
      %v2944 = vadd.f32 %v2743, %v2943
      %v2945 = vpop.f32.mrb[0].mxu0
      %2946 = vmatprep.mubr.f32.mxu0 0.0
      %v2947 = vand.u32 %v2072, 4294901760
      %v2948 = vsub.f32 %v2072, %v2947
      %2949 = vmatmul.mubr.f32.gmra.mrb[0].mxu0 %v2948
      %v2950 = vpop.f32.mrb[0].mxu0
      %v2951 = vadd.f32 %v2749, %v2950
      %v2952 = vpop.f32.mrb[0].mxu0
      %2953 = vmatprep.mubr.f32.mxu0 0.0
      %v2954 = vand.u32 %v2074, 4294901760
      %v2955 = vsub.f32 %v2074, %v2954
      %2956 = vmatmul.mubr.f32.gmra.mrb[0].mxu0 %v2955
      %v2957 = vpop.f32.mrb[0].mxu0
      %v2958 = vadd.f32 %v2755, %v2957
      %v2959 = vpop.f32.mrb[0].mxu0
      %2960 = vmatprep.mubr.f32.mxu0 0.0
      %v2961 = vand.u32 %v2076, 4294901760
      %v2962 = vsub.f32 %v2076, %v2961
      %2963 = vmatmul.mubr.f32.gmra.mrb[0].mxu0 %v2962
      %v2964 = vpop.f32.mrb[0].mxu0
      %v2965 = vadd.f32 %v2761, %v2964
      %v2966 = vpop.f32.mrb[0].mxu0
      %2967 = vmatprep.mubr.f32.mxu0 0.0
      %v2968 = vand.u32 %v2078, 4294901760
      %v2969 = vsub.f32 %v2078, %v2968
      %2970 = vmatmul.mubr.f32.gmra.mrb[0].mxu0 %v2969
      %v2971 = vpop.f32.mrb[0].mxu0
      %v2972 = vadd.f32 %v2767, %v2971
      %v2973 = vpop.f32.mrb[0].mxu0
      %2974 = vmatprep.mubr.f32.mxu0 0.0
      %v2975 = vand.u32 %v2080, 4294901760
      %v2976 = vsub.f32 %v2080, %v2975
      %2977 = vmatmul.mubr.f32.gmra.mrb[0].mxu0 %v2976
      %v2978 = vpop.f32.mrb[0].mxu0
      %v2979 = vadd.f32 %v2773, %v2978
      %v2980 = vpop.f32.mrb[0].mxu0
      %2981 = vmatprep.mubr.f32.mxu0 0.0
      %v2982 = vand.u32 %v2082, 4294901760
      %v2983 = vsub.f32 %v2082, %v2982
      %2984 = vmatmul.mubr.f32.gmra.mrb[0].mxu0 %v2983
      %v2985 = vpop.f32.mrb[0].mxu0
      %v2986 = vadd.f32 %v2779, %v2985
      %v2987 = vpop.f32.mrb[0].mxu0
      %2988 = vmatprep.mubr.f32.mxu0 0.0
      %v2989 = vand.u32 %v2084, 4294901760
      %v2990 = vsub.f32 %v2084, %v2989
      %2991 = vmatmul.mubr.f32.gmra.mrb[0].mxu0 %v2990
      %v2992 = vpop.f32.mrb[0].mxu0
      %v2993 = vadd.f32 %v2785, %v2992
      %v2994 = vpop.f32.mrb[0].mxu0
      %2995 = vmatprep.mubr.f32.mxu0 0.0
      %v2996 = vand.u32 %v2086, 4294901760
      %v2997 = vsub.f32 %v2086, %v2996
      %2998 = vmatmul.mubr.f32.gmra.mrb[0].mxu0 %v2997
      %v2999 = vpop.f32.mrb[0].mxu0
      %v3000 = vadd.f32 %v2791, %v2999
      %v3001 = vpop.f32.mrb[0].mxu0
      %3002 = vdwg.mxu0
      %3003 = vmatprep.subr.mxu0 0.0
      %v3004 = vand.u32 %v2296, 4294901760
      %3005 = vmatpush1.msra.mxu0 %v3004
      %3006 = vmatprep.subr.mxu0 0.0
      %v3007 = vand.u32 %v2297, 4294901760
      %3008 = vmatpush1.msra.mxu0 %v3007
      %3009 = vmatprep.subr.mxu0 0.0
      %v3010 = vand.u32 %v2298, 4294901760
      %3011 = vmatpush1.msra.mxu0 %v3010
      %3012 = vmatprep.subr.mxu0 0.0
      %v3013 = vand.u32 %v2299, 4294901760
      %3014 = vmatpush1.msra.mxu0 %v3013
      %3015 = vmatprep.subr.mxu0 0.0
      %v3016 = vand.u32 %v2300, 4294901760
      %3017 = vmatpush1.msra.mxu0 %v3016
      %3018 = vmatprep.subr.mxu0 0.0
      %v3019 = vand.u32 %v2301, 4294901760
      %3020 = vmatpush1.msra.mxu0 %v3019
      %3021 = vmatprep.subr.mxu0 0.0
      %v3022 = vand.u32 %v2302, 4294901760
      %3023 = vmatpush1.msra.mxu0 %v3022
      %3024 = vmatprep.subr.mxu0 0.0
      %v3025 = vand.u32 %v2303, 4294901760
      %3026 = vmatpush1.msra.mxu0 %v3025
      %3027 = vmatprep.subr.mxu0 0.0
      %v3028 = vand.u32 %v2304, 4294901760
      %3029 = vmatpush1.msra.mxu0 %v3028
      %3030 = vmatprep.subr.mxu0 0.0
      %v3031 = vand.u32 %v2305, 4294901760
      %3032 = vmatpush1.msra.mxu0 %v3031
      %3033 = vmatprep.subr.mxu0 0.0
      %v3034 = vand.u32 %v2306, 4294901760
      %3035 = vmatpush1.msra.mxu0 %v3034
      %3036 = vmatprep.subr.mxu0 0.0
      %v3037 = vand.u32 %v2307, 4294901760
      %3038 = vmatpush1.msra.mxu0 %v3037
      %3039 = vmatprep.subr.mxu0 0.0
      %v3040 = vand.u32 %v2308, 4294901760
      %3041 = vmatpush1.msra.mxu0 %v3040
      %3042 = vmatprep.subr.mxu0 0.0
      %v3043 = vand.u32 %v2309, 4294901760
      %3044 = vmatpush1.msra.mxu0 %v3043
      %3045 = vmatprep.subr.mxu0 0.0
      %v3046 = vand.u32 %v2310, 4294901760
      %3047 = vmatpush1.msra.mxu0 %v3046
      %3048 = vmatprep.subr.mxu0 0.0
      %v3049 = vand.u32 %v2311, 4294901760
      %3050 = vmatpush1.msra.mxu0 %v3049
      %3051 = vmatprep.subr.mxu0 0.0
      %3052 = vmatpush1.msra.mxu0 0.0
      %3053 = vmatprep.subr.mxu0 0.0
      %3054 = vmatpush1.msra.mxu0 0.0
      %3055 = vmatprep.subr.mxu0 0.0
      %3056 = vmatpush1.msra.mxu0 0.0
      %3057 = vmatprep.subr.mxu0 0.0
      %3058 = vmatpush1.msra.mxu0 0.0
      %3059 = vmatprep.subr.mxu0 0.0
      %3060 = vmatpush1.msra.mxu0 0.0
      %3061 = vmatprep.subr.mxu0 0.0
      %3062 = vmatpush1.msra.mxu0 0.0
      %3063 = vmatprep.subr.mxu0 0.0
      %3064 = vmatpush1.msra.mxu0 0.0
      %3065 = vmatprep.subr.mxu0 0.0
      %3066 = vmatpush1.msra.mxu0 0.0
      %3067 = vmatprep.subr.mxu0 0.0
      %3068 = vmatpush1.msra.mxu0 0.0
      %3069 = vmatprep.subr.mxu0 0.0
      %3070 = vmatpush1.msra.mxu0 0.0
      %3071 = vmatprep.subr.mxu0 0.0
      %3072 = vmatpush1.msra.mxu0 0.0
      %3073 = vmatprep.subr.mxu0 0.0
      %3074 = vmatpush1.msra.mxu0 0.0
      %3075 = vmatprep.subr.mxu0 0.0
      %3076 = vmatpush1.msra.mxu0 0.0
      %3077 = vmatprep.subr.mxu0 0.0
      %3078 = vmatpush1.msra.mxu0 0.0
      %3079 = vmatprep.subr.mxu0 0.0
      %3080 = vmatpush1.msra.mxu0 0.0
      %3081 = vmatprep.subr.mxu0 0.0
      %3082 = vmatpush1.msra.mxu0 0.0
      %3083 = vmatprep.mubr.f32.mxu0 0.0
      %v3084 = vand.u32 %v2056, 4294901760
      %v3085 = vsub.f32 %v2056, %v3084
      %v3086 = vand.u32 %v3085, 4294901760
      %3087 = vmatmul.mubr.f32.gmra.mrb[0].mxu0 %v3086
      %v3088 = vpop.f32.mrb[0].mxu0
      %v3089 = vadd.f32 %v2895, %v3088
      %v3090 = vpop.f32.mrb[0].mxu0
      %3091 = vmatprep.mubr.f32.mxu0 0.0
      %v3092 = vand.u32 %v2058, 4294901760
      %v3093 = vsub.f32 %v2058, %v3092
      %v3094 = vand.u32 %v3093, 4294901760
      %3095 = vmatmul.mubr.f32.gmra.mrb[0].mxu0 %v3094
      %v3096 = vpop.f32.mrb[0].mxu0
      %v3097 = vadd.f32 %v2902, %v3096
      %v3098 = vpop.f32.mrb[0].mxu0
      %3099 = vmatprep.mubr.f32.mxu0 0.0
      %v3100 = vand.u32 %v2060, 4294901760
      %v3101 = vsub.f32 %v2060, %v3100
      %v3102 = vand.u32 %v3101, 4294901760
      %3103 = vmatmul.mubr.f32.gmra.mrb[0].mxu0 %v3102
      %v3104 = vpop.f32.mrb[0].mxu0
      %v3105 = vadd.f32 %v2909, %v3104
      %v3106 = vpop.f32.mrb[0].mxu0
      %3107 = vmatprep.mubr.f32.mxu0 0.0
      %v3108 = vand.u32 %v2062, 4294901760
      %v3109 = vsub.f32 %v2062, %v3108
      %v3110 = vand.u32 %v3109, 4294901760
      %3111 = vmatmul.mubr.f32.gmra.mrb[0].mxu0 %v3110
      %v3112 = vpop.f32.mrb[0].mxu0
      %v3113 = vadd.f32 %v2916, %v3112
      %v3114 = vpop.f32.mrb[0].mxu0
      %3115 = vmatprep.mubr.f32.mxu0 0.0
      %v3116 = vand.u32 %v2064, 4294901760
      %v3117 = vsub.f32 %v2064, %v3116
      %v3118 = vand.u32 %v3117, 4294901760
      %3119 = vmatmul.mubr.f32.gmra.mrb[0].mxu0 %v3118
      %v3120 = vpop.f32.mrb[0].mxu0
      %v3121 = vadd.f32 %v2923, %v3120
      %v3122 = vpop.f32.mrb[0].mxu0
      %3123 = vmatprep.mubr.f32.mxu0 0.0
      %v3124 = vand.u32 %v2066, 4294901760
      %v3125 = vsub.f32 %v2066, %v3124
      %v3126 = vand.u32 %v3125, 4294901760
      %3127 = vmatmul.mubr.f32.gmra.mrb[0].mxu0 %v3126
      %v3128 = vpop.f32.mrb[0].mxu0
      %v3129 = vadd.f32 %v2930, %v3128
      %v3130 = vpop.f32.mrb[0].mxu0
      %3131 = vmatprep.mubr.f32.mxu0 0.0
      %v3132 = vand.u32 %v2068, 4294901760
      %v3133 = vsub.f32 %v2068, %v3132
      %v3134 = vand.u32 %v3133, 4294901760
      %3135 = vmatmul.mubr.f32.gmra.mrb[0].mxu0 %v3134
      %v3136 = vpop.f32.mrb[0].mxu0
      %v3137 = vadd.f32 %v2937, %v3136
      %v3138 = vpop.f32.mrb[0].mxu0
      %3139 = vmatprep.mubr.f32.mxu0 0.0
      %v3140 = vand.u32 %v2070, 4294901760
      %v3141 = vsub.f32 %v2070, %v3140
      %v3142 = vand.u32 %v3141, 4294901760
      %3143 = vmatmul.mubr.f32.gmra.mrb[0].mxu0 %v3142
      %v3144 = vpop.f32.mrb[0].mxu0
      %v3145 = vadd.f32 %v2944, %v3144
      %v3146 = vpop.f32.mrb[0].mxu0
      %3147 = vmatprep.mubr.f32.mxu0 0.0
      %v3148 = vand.u32 %v2072, 4294901760
      %v3149 = vsub.f32 %v2072, %v3148
      %v3150 = vand.u32 %v3149, 4294901760
      %3151 = vmatmul.mubr.f32.gmra.mrb[0].mxu0 %v3150
      %v3152 = vpop.f32.mrb[0].mxu0
      %v3153 = vadd.f32 %v2951, %v3152
      %v3154 = vpop.f32.mrb[0].mxu0
      %3155 = vmatprep.mubr.f32.mxu0 0.0
      %v3156 = vand.u32 %v2074, 4294901760
      %v3157 = vsub.f32 %v2074, %v3156
      %v3158 = vand.u32 %v3157, 4294901760
      %3159 = vmatmul.mubr.f32.gmra.mrb[0].mxu0 %v3158
      %v3160 = vpop.f32.mrb[0].mxu0
      %v3161 = vadd.f32 %v2958, %v3160
      %v3162 = vpop.f32.mrb[0].mxu0
      %3163 = vmatprep.mubr.f32.mxu0 0.0
      %v3164 = vand.u32 %v2076, 4294901760
      %v3165 = vsub.f32 %v2076, %v3164
      %v3166 = vand.u32 %v3165, 4294901760
      %3167 = vmatmul.mubr.f32.gmra.mrb[0].mxu0 %v3166
      %v3168 = vpop.f32.mrb[0].mxu0
      %v3169 = vadd.f32 %v2965, %v3168
      %v3170 = vpop.f32.mrb[0].mxu0
      %3171 = vmatprep.mubr.f32.mxu0 0.0
      %v3172 = vand.u32 %v2078, 4294901760
      %v3173 = vsub.f32 %v2078, %v3172
      %v3174 = vand.u32 %v3173, 4294901760
      %3175 = vmatmul.mubr.f32.gmra.mrb[0].mxu0 %v3174
      %v3176 = vpop.f32.mrb[0].mxu0
      %v3177 = vadd.f32 %v2972, %v3176
      %v3178 = vpop.f32.mrb[0].mxu0
      %3179 = vmatprep.mubr.f32.mxu0 0.0
      %v3180 = vand.u32 %v2080, 4294901760
      %v3181 = vsub.f32 %v2080, %v3180
      %v3182 = vand.u32 %v3181, 4294901760
      %3183 = vmatmul.mubr.f32.gmra.mrb[0].mxu0 %v3182
      %v3184 = vpop.f32.mrb[0].mxu0
      %v3185 = vadd.f32 %v2979, %v3184
      %v3186 = vpop.f32.mrb[0].mxu0
      %3187 = vmatprep.mubr.f32.mxu0 0.0
      %v3188 = vand.u32 %v2082, 4294901760
      %v3189 = vsub.f32 %v2082, %v3188
      %v3190 = vand.u32 %v3189, 4294901760
      %3191 = vmatmul.mubr.f32.gmra.mrb[0].mxu0 %v3190
      %v3192 = vpop.f32.mrb[0].mxu0
      %v3193 = vadd.f32 %v2986, %v3192
      %v3194 = vpop.f32.mrb[0].mxu0
      %3195 = vmatprep.mubr.f32.mxu0 0.0
      %v3196 = vand.u32 %v2084, 4294901760
      %v3197 = vsub.f32 %v2084, %v3196
      %v3198 = vand.u32 %v3197, 4294901760
      %3199 = vmatmul.mubr.f32.gmra.mrb[0].mxu0 %v3198
      %v3200 = vpop.f32.mrb[0].mxu0
      %v3201 = vadd.f32 %v2993, %v3200
      %v3202 = vpop.f32.mrb[0].mxu0
      %3203 = vmatprep.mubr.f32.mxu0 0.0
      %v3204 = vand.u32 %v2086, 4294901760
      %v3205 = vsub.f32 %v2086, %v3204
      %v3206 = vand.u32 %v3205, 4294901760
      %3207 = vmatmul.mubr.f32.gmra.mrb[0].mxu0 %v3206
      %v3208 = vpop.f32.mrb[0].mxu0
      %v3209 = vadd.f32 %v3000, %v3208
      %v3210 = vpop.f32.mrb[0].mxu0
      %3211 = vdwg.mxu0
      %3212 = vmatprep.subr.mxu0 0.0
      %v3213 = vand.u32 %v2296, 4294901760
      %v3214 = vsub.f32 %v2296, %v3213
      %v3215 = vand.u32 %v3214, 4294901760
      %3216 = vmatpush1.msra.mxu0 %v3215
      %3217 = vmatprep.subr.mxu0 0.0
      %v3218 = vand.u32 %v2297, 4294901760
      %v3219 = vsub.f32 %v2297, %v3218
      %v3220 = vand.u32 %v3219, 4294901760
      %3221 = vmatpush1.msra.mxu0 %v3220
      %3222 = vmatprep.subr.mxu0 0.0
      %v3223 = vand.u32 %v2298, 4294901760
      %v3224 = vsub.f32 %v2298, %v3223
      %v3225 = vand.u32 %v3224, 4294901760
      %3226 = vmatpush1.msra.mxu0 %v3225
      %3227 = vmatprep.subr.mxu0 0.0
      %v3228 = vand.u32 %v2299, 4294901760
      %v3229 = vsub.f32 %v2299, %v3228
      %v3230 = vand.u32 %v3229, 4294901760
      %3231 = vmatpush1.msra.mxu0 %v3230
      %3232 = vmatprep.subr.mxu0 0.0
      %v3233 = vand.u32 %v2300, 4294901760
      %v3234 = vsub.f32 %v2300, %v3233
      %v3235 = vand.u32 %v3234, 4294901760
      %3236 = vmatpush1.msra.mxu0 %v3235
      %3237 = vmatprep.subr.mxu0 0.0
      %v3238 = vand.u32 %v2301, 4294901760
      %v3239 = vsub.f32 %v2301, %v3238
      %v3240 = vand.u32 %v3239, 4294901760
      %3241 = vmatpush1.msra.mxu0 %v3240
      %3242 = vmatprep.subr.mxu0 0.0
      %v3243 = vand.u32 %v2302, 4294901760
      %v3244 = vsub.f32 %v2302, %v3243
      %v3245 = vand.u32 %v3244, 4294901760
      %3246 = vmatpush1.msra.mxu0 %v3245
      %3247 = vmatprep.subr.mxu0 0.0
      %v3248 = vand.u32 %v2303, 4294901760
      %v3249 = vsub.f32 %v2303, %v3248
      %v3250 = vand.u32 %v3249, 4294901760
      %3251 = vmatpush1.msra.mxu0 %v3250
      %3252 = vmatprep.subr.mxu0 0.0
      %v3253 = vand.u32 %v2304, 4294901760
      %v3254 = vsub.f32 %v2304, %v3253
      %v3255 = vand.u32 %v3254, 4294901760
      %3256 = vmatpush1.msra.mxu0 %v3255
      %3257 = vmatprep.subr.mxu0 0.0
      %v3258 = vand.u32 %v2305, 4294901760
      %v3259 = vsub.f32 %v2305, %v3258
      %v3260 = vand.u32 %v3259, 4294901760
      %3261 = vmatpush1.msra.mxu0 %v3260
      %3262 = vmatprep.subr.mxu0 0.0
      %v3263 = vand.u32 %v2306, 4294901760
      %v3264 = vsub.f32 %v2306, %v3263
      %v3265 = vand.u32 %v3264, 4294901760
      %3266 = vmatpush1.msra.mxu0 %v3265
      %3267 = vmatprep.subr.mxu0 0.0
      %v3268 = vand.u32 %v2307, 4294901760
      %v3269 = vsub.f32 %v2307, %v3268
      %v3270 = vand.u32 %v3269, 4294901760
      %3271 = vmatpush1.msra.mxu0 %v3270
      %3272 = vmatprep.subr.mxu0 0.0
      %v3273 = vand.u32 %v2308, 4294901760
      %v3274 = vsub.f32 %v2308, %v3273
      %v3275 = vand.u32 %v3274, 4294901760
      %3276 = vmatpush1.msra.mxu0 %v3275
      %3277 = vmatprep.subr.mxu0 0.0
      %v3278 = vand.u32 %v2309, 4294901760
      %v3279 = vsub.f32 %v2309, %v3278
      %v3280 = vand.u32 %v3279, 4294901760
      %3281 = vmatpush1.msra.mxu0 %v3280
      %3282 = vmatprep.subr.mxu0 0.0
      %v3283 = vand.u32 %v2310, 4294901760
      %v3284 = vsub.f32 %v2310, %v3283
      %v3285 = vand.u32 %v3284, 4294901760
      %3286 = vmatpush1.msra.mxu0 %v3285
      %3287 = vmatprep.subr.mxu0 0.0
      %v3288 = vand.u32 %v2311, 4294901760
      %v3289 = vsub.f32 %v2311, %v3288
      %v3290 = vand.u32 %v3289, 4294901760
      %3291 = vmatpush1.msra.mxu0 %v3290
      %3292 = vmatprep.subr.mxu0 0.0
      %3293 = vmatpush1.msra.mxu0 0.0
      %3294 = vmatprep.subr.mxu0 0.0
      %3295 = vmatpush1.msra.mxu0 0.0
      %3296 = vmatprep.subr.mxu0 0.0
      %3297 = vmatpush1.msra.mxu0 0.0
      %3298 = vmatprep.subr.mxu0 0.0
      %3299 = vmatpush1.msra.mxu0 0.0
      %3300 = vmatprep.subr.mxu0 0.0
      %3301 = vmatpush1.msra.mxu0 0.0
      %3302 = vmatprep.subr.mxu0 0.0
      %3303 = vmatpush1.msra.mxu0 0.0
      %3304 = vmatprep.subr.mxu0 0.0
      %3305 = vmatpush1.msra.mxu0 0.0
      %3306 = vmatprep.subr.mxu0 0.0
      %3307 = vmatpush1.msra.mxu0 0.0
      %3308 = vmatprep.subr.mxu0 0.0
      %3309 = vmatpush1.msra.mxu0 0.0
      %3310 = vmatprep.subr.mxu0 0.0
      %3311 = vmatpush1.msra.mxu0 0.0
      %3312 = vmatprep.subr.mxu0 0.0
      %3313 = vmatpush1.msra.mxu0 0.0
      %3314 = vmatprep.subr.mxu0 0.0
      %3315 = vmatpush1.msra.mxu0 0.0
      %3316 = vmatprep.subr.mxu0 0.0
      %3317 = vmatpush1.msra.mxu0 0.0
      %3318 = vmatprep.subr.mxu0 0.0
      %3319 = vmatpush1.msra.mxu0 0.0
      %3320 = vmatprep.subr.mxu0 0.0
      %3321 = vmatpush1.msra.mxu0 0.0
      %3322 = vmatprep.subr.mxu0 0.0
      %3323 = vmatpush1.msra.mxu0 0.0
      %3324 = vmatprep.mubr.f32.mxu0 0.0
      %v3325 = vand.u32 %v2056, 4294901760
      %3326 = vmatmul.mubr.f32.gmra.mrb[0].mxu0 %v3325
      %v3327 = vpop.f32.mrb[0].mxu0
      %v3328 = vadd.f32 %v3089, %v3327
      %v3329 = vpop.f32.mrb[0].mxu0
      %3330 = vmatprep.mubr.f32.mxu0 0.0
      %v3331 = vand.u32 %v2058, 4294901760
      %3332 = vmatmul.mubr.f32.gmra.mrb[0].mxu0 %v3331
      %v3333 = vpop.f32.mrb[0].mxu0
      %v3334 = vadd.f32 %v3097, %v3333
      %v3335 = vpop.f32.mrb[0].mxu0
      %3336 = vmatprep.mubr.f32.mxu0 0.0
      %v3337 = vand.u32 %v2060, 4294901760
      %3338 = vmatmul.mubr.f32.gmra.mrb[0].mxu0 %v3337
      %v3339 = vpop.f32.mrb[0].mxu0
      %v3340 = vadd.f32 %v3105, %v3339
      %v3341 = vpop.f32.mrb[0].mxu0
      %3342 = vmatprep.mubr.f32.mxu0 0.0
      %v3343 = vand.u32 %v2062, 4294901760
      %3344 = vmatmul.mubr.f32.gmra.mrb[0].mxu0 %v3343
      %v3345 = vpop.f32.mrb[0].mxu0
      %v3346 = vadd.f32 %v3113, %v3345
      %v3347 = vpop.f32.mrb[0].mxu0
      %3348 = vmatprep.mubr.f32.mxu0 0.0
      %v3349 = vand.u32 %v2064, 4294901760
      %3350 = vmatmul.mubr.f32.gmra.mrb[0].mxu0 %v3349
      %v3351 = vpop.f32.mrb[0].mxu0
      %v3352 = vadd.f32 %v3121, %v3351
      %v3353 = vpop.f32.mrb[0].mxu0
      %3354 = vmatprep.mubr.f32.mxu0 0.0
      %v3355 = vand.u32 %v2066, 4294901760
      %3356 = vmatmul.mubr.f32.gmra.mrb[0].mxu0 %v3355
      %v3357 = vpop.f32.mrb[0].mxu0
      %v3358 = vadd.f32 %v3129, %v3357
      %v3359 = vpop.f32.mrb[0].mxu0
      %3360 = vmatprep.mubr.f32.mxu0 0.0
      %v3361 = vand.u32 %v2068, 4294901760
      %3362 = vmatmul.mubr.f32.gmra.mrb[0].mxu0 %v3361
      %v3363 = vpop.f32.mrb[0].mxu0
      %v3364 = vadd.f32 %v3137, %v3363
      %v3365 = vpop.f32.mrb[0].mxu0
      %3366 = vmatprep.mubr.f32.mxu0 0.0
      %v3367 = vand.u32 %v2070, 4294901760
      %3368 = vmatmul.mubr.f32.gmra.mrb[0].mxu0 %v3367
      %v3369 = vpop.f32.mrb[0].mxu0
      %v3370 = vadd.f32 %v3145, %v3369
      %v3371 = vpop.f32.mrb[0].mxu0
      %3372 = vmatprep.mubr.f32.mxu0 0.0
      %v3373 = vand.u32 %v2072, 4294901760
      %3374 = vmatmul.mubr.f32.gmra.mrb[0].mxu0 %v3373
      %v3375 = vpop.f32.mrb[0].mxu0
      %v3376 = vadd.f32 %v3153, %v3375
      %v3377 = vpop.f32.mrb[0].mxu0
      %3378 = vmatprep.mubr.f32.mxu0 0.0
      %v3379 = vand.u32 %v2074, 4294901760
      %3380 = vmatmul.mubr.f32.gmra.mrb[0].mxu0 %v3379
      %v3381 = vpop.f32.mrb[0].mxu0
      %v3382 = vadd.f32 %v3161, %v3381
      %v3383 = vpop.f32.mrb[0].mxu0
      %3384 = vmatprep.mubr.f32.mxu0 0.0
      %v3385 = vand.u32 %v2076, 4294901760
      %3386 = vmatmul.mubr.f32.gmra.mrb[0].mxu0 %v3385
      %v3387 = vpop.f32.mrb[0].mxu0
      %v3388 = vadd.f32 %v3169, %v3387
      %v3389 = vpop.f32.mrb[0].mxu0
      %3390 = vmatprep.mubr.f32.mxu0 0.0
      %v3391 = vand.u32 %v2078, 4294901760
      %3392 = vmatmul.mubr.f32.gmra.mrb[0].mxu0 %v3391
      %v3393 = vpop.f32.mrb[0].mxu0
      %v3394 = vadd.f32 %v3177, %v3393
      %v3395 = vpop.f32.mrb[0].mxu0
      %3396 = vmatprep.mubr.f32.mxu0 0.0
      %v3397 = vand.u32 %v2080, 4294901760
      %3398 = vmatmul.mubr.f32.gmra.mrb[0].mxu0 %v3397
      %v3399 = vpop.f32.mrb[0].mxu0
      %v3400 = vadd.f32 %v3185, %v3399
      %v3401 = vpop.f32.mrb[0].mxu0
      %3402 = vmatprep.mubr.f32.mxu0 0.0
      %v3403 = vand.u32 %v2082, 4294901760
      %3404 = vmatmul.mubr.f32.gmra.mrb[0].mxu0 %v3403
      %v3405 = vpop.f32.mrb[0].mxu0
      %v3406 = vadd.f32 %v3193, %v3405
      %v3407 = vpop.f32.mrb[0].mxu0
      %3408 = vmatprep.mubr.f32.mxu0 0.0
      %v3409 = vand.u32 %v2084, 4294901760
      %3410 = vmatmul.mubr.f32.gmra.mrb[0].mxu0 %v3409
      %v3411 = vpop.f32.mrb[0].mxu0
      %v3412 = vadd.f32 %v3201, %v3411
      %v3413 = vpop.f32.mrb[0].mxu0
      %3414 = vmatprep.mubr.f32.mxu0 0.0
      %v3415 = vand.u32 %v2086, 4294901760
      %3416 = vmatmul.mubr.f32.gmra.mrb[0].mxu0 %v3415
      %v3417 = vpop.f32.mrb[0].mxu0
      %v3418 = vadd.f32 %v3209, %v3417
      %v3419 = vpop.f32.mrb[0].mxu0
      %3420 = vdwg.mxu0
      %3421 = vmatprep.subr.mxu0 0.0
      %v3422 = vand.u32 %v2296, 4294901760
      %3423 = vmatpush1.msra.mxu0 %v3422
      %3424 = vmatprep.subr.mxu0 0.0
      %v3425 = vand.u32 %v2297, 4294901760
      %3426 = vmatpush1.msra.mxu0 %v3425
      %3427 = vmatprep.subr.mxu0 0.0
      %v3428 = vand.u32 %v2298, 4294901760
      %3429 = vmatpush1.msra.mxu0 %v3428
      %3430 = vmatprep.subr.mxu0 0.0
      %v3431 = vand.u32 %v2299, 4294901760
      %3432 = vmatpush1.msra.mxu0 %v3431
      %3433 = vmatprep.subr.mxu0 0.0
      %v3434 = vand.u32 %v2300, 4294901760
      %3435 = vmatpush1.msra.mxu0 %v3434
      %3436 = vmatprep.subr.mxu0 0.0
      %v3437 = vand.u32 %v2301, 4294901760
      %3438 = vmatpush1.msra.mxu0 %v3437
      %3439 = vmatprep.subr.mxu0 0.0
      %v3440 = vand.u32 %v2302, 4294901760
      %3441 = vmatpush1.msra.mxu0 %v3440
      %3442 = vmatprep.subr.mxu0 0.0
      %v3443 = vand.u32 %v2303, 4294901760
      %3444 = vmatpush1.msra.mxu0 %v3443
      %3445 = vmatprep.subr.mxu0 0.0
      %v3446 = vand.u32 %v2304, 4294901760
      %3447 = vmatpush1.msra.mxu0 %v3446
      %3448 = vmatprep.subr.mxu0 0.0
      %v3449 = vand.u32 %v2305, 4294901760
      %3450 = vmatpush1.msra.mxu0 %v3449
      %3451 = vmatprep.subr.mxu0 0.0
      %v3452 = vand.u32 %v2306, 4294901760
      %3453 = vmatpush1.msra.mxu0 %v3452
      %3454 = vmatprep.subr.mxu0 0.0
      %v3455 = vand.u32 %v2307, 4294901760
      %3456 = vmatpush1.msra.mxu0 %v3455
      %3457 = vmatprep.subr.mxu0 0.0
      %v3458 = vand.u32 %v2308, 4294901760
      %3459 = vmatpush1.msra.mxu0 %v3458
      %3460 = vmatprep.subr.mxu0 0.0
      %v3461 = vand.u32 %v2309, 4294901760
      %3462 = vmatpush1.msra.mxu0 %v3461
      %3463 = vmatprep.subr.mxu0 0.0
      %v3464 = vand.u32 %v2310, 4294901760
      %3465 = vmatpush1.msra.mxu0 %v3464
      %3466 = vmatprep.subr.mxu0 0.0
      %v3467 = vand.u32 %v2311, 4294901760
      %3468 = vmatpush1.msra.mxu0 %v3467
      %3469 = vmatprep.subr.mxu0 0.0
      %3470 = vmatpush1.msra.mxu0 0.0
      %3471 = vmatprep.subr.mxu0 0.0
      %3472 = vmatpush1.msra.mxu0 0.0
      %3473 = vmatprep.subr.mxu0 0.0
      %3474 = vmatpush1.msra.mxu0 0.0
      %3475 = vmatprep.subr.mxu0 0.0
      %3476 = vmatpush1.msra.mxu0 0.0
      %3477 = vmatprep.subr.mxu0 0.0
      %3478 = vmatpush1.msra.mxu0 0.0
      %3479 = vmatprep.subr.mxu0 0.0
      %3480 = vmatpush1.msra.mxu0 0.0
      %3481 = vmatprep.subr.mxu0 0.0
      %3482 = vmatpush1.msra.mxu0 0.0
      %3483 = vmatprep.subr.mxu0 0.0
      %3484 = vmatpush1.msra.mxu0 0.0
      %3485 = vmatprep.subr.mxu0 0.0
      %3486 = vmatpush1.msra.mxu0 0.0
      %3487 = vmatprep.subr.mxu0 0.0
      %3488 = vmatpush1.msra.mxu0 0.0
      %3489 = vmatprep.subr.mxu0 0.0
      %3490 = vmatpush1.msra.mxu0 0.0
      %3491 = vmatprep.subr.mxu0 0.0
      %3492 = vmatpush1.msra.mxu0 0.0
      %3493 = vmatprep.subr.mxu0 0.0
      %3494 = vmatpush1.msra.mxu0 0.0
      %3495 = vmatprep.subr.mxu0 0.0
      %3496 = vmatpush1.msra.mxu0 0.0
      %3497 = vmatprep.subr.mxu0 0.0
      %3498 = vmatpush1.msra.mxu0 0.0
      %3499 = vmatprep.subr.mxu0 0.0
      %3500 = vmatpush1.msra.mxu0 0.0
      %3501 = vmatprep.mubr.f32.mxu0 0.0
      %v3502 = vand.u32 %v2056, 4294901760
      %3503 = vmatmul.mubr.f32.gmra.mrb[0].mxu0 %v3502
      %v3504 = vpop.f32.mrb[0].mxu0
      %v3505 = vadd.f32 %v3328, %v3504
      %v3506 = vpop.f32.mrb[0].mxu0
      %3507 = vmatprep.mubr.f32.mxu0 0.0
      %v3508 = vand.u32 %v2058, 4294901760
      %3509 = vmatmul.mubr.f32.gmra.mrb[0].mxu0 %v3508
      %v3510 = vpop.f32.mrb[0].mxu0
      %v3511 = vadd.f32 %v3334, %v3510
      %v3512 = vpop.f32.mrb[0].mxu0
      %3513 = vmatprep.mubr.f32.mxu0 0.0
      %v3514 = vand.u32 %v2060, 4294901760
      %3515 = vmatmul.mubr.f32.gmra.mrb[0].mxu0 %v3514
      %v3516 = vpop.f32.mrb[0].mxu0
      %v3517 = vadd.f32 %v3340, %v3516
      %v3518 = vpop.f32.mrb[0].mxu0
      %3519 = vmatprep.mubr.f32.mxu0 0.0
      %v3520 = vand.u32 %v2062, 4294901760
      %3521 = vmatmul.mubr.f32.gmra.mrb[0].mxu0 %v3520
      %v3522 = vpop.f32.mrb[0].mxu0
      %v3523 = vadd.f32 %v3346, %v3522
      %v3524 = vpop.f32.mrb[0].mxu0
      %3525 = vmatprep.mubr.f32.mxu0 0.0
      %v3526 = vand.u32 %v2064, 4294901760
      %3527 = vmatmul.mubr.f32.gmra.mrb[0].mxu0 %v3526
      %v3528 = vpop.f32.mrb[0].mxu0
      %v3529 = vadd.f32 %v3352, %v3528
      %v3530 = vpop.f32.mrb[0].mxu0
      %3531 = vmatprep.mubr.f32.mxu0 0.0
      %v3532 = vand.u32 %v2066, 4294901760
      %3533 = vmatmul.mubr.f32.gmra.mrb[0].mxu0 %v3532
      %v3534 = vpop.f32.mrb[0].mxu0
      %v3535 = vadd.f32 %v3358, %v3534
      %v3536 = vpop.f32.mrb[0].mxu0
      %3537 = vmatprep.mubr.f32.mxu0 0.0
      %v3538 = vand.u32 %v2068, 4294901760
      %3539 = vmatmul.mubr.f32.gmra.mrb[0].mxu0 %v3538
      %v3540 = vpop.f32.mrb[0].mxu0
      %v3541 = vadd.f32 %v3364, %v3540
      %v3542 = vpop.f32.mrb[0].mxu0
      %3543 = vmatprep.mubr.f32.mxu0 0.0
      %v3544 = vand.u32 %v2070, 4294901760
      %3545 = vmatmul.mubr.f32.gmra.mrb[0].mxu0 %v3544
      %v3546 = vpop.f32.mrb[0].mxu0
      %v3547 = vadd.f32 %v3370, %v3546
      %v3548 = vpop.f32.mrb[0].mxu0
      %3549 = vmatprep.mubr.f32.mxu0 0.0
      %v3550 = vand.u32 %v2072, 4294901760
      %3551 = vmatmul.mubr.f32.gmra.mrb[0].mxu0 %v3550
      %v3552 = vpop.f32.mrb[0].mxu0
      %v3553 = vadd.f32 %v3376, %v3552
      %v3554 = vpop.f32.mrb[0].mxu0
      %3555 = vmatprep.mubr.f32.mxu0 0.0
      %v3556 = vand.u32 %v2074, 4294901760
      %3557 = vmatmul.mubr.f32.gmra.mrb[0].mxu0 %v3556
      %v3558 = vpop.f32.mrb[0].mxu0
      %v3559 = vadd.f32 %v3382, %v3558
      %v3560 = vpop.f32.mrb[0].mxu0
      %3561 = vmatprep.mubr.f32.mxu0 0.0
      %v3562 = vand.u32 %v2076, 4294901760
      %3563 = vmatmul.mubr.f32.gmra.mrb[0].mxu0 %v3562
      %v3564 = vpop.f32.mrb[0].mxu0
      %v3565 = vadd.f32 %v3388, %v3564
      %v3566 = vpop.f32.mrb[0].mxu0
      %3567 = vmatprep.mubr.f32.mxu0 0.0
      %v3568 = vand.u32 %v2078, 4294901760
      %3569 = vmatmul.mubr.f32.gmra.mrb[0].mxu0 %v3568
      %v3570 = vpop.f32.mrb[0].mxu0
      %v3571 = vadd.f32 %v3394, %v3570
      %v3572 = vpop.f32.mrb[0].mxu0
      %3573 = vmatprep.mubr.f32.mxu0 0.0
      %v3574 = vand.u32 %v2080, 4294901760
      %3575 = vmatmul.mubr.f32.gmra.mrb[0].mxu0 %v3574
      %v3576 = vpop.f32.mrb[0].mxu0
      %v3577 = vadd.f32 %v3400, %v3576
      %v3578 = vpop.f32.mrb[0].mxu0
      %3579 = vmatprep.mubr.f32.mxu0 0.0
      %v3580 = vand.u32 %v2082, 4294901760
      %3581 = vmatmul.mubr.f32.gmra.mrb[0].mxu0 %v3580
      %v3582 = vpop.f32.mrb[0].mxu0
      %v3583 = vadd.f32 %v3406, %v3582
      %v3584 = vpop.f32.mrb[0].mxu0
      %3585 = vmatprep.mubr.f32.mxu0 0.0
      %v3586 = vand.u32 %v2084, 4294901760
      %3587 = vmatmul.mubr.f32.gmra.mrb[0].mxu0 %v3586
      %v3588 = vpop.f32.mrb[0].mxu0
      %v3589 = vadd.f32 %v3412, %v3588
      %v3590 = vpop.f32.mrb[0].mxu0
      %3591 = vmatprep.mubr.f32.mxu0 0.0
      %v3592 = vand.u32 %v2086, 4294901760
      %3593 = vmatmul.mubr.f32.gmra.mrb[0].mxu0 %v3592
      %v3594 = vpop.f32.mrb[0].mxu0
      %v3595 = vadd.f32 %v3418, %v3594
      %v3596 = vpop.f32.mrb[0].mxu0
      %3597 = vdwg.mxu0
      %v3598 = vadd.f32 %v2280, %v3505
      %v3599 = vadd.f32 %v2281, %v3511
      %v3600 = vadd.f32 %v2282, %v3517
      %v3601 = vadd.f32 %v2283, %v3523
      %v3602 = vadd.f32 %v2284, %v3529
      %v3603 = vadd.f32 %v2285, %v3535
      %v3604 = vadd.f32 %v2286, %v3541
      %v3605 = vadd.f32 %v2287, %v3547
      %v3606 = vadd.f32 %v2288, %v3553
      %v3607 = vadd.f32 %v2289, %v3559
      %v3608 = vadd.f32 %v2290, %v3565
      %v3609 = vadd.f32 %v2291, %v3571
      %v3610 = vadd.f32 %v2292, %v3577
      %v3611 = vadd.f32 %v2293, %v3583
      %v3612 = vadd.f32 %v2294, %v3589
      %v3613 = vadd.f32 %v2295, %v3595
      %3614 = vst.msk [vmem:[#allocation4] sm:$0xff] %vm442, %v3598
      %3615 = vst.msk [vmem:[#allocation4 + $0x8] sm:$0xff] %vm442, %v3599
      %3616 = vst.msk [vmem:[#allocation4 + $0x10] sm:$0xff] %vm442, %v3600
      %3617 = vst.msk [vmem:[#allocation4 + $0x18] sm:$0xff] %vm442, %v3601
      %3618 = vst.msk [vmem:[#allocation4 + $0x20] sm:$0xff] %vm442, %v3602
      %3619 = vst.msk [vmem:[#allocation4 + $0x28] sm:$0xff] %vm442, %v3603
      %3620 = vst.msk [vmem:[#allocation4 + $0x30] sm:$0xff] %vm442, %v3604
      %3621 = vst.msk [vmem:[#allocation4 + $0x38] sm:$0xff] %vm442, %v3605
      %3622 = vst.msk [vmem:[#allocation4 + $0x40] sm:$0xff] %vm442, %v3606
      %3623 = vst.msk [vmem:[#allocation4 + $0x48] sm:$0xff] %vm442, %v3607
      %3624 = vst.msk [vmem:[#allocation4 + $0x50] sm:$0xff] %vm442, %v3608
      %3625 = vst.msk [vmem:[#allocation4 + $0x58] sm:$0xff] %vm442, %v3609
      %3626 = vst.msk [vmem:[#allocation4 + $0x60] sm:$0xff] %vm442, %v3610
      %3627 = vst.msk [vmem:[#allocation4 + $0x68] sm:$0xff] %vm442, %v3611
      %3628 = vst.msk [vmem:[#allocation4 + $0x70] sm:$0xff] %vm442, %v3612
      %3629 = vst.msk [vmem:[#allocation4 + $0x78] sm:$0xff] %vm442, %v3613
      %3630 = vst.msk [vmem:[#allocation2] sm:$0xff] %vm2167, %v1895
      %3631 = vst.msk [vmem:[#allocation2 + $0x8] sm:$0xff] %vm2167, %v1896
      %3632 = vst.msk [vmem:[#allocation2 + $0x10] sm:$0xff] %vm2167, %v1897
      %3633 = vst.msk [vmem:[#allocation2 + $0x18] sm:$0xff] %vm2167, %v1898
      %3634 = vst.msk [vmem:[#allocation2 + $0x20] sm:$0xff] %vm2167, %v1899
      %3635 = vst.msk [vmem:[#allocation2 + $0x28] sm:$0xff] %vm2167, %v1900
      %3636 = vst.msk [vmem:[#allocation2 + $0x30] sm:$0xff] %vm2167, %v1901
      %3637 = vst.msk [vmem:[#allocation2 + $0x38] sm:$0xff] %vm2167, %v1902
      %3638 = vst.msk [vmem:[#allocation2 + $0x40] sm:$0xff] %vm2167, %v1903
      %3639 = vst.msk [vmem:[#allocation2 + $0x48] sm:$0xff] %vm2167, %v1904
      %3640 = vst.msk [vmem:[#allocation2 + $0x50] sm:$0xff] %vm2167, %v1905
      %3641 = vst.msk [vmem:[#allocation2 + $0x58] sm:$0xff] %vm2167, %v1906
      %3642 = vst.msk [vmem:[#allocation2 + $0x60] sm:$0xff] %vm2167, %v1907
      %3643 = vst.msk [vmem:[#allocation2 + $0x68] sm:$0xff] %vm2167, %v1908
      %3644 = vst.msk [vmem:[#allocation2 + $0x70] sm:$0xff] %vm2167, %v1909
      %3645 = vst.msk [vmem:[#allocation2 + $0x78] sm:$0xff] %vm2167, %v1910
      // Predicated region
      $region37: #{tpu_custom_call.1} parent=31 // pred_check
        %p3646 = pneg %p340
      $region38: #{tpu_custom_call.1} parent=31 // pred_check_branch
        %3648 = sbr.rel (%p3646) target = $region40
      $region39: #{tpu_custom_call.1} parent=31 // pred_region
        %v3649 = vld [vmem:[#allocation3] sm:$0xff]
        %v3650 = vld [vmem:[#allocation3 + $0x8] sm:$0xff]
        %v3651 = vld [vmem:[#allocation3 + $0x10] sm:$0xff]
        %v3652 = vld [vmem:[#allocation3 + $0x18] sm:$0xff]
        %v3653 = vld [vmem:[#allocation3 + $0x20] sm:$0xff]
        %v3654 = vld [vmem:[#allocation3 + $0x28] sm:$0xff]
        %v3655 = vld [vmem:[#allocation3 + $0x30] sm:$0xff]
        %v3656 = vld [vmem:[#allocation3 + $0x38] sm:$0xff]
        %v3657 = vld [vmem:[#allocation3 + $0x40] sm:$0xff]
        %v3658 = vld [vmem:[#allocation3 + $0x48] sm:$0xff]
        %v3659 = vld [vmem:[#allocation3 + $0x50] sm:$0xff]
        %v3660 = vld [vmem:[#allocation3 + $0x58] sm:$0xff]
        %v3661 = vld [vmem:[#allocation3 + $0x60] sm:$0xff]
        %v3662 = vld [vmem:[#allocation3 + $0x68] sm:$0xff]
        %v3663 = vld [vmem:[#allocation3 + $0x70] sm:$0xff]
        %v3664 = vld [vmem:[#allocation3 + $0x78] sm:$0xff]
        %v3665 = vrcp.pop %v3649
        %v3666 = vrcp.pop %v3650
        %v3667 = vrcp.pop %v3651
        %v3668 = vrcp.pop %v3652
        %v3669 = vrcp.pop %v3653
        %v3670 = vrcp.pop %v3654
        %v3671 = vrcp.pop %v3655
        %v3672 = vrcp.pop %v3656
        %v3673 = vrcp.pop %v3657
        %v3674 = vrcp.pop %v3658
        %v3675 = vrcp.pop %v3659
        %v3676 = vrcp.pop %v3660
        %v3677 = vrcp.pop %v3661
        %v3678 = vrcp.pop %v3662
        %v3679 = vrcp.pop %v3663
        %v3680 = vrcp.pop %v3664
        %v3681 = vld [vmem:[#allocation4] sm:$0xff]
        %v3682 = vld [vmem:[#allocation4 + $0x8] sm:$0xff]
        %v3683 = vld [vmem:[#allocation4 + $0x10] sm:$0xff]
        %v3684 = vld [vmem:[#allocation4 + $0x18] sm:$0xff]
        %v3685 = vld [vmem:[#allocation4 + $0x20] sm:$0xff]
        %v3686 = vld [vmem:[#allocation4 + $0x28] sm:$0xff]
        %v3687 = vld [vmem:[#allocation4 + $0x30] sm:$0xff]
        %v3688 = vld [vmem:[#allocation4 + $0x38] sm:$0xff]
        %v3689 = vld [vmem:[#allocation4 + $0x40] sm:$0xff]
        %v3690 = vld [vmem:[#allocation4 + $0x48] sm:$0xff]
        %v3691 = vld [vmem:[#allocation4 + $0x50] sm:$0xff]
        %v3692 = vld [vmem:[#allocation4 + $0x58] sm:$0xff]
        %v3693 = vld [vmem:[#allocation4 + $0x60] sm:$0xff]
        %v3694 = vld [vmem:[#allocation4 + $0x68] sm:$0xff]
        %v3695 = vld [vmem:[#allocation4 + $0x70] sm:$0xff]
        %v3696 = vld [vmem:[#allocation4 + $0x78] sm:$0xff]
        %3698 = vset.pattern.permute.xlu0 0
        %3699 = vperm.xlu0 %3698, %v3665
        %v3700 = vpop.permute.xlu0 %3699
        %3703 = vset.pattern.permute.xlu0 0
        %3704 = vperm.xlu0 %3703, %v3666
        %v3705 = vpop.permute.xlu0 %3704
        %3708 = vset.pattern.permute.xlu0 0
        %3709 = vperm.xlu0 %3708, %v3667
        %v3710 = vpop.permute.xlu0 %3709
        %3713 = vset.pattern.permute.xlu0 0
        %3714 = vperm.xlu0 %3713, %v3668
        %v3715 = vpop.permute.xlu0 %3714
        %3718 = vset.pattern.permute.xlu0 0
        %3719 = vperm.xlu0 %3718, %v3669
        %v3720 = vpop.permute.xlu0 %3719
        %3723 = vset.pattern.permute.xlu0 0
        %3724 = vperm.xlu0 %3723, %v3670
        %v3725 = vpop.permute.xlu0 %3724
        %3728 = vset.pattern.permute.xlu0 0
        %3729 = vperm.xlu0 %3728, %v3671
        %v3730 = vpop.permute.xlu0 %3729
        %3733 = vset.pattern.permute.xlu0 0
        %3734 = vperm.xlu0 %3733, %v3672
        %v3735 = vpop.permute.xlu0 %3734
        %3738 = vset.pattern.permute.xlu0 0
        %3739 = vperm.xlu0 %3738, %v3673
        %v3740 = vpop.permute.xlu0 %3739
        %3743 = vset.pattern.permute.xlu0 0
        %3744 = vperm.xlu0 %3743, %v3674
        %v3745 = vpop.permute.xlu0 %3744
        %3748 = vset.pattern.permute.xlu0 0
        %3749 = vperm.xlu0 %3748, %v3675
        %v3750 = vpop.permute.xlu0 %3749
        %3753 = vset.pattern.permute.xlu0 0
        %3754 = vperm.xlu0 %3753, %v3676
        %v3755 = vpop.permute.xlu0 %3754
        %3758 = vset.pattern.permute.xlu0 0
        %3759 = vperm.xlu0 %3758, %v3677
        %v3760 = vpop.permute.xlu0 %3759
        %3763 = vset.pattern.permute.xlu0 0
        %3764 = vperm.xlu0 %3763, %v3678
        %v3765 = vpop.permute.xlu0 %3764
        %3768 = vset.pattern.permute.xlu0 0
        %3769 = vperm.xlu0 %3768, %v3679
        %v3770 = vpop.permute.xlu0 %3769
        %3773 = vset.pattern.permute.xlu0 0
        %3774 = vperm.xlu0 %3773, %v3680
        %v3775 = vpop.permute.xlu0 %3774
        %v3777 = vmul.f32 %v3681, %v3700
        %v3778 = vmul.f32 %v3682, %v3705
        %v3779 = vmul.f32 %v3683, %v3710
        %v3780 = vmul.f32 %v3684, %v3715
        %v3781 = vmul.f32 %v3685, %v3720
        %v3782 = vmul.f32 %v3686, %v3725
        %v3783 = vmul.f32 %v3687, %v3730
        %v3784 = vmul.f32 %v3688, %v3735
        %v3785 = vmul.f32 %v3689, %v3740
        %v3786 = vmul.f32 %v3690, %v3745
        %v3787 = vmul.f32 %v3691, %v3750
        %v3788 = vmul.f32 %v3692, %v3755
        %v3789 = vmul.f32 %v3693, %v3760
        %v3790 = vmul.f32 %v3694, %v3765
        %v3791 = vmul.f32 %v3695, %v3770
        %v3792 = vmul.f32 %v3696, %v3775
        %3793 = vst.msk [vmem:[%s328] sm:$0xff] %vm442, %v3777
        %3794 = vst.msk [vmem:[%s328 + $0x8] sm:$0xff] %vm442, %v3778
        %3795 = vst.msk [vmem:[%s328 + $0x10] sm:$0xff] %vm442, %v3779
        %3796 = vst.msk [vmem:[%s328 + $0x18] sm:$0xff] %vm442, %v3780
        %3797 = vst.msk [vmem:[%s328 + $0x20] sm:$0xff] %vm442, %v3781
        %3798 = vst.msk [vmem:[%s328 + $0x28] sm:$0xff] %vm442, %v3782
        %3799 = vst.msk [vmem:[%s328 + $0x30] sm:$0xff] %vm442, %v3783
        %3800 = vst.msk [vmem:[%s328 + $0x38] sm:$0xff] %vm442, %v3784
        %3801 = vst.msk [vmem:[%s328 + $0x40] sm:$0xff] %vm442, %v3785
        %3802 = vst.msk [vmem:[%s328 + $0x48] sm:$0xff] %vm442, %v3786
        %3803 = vst.msk [vmem:[%s328 + $0x50] sm:$0xff] %vm442, %v3787
        %3804 = vst.msk [vmem:[%s328 + $0x58] sm:$0xff] %vm442, %v3788
        %3805 = vst.msk [vmem:[%s328 + $0x60] sm:$0xff] %vm442, %v3789
        %3806 = vst.msk [vmem:[%s328 + $0x68] sm:$0xff] %vm442, %v3790
        %3807 = vst.msk [vmem:[%s328 + $0x70] sm:$0xff] %vm442, %v3791
        %3808 = vst.msk [vmem:[%s328 + $0x78] sm:$0xff] %vm442, %v3792
        %v3809 = vld [vmem:[#allocation2] sm:$0xff]
        %v3810 = vld [vmem:[#allocation2 + $0x8] sm:$0xff]
        %v3811 = vld [vmem:[#allocation2 + $0x10] sm:$0xff]
        %v3812 = vld [vmem:[#allocation2 + $0x18] sm:$0xff]
        %v3813 = vld [vmem:[#allocation2 + $0x20] sm:$0xff]
        %v3814 = vld [vmem:[#allocation2 + $0x28] sm:$0xff]
        %v3815 = vld [vmem:[#allocation2 + $0x30] sm:$0xff]
        %v3816 = vld [vmem:[#allocation2 + $0x38] sm:$0xff]
        %v3817 = vld [vmem:[#allocation2 + $0x40] sm:$0xff]
        %v3818 = vld [vmem:[#allocation2 + $0x48] sm:$0xff]
        %v3819 = vld [vmem:[#allocation2 + $0x50] sm:$0xff]
        %v3820 = vld [vmem:[#allocation2 + $0x58] sm:$0xff]
        %v3821 = vld [vmem:[#allocation2 + $0x60] sm:$0xff]
        %v3822 = vld [vmem:[#allocation2 + $0x68] sm:$0xff]
        %v3823 = vld [vmem:[#allocation2 + $0x70] sm:$0xff]
        %v3824 = vld [vmem:[#allocation2 + $0x78] sm:$0xff]
        %v3825 = vld [vmem:[#allocation3] sm:$0xff]
        %v3826 = vld [vmem:[#allocation3 + $0x8] sm:$0xff]
        %v3827 = vld [vmem:[#allocation3 + $0x10] sm:$0xff]
        %v3828 = vld [vmem:[#allocation3 + $0x18] sm:$0xff]
        %v3829 = vld [vmem:[#allocation3 + $0x20] sm:$0xff]
        %v3830 = vld [vmem:[#allocation3 + $0x28] sm:$0xff]
        %v3831 = vld [vmem:[#allocation3 + $0x30] sm:$0xff]
        %v3832 = vld [vmem:[#allocation3 + $0x38] sm:$0xff]
        %v3833 = vld [vmem:[#allocation3 + $0x40] sm:$0xff]
        %v3834 = vld [vmem:[#allocation3 + $0x48] sm:$0xff]
        %v3835 = vld [vmem:[#allocation3 + $0x50] sm:$0xff]
        %v3836 = vld [vmem:[#allocation3 + $0x58] sm:$0xff]
        %v3837 = vld [vmem:[#allocation3 + $0x60] sm:$0xff]
        %v3838 = vld [vmem:[#allocation3 + $0x68] sm:$0xff]
        %v3839 = vld [vmem:[#allocation3 + $0x70] sm:$0xff]
        %v3840 = vld [vmem:[#allocation3 + $0x78] sm:$0xff]
        %v3841 = vlog2.pop %v3825
        %v3842 = vmul.f32 %v3841, 0.6931472
        %v3843 = vlog2.pop %v3826
        %v3844 = vmul.f32 %v3843, 0.6931472
        %v3845 = vlog2.pop %v3827
        %v3846 = vmul.f32 %v3845, 0.6931472
        %v3847 = vlog2.pop %v3828
        %v3848 = vmul.f32 %v3847, 0.6931472
        %v3849 = vlog2.pop %v3829
        %v3850 = vmul.f32 %v3849, 0.6931472
        %v3851 = vlog2.pop %v3830
        %v3852 = vmul.f32 %v3851, 0.6931472
        %v3853 = vlog2.pop %v3831
        %v3854 = vmul.f32 %v3853, 0.6931472
        %v3855 = vlog2.pop %v3832
        %v3856 = vmul.f32 %v3855, 0.6931472
        %v3857 = vlog2.pop %v3833
        %v3858 = vmul.f32 %v3857, 0.6931472
        %v3859 = vlog2.pop %v3834
        %v3860 = vmul.f32 %v3859, 0.6931472
        %v3861 = vlog2.pop %v3835
        %v3862 = vmul.f32 %v3861, 0.6931472
        %v3863 = vlog2.pop %v3836
        %v3864 = vmul.f32 %v3863, 0.6931472
        %v3865 = vlog2.pop %v3837
        %v3866 = vmul.f32 %v3865, 0.6931472
        %v3867 = vlog2.pop %v3838
        %v3868 = vmul.f32 %v3867, 0.6931472
        %v3869 = vlog2.pop %v3839
        %v3870 = vmul.f32 %v3869, 0.6931472
        %v3871 = vlog2.pop %v3840
        %v3872 = vmul.f32 %v3871, 0.6931472
        %v3873 = vadd.f32 %v3809, %v3842
        %v3874 = vadd.f32 %v3810, %v3844
        %v3875 = vadd.f32 %v3811, %v3846
        %v3876 = vadd.f32 %v3812, %v3848
        %v3877 = vadd.f32 %v3813, %v3850
        %v3878 = vadd.f32 %v3814, %v3852
        %v3879 = vadd.f32 %v3815, %v3854
        %v3880 = vadd.f32 %v3816, %v3856
        %v3881 = vadd.f32 %v3817, %v3858
        %v3882 = vadd.f32 %v3818, %v3860
        %v3883 = vadd.f32 %v3819, %v3862
        %v3884 = vadd.f32 %v3820, %v3864
        %v3885 = vadd.f32 %v3821, %v3866
        %v3886 = vadd.f32 %v3822, %v3868
        %v3887 = vadd.f32 %v3823, %v3870
        %v3888 = vadd.f32 %v3824, %v3872
        %3889 = vst.msk [vmem:[%s338] sm:$0xff] %vm2167, %v3873
        %3890 = vst.msk [vmem:[%s338 + $0x8] sm:$0xff] %vm2167, %v3874
        %3891 = vst.msk [vmem:[%s338 + $0x10] sm:$0xff] %vm2167, %v3875
        %3892 = vst.msk [vmem:[%s338 + $0x18] sm:$0xff] %vm2167, %v3876
        %3893 = vst.msk [vmem:[%s338 + $0x20] sm:$0xff] %vm2167, %v3877
        %3894 = vst.msk [vmem:[%s338 + $0x28] sm:$0xff] %vm2167, %v3878
        %3895 = vst.msk [vmem:[%s338 + $0x30] sm:$0xff] %vm2167, %v3879
        %3896 = vst.msk [vmem:[%s338 + $0x38] sm:$0xff] %vm2167, %v3880
        %3897 = vst.msk [vmem:[%s338 + $0x40] sm:$0xff] %vm2167, %v3881
        %3898 = vst.msk [vmem:[%s338 + $0x48] sm:$0xff] %vm2167, %v3882
        %3899 = vst.msk [vmem:[%s338 + $0x50] sm:$0xff] %vm2167, %v3883
        %3900 = vst.msk [vmem:[%s338 + $0x58] sm:$0xff] %vm2167, %v3884
        %3901 = vst.msk [vmem:[%s338 + $0x60] sm:$0xff] %vm2167, %v3885
        %3902 = vst.msk [vmem:[%s338 + $0x68] sm:$0xff] %vm2167, %v3886
        %3903 = vst.msk [vmem:[%s338 + $0x70] sm:$0xff] %vm2167, %v3887
        %3904 = vst.msk [vmem:[%s338 + $0x78] sm:$0xff] %vm2167, %v3888
      $region40: #{tpu_custom_call.1} parent=31 // pred_fallthru
        _
      %s3905 = smul.u32 16, %s22
      %p3906 = scmp.lt.s32.totalorder %s21, 3
      %s3907 = scalar_select %p3906, %s21, 3
      %p3908 = scmp.lt.s32.totalorder %s3905, 15
      %s3909 = scalar_select %p3908, %s3905, 15
      %s3910 = smul.addr %s3907, 16
      %s3911 = sadd.s32 %s3909, %s3910
      %s3912 = smul.addr %s3911, 8
      %s3913 = scalar_lea.vmem %s3, %s3912
      %s3914 = smul.u32 16, %s22
      %p3915 = scmp.lt.s32.totalorder %s21, 3
      %s3916 = scalar_select %p3915, %s21, 3
      %p3917 = scmp.lt.s32.totalorder %s3914, 15
      %s3918 = scalar_select %p3917, %s3914, 15
      %s3919 = smul.addr %s3916, 16
      %s3920 = sadd.s32 %s3918, %s3919
      %s3921 = smul.addr %s3920, 8
      %s3922 = scalar_lea.vmem %s4, %s3921
      // Predicated region
      $region41: #{tpu_custom_call.1} parent=31 // pred_check
        %p3923 = pneg %p139
      $region42: #{tpu_custom_call.1} parent=31 // pred_check_branch
        %3925 = sbr.rel (%p3923) target = $region44
      $region43: #{tpu_custom_call.1} parent=31 // pred_region
        %s3926 = smul.u32 16, %s22
      $region44: #{tpu_custom_call.1} parent=31 // pred_fallthru
        _
      // Predicated region
      $region45: #{tpu_custom_call.1} parent=31 // pred_check
        %p3927 = pneg %p167
      $region46: #{tpu_custom_call.1} parent=31 // pred_check_branch
        %3929 = sbr.rel (%p3927) target = $region48
      $region47: #{tpu_custom_call.1} parent=31 // pred_region
        %s3930 = smul.u32 16, %s22
      $region48: #{tpu_custom_call.1} parent=31 // pred_fallthru
        _
    $region32: #{tpu_custom_call.1} parent=5 // pred_fallthru
      _
    %p3931 = scmp.le.s32.totalorder 2, %s11
    // Predicated region
    $region49: #{tpu_custom_call.1} parent=5 // pred_check
      %p3932 = pneg %p3931
    $region50: #{tpu_custom_call.1} parent=5 // pred_check_branch
      %3934 = sbr.rel (%p3932) target = $region52
    $region51: #{tpu_custom_call.1} parent=5 // pred_region
      %s3935 = ssub.s32 %s11, 2
      // Predicated region
      $region53: #{tpu_custom_call.1} parent=51 // pred_check
        %p3936 = pneg %p145
      $region54: #{tpu_custom_call.1} parent=51 // pred_check_branch
        %3938 = sbr.rel (%p3936) target = $region56
      $region55: #{tpu_custom_call.1} parent=51 // pred_region
        %s3939 = smul.u32 16, %s25
        %p3940 = scmp.lt.s32.totalorder %s24, 3
        %s3941 = scalar_select %p3940, %s24, 3
        %p3942 = scmp.lt.s32.totalorder %s3939, 15
        %s3943 = scalar_select %p3942, %s3939, 15
        %s3944 = smul.addr %s3941, 16
        %s3945 = sadd.s32 %s3943, %s3944
        %s3946 = smul.addr %s3945, 8
        %s3947 = scalar_lea.vmem %s3, %s3946
      $region56: #{tpu_custom_call.1} parent=51 // pred_fallthru
        _
      // Predicated region
      $region57: #{tpu_custom_call.1} parent=51 // pred_check
        %p3948 = pneg %p173
      $region58: #{tpu_custom_call.1} parent=51 // pred_check_branch
        %3950 = sbr.rel (%p3948) target = $region60
      $region59: #{tpu_custom_call.1} parent=51 // pred_region
        %s3951 = smul.u32 16, %s25
        %p3952 = scmp.lt.s32.totalorder %s24, 3
        %s3953 = scalar_select %p3952, %s24, 3
        %p3954 = scmp.lt.s32.totalorder %s3951, 15
        %s3955 = scalar_select %p3954, %s3951, 15
        %s3956 = smul.addr %s3953, 16
        %s3957 = sadd.s32 %s3955, %s3956
        %s3958 = smul.addr %s3957, 8
        %s3959 = scalar_lea.vmem %s4, %s3958
      $region60: #{tpu_custom_call.1} parent=51 // pred_fallthru
        _
    $region52: #{tpu_custom_call.1} parent=5 // pred_fallthru
      _
  $region6: #{tpu_custom_call.1} parent=0 // loop_footer
    %s15 = sadd.s32 1, %s11
  $region7: #{tpu_custom_call.1} parent=0 // loop_footer_branch
    %10 = sbr.rel target = $region3
  $region8: #{tpu_custom_call.1} parent=0 // loop_exit
    _

</llo_original>
